<compile_context>
chip_gen: v6e
topology: v6e:2x2x1
jax: 0.10.0
libtpu: 0.0.40
codegen_flags: <defaults>
</compile_context>

<pallas_src>
import math

import jax
import jax.numpy as jnp
from jax.experimental import pallas as pl
from jax.experimental.pallas import tpu as pltpu
from jax.scipy.special import gammaln, digamma

# ----------------------------- model sizes (small, TPU-tile friendly) -------
NX, NH, NZ, NW, NCLASSES = 128, 128, 128, 64, 8
BATCH = 8
LOG2PI = math.log(2.0 * math.pi)
BN_EPS = 1e-5
EPS_Q = 1e-6
GUMBEL_TEMP = 0.1

# packed-slab layout constants -------------------------------------------------
DATA_W = 384                      # [x(128) | eps_z(128) | eps_w(64) | gum(8) | pad]
OUT_Z_W = 4 * NZ                  # [mu_z | lvz_raw | z | rec]           -> 512
OUT_M_W = 256                     # [mu_w | lvw_raw | w | q_y | y | d | losses | pad]
COL_QY, COL_Y, COL_D, COL_LOSS = 192, 200, 208, 216
BIAS_ROWS = 16


def _vmem():
    return pl.BlockSpec(memory_space=pltpu.MemorySpace.VMEM)


# ----------------------------- in-kernel helpers -----------------------------
def _mxu(a16, w_ref):
    # bf16 x bf16 -> f32 accumulate on the MXU (activation pre-cast to bf16).
    return jnp.dot(a16, w_ref[...], preferred_element_type=jnp.float32)


def _lrelu(h):
    return jnp.where(h > 0.0, h, 0.01 * h)


def _softplus(v):
    return jnp.maximum(v, 0.0) + jnp.log(1.0 + jnp.exp(-jnp.abs(v)))


def _softmax(v):
    m = jnp.max(v, axis=-1, keepdims=True)
    e = jnp.exp(v - m)
    return e / jnp.sum(e, axis=-1, keepdims=True)


# ----------------------------- fused forward kernel --------------------------
def _fused_vae_kernel(
    # packed data / bias slabs
    data_ref, bias_ref, pz_b3_ref,
    # weights (bf16)
    qwz_w1, qwz_w2, qwz_w3,
    qyp_w1w, qyp_w1z, qyp_w2y, qyp_w2p, qyp_w3,
    px_w1, px_w2, px_w3,
    pz_w1, pz_w2, pz_w3,
    # lane-dense packed outputs
    out_z_ref, out_m_ref):

    bf = jnp.bfloat16
    data = data_ref[...]                              # (B, 384) f32
    bsz = data.shape[0]
    x = data[:, 0:NX]
    eps_z = data[:, NX:NX + NZ]
    eps_w = data[:, NX + NZ:NX + NZ + NW]
    gum = data[:, NX + NZ + NW:NX + NZ + NW + NCLASSES]

    b = bias_ref[...]                                 # (16, 256) f32

    # ---------------- Qwz : x -> mu_w, lvw_raw, mu_z, lvz_raw ----------------
    h = _lrelu(_mxu(x.astype(bf), qwz_w1) + b[0:1, 0:128])
    h = _lrelu(_mxu(h.astype(bf), qwz_w2) + b[0:1, 128:256])
    res3 = _mxu(h.astype(bf), qwz_w3)                 # (B, 384): [mu_w|lvw|mu_z|lvz]
    mu_w = res3[:, 0:NW] + b[1:2, 0:NW]
    lvw_raw = res3[:, NW:2 * NW] + b[1:2, NW:2 * NW]
    mu_z = res3[:, 2 * NW:2 * NW + NZ] + b[1:2, 2 * NW:256]
    lvz_raw = res3[:, 2 * NW + NZ:] + b[2:3, 0:NZ]

    logvar_w = jnp.tanh(lvw_raw)
    logvar_z = jnp.tanh(lvz_raw)
    w = mu_w + eps_w * jnp.exp(0.5 * logvar_w)
    z = mu_z + eps_z * jnp.exp(0.5 * logvar_z)

    out_z_ref[:, 0:NZ] = mu_z
    out_z_ref[:, NZ:2 * NZ] = lvz_raw
    out_z_ref[:, 2 * NZ:3 * NZ] = z
    out_m_ref[:, 0:NW] = mu_w
    out_m_ref[:, NW:2 * NW] = lvw_raw
    out_m_ref[:, 2 * NW:3 * NW] = w

    w16 = w.astype(bf)
    z16 = z.astype(bf)

    # ---------------- merged Qy / Qp : [w, z] -> q_y logits, d_logits --------
    h1 = _lrelu(_mxu(w16, qyp_w1w) + _mxu(z16, qyp_w1z) + b[3:4, :])   # (B,256)
    h1_16 = h1.astype(bf)
    # two dense 128x128 matmuls (never worse than the 256x256 block-diagonal
    # form; 2x fewer wasted MXU passes on v5e's 128x128 MXU).
    h2y = _lrelu(_mxu(h1_16[:, 0:NH], qyp_w2y) + b[4:5, 0:NH])
    h2p = _lrelu(_mxu(h1_16[:, NH:2 * NH], qyp_w2p) + b[4:5, NH:2 * NH])
    h2_16 = jnp.concatenate([h2y, h2p], axis=-1).astype(bf)            # (B,256)
    yd = _mxu(h2_16, qyp_w3) + b[5:6, 0:2 * NCLASSES]                  # (B,16)
    qy_logits = yd[:, 0:NCLASSES]
    d_logits = yd[:, NCLASSES:2 * NCLASSES]

    q_y = _softmax(qy_logits)
    q_y = EPS_Q / NCLASSES + (1.0 - EPS_Q) * q_y
    # RelaxedOneHotCategorical(temperature=0.1, probs=q_y).rsample()
    y = _softmax((jnp.log(q_y) + gum) / GUMBEL_TEMP)
    out_m_ref[:, COL_QY:COL_QY + NCLASSES] = q_y
    out_m_ref[:, COL_Y:COL_Y + NCLASSES] = y
    out_m_ref[:, COL_D:COL_D + NCLASSES] = d_logits

    # ---------------- Px : z -> rec, plus Gaussian reconstruction NLL --------
    h = _lrelu(_mxu(z16, px_w1) + b[6:7, 0:128])
    h = _lrelu(_mxu(h.astype(bf), px_w2) + b[6:7, 128:256])
    rec = _mxu(h.astype(bf), px_w3) + b[7:8, 0:128]
    out_z_ref[:, 3 * NZ:4 * NZ] = rec

    logsig = b[2:3, 128:256]                           # logsigma_x
    logsig = -7.0 + _softplus(logsig + 7.0)            # ut.softclip(logsigma_x,-7,7)
    logsig = 7.0 - _softplus(7.0 - logsig)
    lp = (-0.5 * ((x - rec) * jnp.exp(-logsig)) ** 2
          - logsig - 0.5 * LOG2PI)
    loss_rec = -jnp.sum(lp) / bsz

    # ---------------- Pz : w -> per-class prior, class-weighted KL -----------
    h = _lrelu(_mxu(w16, pz_w1) + b[7:8, 128:256])
    h = _lrelu(_mxu(h.astype(bf), pz_w2) + b[8:9, 0:128])
    z_w = _mxu(h.astype(bf), pz_w3) + pz_b3_ref[...]   # (B, 2*NCLASSES*NZ)

    e_lvz = jnp.exp(logvar_z)                          # hoisted out of the loop
    loss_z_acc = jnp.zeros((), jnp.float32)
    for c in range(NCLASSES):                          # unrolled; 128-aligned slices
        base = c * 2 * NZ
        mu_zw_c = z_w[:, base:base + NZ]
        lv_zw_c = jnp.tanh(z_w[:, base + NZ:base + 2 * NZ])
        e_neg = jnp.exp(-lv_zw_c)
        kld_c = 0.5 * (-1.0 + lv_zw_c - logvar_z + e_lvz * e_neg
                       + (mu_z - mu_zw_c) ** 2 * e_neg)
        row = jnp.sum(kld_c, axis=-1, keepdims=True)   # (B, 1)
        loss_z_acc = loss_z_acc + jnp.sum(row * q_y[:, c:c + 1])
    loss_z = loss_z_acc / bsz

    # ---------------- KL( q(w|x) || N(0, I) ) --------------------------------
    kld_w = -0.5 * (1.0 + logvar_w - mu_w ** 2 - jnp.exp(logvar_w))
    loss_w = jnp.sum(kld_w) / bsz

    # pack the 3 loss scalars (broadcast over rows) + zero pad into the slab tail
    lane = jax.lax.broadcasted_iota(jnp.int32, (bsz, OUT_M_W - COL_LOSS), 1)
    tail = jnp.where(lane == 0, loss_rec,
                     jnp.where(lane == 1, loss_z,
                               jnp.where(lane == 2, loss_w, 0.0)))
    out_m_ref[:, COL_LOSS:OUT_M_W] = tail


def fused_forward(params, data):
    bsz = data.shape[0]
    f32 = jnp.float32
    out_shape = (
        jax.ShapeDtypeStruct((bsz, OUT_Z_W), f32),     # [mu_z | lvz_raw | z | rec]
        jax.ShapeDtypeStruct((bsz, OUT_M_W), f32),     # [mu_w | lvw | w | q_y | y | d | losses]
    )
    args = [data, params["bias"], params["pz_b3"], *params["weights"]]
    return pl.pallas_call(
        _fused_vae_kernel,
        out_shape=out_shape,
        in_specs=[_vmem()] * len(args),
        out_specs=(_vmem(), _vmem()),
    )(*args)


# ----------------------------- parameter init (deterministic) ---------------
def _init_linear(key, din, dout):
    k1, k2 = jax.random.split(key)
    lim = 1.0 / math.sqrt(din)
    w = jax.random.uniform(k1, (din, dout), jnp.float32, -lim, lim)
    b = jax.random.uniform(k2, (1, dout), jnp.float32, -lim, lim)
    return w, b


def _init_mlp3_bnfolded(key, dims):
    # Linear->BN->LeakyReLU, Linear->BN->LeakyReLU, Linear with eval-mode BN
    # (gamma=1, beta=0, running mean=0, running var=1) folded into the Linears.
    k1, k2, k3 = jax.random.split(key, 3)
    w1, b1 = _init_linear(k1, dims[0], dims[1])
    w2, b2 = _init_linear(k2, dims[1], dims[2])
    w3, b3 = _init_linear(k3, dims[2], dims[3])
    s = 1.0 / math.sqrt(1.0 + BN_EPS)
    return w1 * s, b1 * s, w2 * s, b2 * s, w3, b3


def init_params(key):
    ks = jax.random.split(key, 5)
    px_w1, px_b1, px_w2, px_b2, px_w3, px_b3 = _init_mlp3_bnfolded(ks[0], [NZ, NH, NH, NX])
    pz_w1, pz_b1, pz_w2, pz_b2, pz_w3, pz_b3 = _init_mlp3_bnfolded(
        ks[1], [NW, NH, NH, 2 * NCLASSES * NZ])
    qwz_w1, qwz_b1, qwz_w2, qwz_b2, qwz_w3, qwz_b3 = _init_mlp3_bnfolded(
        ks[2], [NX, NH, NH, 2 * (NW + NZ)])
    qy_w1, qy_b1, qy_w2, qy_b2, qy_w3, qy_b3 = _init_mlp3_bnfolded(
        ks[3], [NW + NZ, NH, NH, NCLASSES])
    qp_w1, qp_b1, qp_w2, qp_b2, qp_w3, qp_b3 = _init_mlp3_bnfolded(
        ks[4], [NW + NZ, NH, NH, NCLASSES])
    logsigma_x = jnp.zeros((1, NX), jnp.float32)

    # Qwz layer-3 column remap.  Original layout (nn.Unflatten(1,(2, nz+nw))):
    #   [mu_w(0:NW) | mu_z(NW:NW+NZ) | lvw(NW+NZ:2NW+NZ) | lvz(rest)]
    # Target layout: [mu_w | lvw | mu_z | lvz]  (single merged matmul).
    def _remap(a):
        return jnp.concatenate([a[:, 0:NW], a[:, NW + NZ:2 * NW + NZ],
                                a[:, NW:NW + NZ], a[:, 2 * NW + NZ:]], axis=1)
    qwz_w3p, qwz_b3p = _remap(qwz_w3), _remap(qwz_b3)

    # Merged Qy/Qp head.  Layer 1: column-concat, rows split by [w | z] input
    # blocks (no in-kernel concat).  Layer 2: two dense 128x128 heads.
    # Layer 3: single [256, 16] block-structured matmul -> [qy_logits | d_logits].
    qyp_w1 = jnp.concatenate([qy_w1, qp_w1], axis=1)           # (NW+NZ, 2*NH)
    qyp_w1w, qyp_w1z = qyp_w1[:NW, :], qyp_w1[NW:, :]
    qyp_b1 = jnp.concatenate([qy_b1, qp_b1], axis=1)           # (1, 256)
    qyp_b2 = jnp.concatenate([qy_b2, qp_b2], axis=1)           # (1, 256)
    qyp_w3 = jnp.zeros((2 * NH, 2 * NCLASSES), jnp.float32)
    qyp_w3 = qyp_w3.at[:NH, :NCLASSES].set(qy_w3).at[NH:, NCLASSES:].set(qp_w3)
    qyp_b3 = jnp.concatenate([qy_b3, qp_b3], axis=1)           # (1, 16)

    # --- pack every small bias + logsigma_x into one (16, 256) f32 slab ------
    def row(*pieces):
        r = jnp.concatenate(pieces, axis=1)
        pad = 256 - r.shape[1]
        if pad:
            r = jnp.concatenate([r, jnp.zeros((1, pad), jnp.float32)], axis=1)
        return r

    bias = jnp.concatenate([
        row(qwz_b1, qwz_b2),                       # r0
        row(qwz_b3p[:, 0:256]),                    # r1: mu_w | lvw | mu_z biases
        row(qwz_b3p[:, 256:384], logsigma_x),      # r2: lvz bias | logsigma_x
        row(qyp_b1),                               # r3
        row(qyp_b2),                               # r4
        row(qyp_b3),                               # r5
        row(px_b1, px_b2),                         # r6
        row(px_b3, pz_b1),                         # r7
        row(pz_b2),                                # r8
        jnp.zeros((BIAS_ROWS - 9, 256), jnp.float32),
    ], axis=0)                                     # (16, 256)

    bf = jnp.bfloat16
    weights = (
        qwz_w1.astype(bf), qwz_w2.astype(bf), qwz_w3p.astype(bf),
        qyp_w1w.astype(bf), qyp_w1z.astype(bf),
        qy_w2.astype(bf), qp_w2.astype(bf), qyp_w3.astype(bf),
        px_w1.astype(bf), px_w2.astype(bf), px_w3.astype(bf),
        pz_w1.astype(bf), pz_w2.astype(bf), pz_w3.astype(bf),
    )
    return {"bias": bias, "pz_b3": pz_b3, "weights": weights}


# ----------------------------- glue helpers ----------------------------------
def dirichlet_kl(a, b):
    # KL(Dir(a) || Dir(b)), batched over leading dims.
    a0 = jnp.sum(a, axis=-1)
    b0 = jnp.sum(b, axis=-1)
    return (gammaln(a0) - gammaln(b0)
            - jnp.sum(gammaln(a) - gammaln(b), axis=-1)
            + jnp.sum((a - b) * (digamma(a) - digamma(a0)[..., None]), axis=-1))


# ----------------------------- forward pass ----------------------------------
def forward(params, image, key):
    bsz = image.shape[0]
    x = image.reshape(bsz, -1)                     # nn.Flatten()
    k_w, k_z, k_g, k_d1, k_d2 = jax.random.split(key, 5)
    eps_w = jax.random.normal(k_w, (bsz, NW), jnp.float32)
    eps_z = jax.random.normal(k_z, (bsz, NZ), jnp.float32)
    gumb = jax.random.gumbel(k_g, (bsz, NCLASSES), jnp.float32)

    used = NX + NZ + NW + NCLASSES
    data = jnp.concatenate(
        [x, eps_z, eps_w, gumb, jnp.zeros((bsz, DATA_W - used), jnp.float32)], axis=1)

    out_z, out_m = fused_forward(params, data)

    # ---- unpack the lane-dense slabs with static slices ----
    mu_z = out_z[:, 0:NZ]
    lvz_raw = out_z[:, NZ:2 * NZ]
    z = out_z[:, 2 * NZ:3 * NZ]
    rec = out_z[:, 3 * NZ:4 * NZ]
    mu_w = out_m[:, 0:NW]
    lvw_raw = out_m[:, NW:2 * NW]
    w = out_m[:, 2 * NW:3 * NW]
    q_y = out_m[:, COL_QY:COL_QY + NCLASSES]
    y = out_m[:, COL_Y:COL_Y + NCLASSES]
    d_logits = out_m[:, COL_D:COL_D + NCLASSES]
    loss_rec = out_m[0, COL_LOSS + 0]
    loss_z = out_m[0, COL_LOSS + 1]
    loss_w = out_m[0, COL_LOSS + 2]

    output, losses = {}, {}
    eps = 1e-6

    wz = jnp.stack([jnp.concatenate([mu_w, mu_z], axis=1),
                    jnp.concatenate([lvw_raw, lvz_raw], axis=1)], axis=1)
    output.update(wz=wz, mu_z=mu_z, mu_w=mu_w,
                  logvar_z=jnp.tanh(lvz_raw), logvar_w=jnp.tanh(lvw_raw),
                  q_y=q_y, w=w, z=z, y=y, rec=rec)

    losses["rec"] = loss_rec
    losses["loss_z"] = loss_z
    losses["loss_w"] = loss_w

    # ---- categorical / Dirichlet regularizers (glue) ----
    lp_y = math.log(1.0 / NCLASSES)
    qm = jnp.mean(q_y, axis=0)
    losses["loss_l"] = jnp.sum(qm * (jnp.log(qm) - lp_y))
    losses["loss_l_alt"] = jnp.mean(jnp.sum(q_y * (jnp.log(eps + q_y) - lp_y), axis=-1))
    losses["loss_y"] = -1.0 * jnp.mean(jnp.max(q_y, axis=-1))

    # D_y = Dirichlet(d_logits.exp().clamp(0.01, 1e8)); clip pre-exp so an
    # overflowing exp cannot poison downstream terms.
    alpha = jnp.exp(jnp.clip(d_logits, math.log(0.01), math.log(1e8)))
    pd_alpha = jnp.full_like(q_y, 0.01)
    loss_d = 10.0 * jnp.mean(dirichlet_kl(alpha, pd_alpha))
    losses["loss_d"] = loss_d

    p_y = jax.random.dirichlet(k_d1, alpha)
    losses["loss_p"] = jnp.mean(jnp.sum(p_y * (jnp.log(p_y) - jnp.log(q_y)), axis=-1))
    p_y2 = jax.random.dirichlet(k_d2, alpha)
    loss_y_alt = jnp.mean(jnp.sum(q_y * (jnp.log(eps + q_y) - jnp.log(eps + p_y2)),
                                  axis=-1))
    losses["loss_y_alt"] = loss_y_alt

    losses["total_loss"] = loss_rec + loss_z + loss_w + loss_d + loss_y_alt
    output["losses"] = losses
    return output


# ----------------------------- main ------------------------------------------
if __name__ == "__main__":
    root = jax.random.PRNGKey(0)
    k_param, k_data, k_noise = jax.random.split(root, 3)

    params = init_params(k_param)
    # NCHW image input, flattened inside forward:  [B, 1, 8, 16] -> nx = 128
    image = jax.random.uniform(k_data, (BATCH, 1, 8, 16), jnp.float32)

    fwd = jax.jit(forward)
    out = fwd(params, image, k_noise)
    total = jax.block_until_ready(out["losses"]["total_loss"])
    _ = jax.block_until_ready(out["rec"])

    assert bool(jnp.isfinite(total)), "total loss not finite"
    print("KERNEL_OK")
</pallas_src>

<mosaic_0001>
module attributes {stable_mosaic.version = 11 : i64} {
  func.func @_fused_vae_kernel(%arg0: memref<8x384xf32, #tpu.memory_space<vmem>>, %arg1: memref<16x256xf32, #tpu.memory_space<vmem>>, %arg2: memref<1x2048xf32, #tpu.memory_space<vmem>>, %arg3: memref<128x128xbf16, #tpu.memory_space<vmem>>, %arg4: memref<128x128xbf16, #tpu.memory_space<vmem>>, %arg5: memref<128x384xbf16, #tpu.memory_space<vmem>>, %arg6: memref<64x256xbf16, #tpu.memory_space<vmem>>, %arg7: memref<128x256xbf16, #tpu.memory_space<vmem>>, %arg8: memref<128x128xbf16, #tpu.memory_space<vmem>>, %arg9: memref<128x128xbf16, #tpu.memory_space<vmem>>, %arg10: memref<256x16xbf16, #tpu.memory_space<vmem>>, %arg11: memref<128x128xbf16, #tpu.memory_space<vmem>>, %arg12: memref<128x128xbf16, #tpu.memory_space<vmem>>, %arg13: memref<128x128xbf16, #tpu.memory_space<vmem>>, %arg14: memref<64x128xbf16, #tpu.memory_space<vmem>>, %arg15: memref<128x128xbf16, #tpu.memory_space<vmem>>, %arg16: memref<128x2048xbf16, #tpu.memory_space<vmem>>, %arg17: memref<8x512xf32, #tpu.memory_space<vmem>>, %arg18: memref<8x256xf32, #tpu.memory_space<vmem>>) attributes {dimension_semantics = [], scalar_prefetch = 0 : i64, scratch_operands = 0 : i64, tpu.core_type = #tpu.core_type<tc>} {
    %c0 = arith.constant 0 : index
    %c0_0 = arith.constant 0 : index
    %0 = vector.load %arg0[%c0, %c0_0] : memref<8x384xf32, #tpu.memory_space<vmem>>, vector<8x384xf32>
    %1 = vector.extract_strided_slice %0 {offsets = [0, 0], sizes = [8, 128], strides = [1, 1]} : vector<8x384xf32> to vector<8x128xf32>
    %2 = vector.extract_strided_slice %0 {offsets = [0, 128], sizes = [8, 128], strides = [1, 1]} : vector<8x384xf32> to vector<8x128xf32>
    %3 = vector.extract_strided_slice %0 {offsets = [0, 256], sizes = [8, 64], strides = [1, 1]} : vector<8x384xf32> to vector<8x64xf32>
    %4 = vector.extract_strided_slice %0 {offsets = [0, 320], sizes = [8, 8], strides = [1, 1]} : vector<8x384xf32> to vector<8x8xf32>
    %c0_1 = arith.constant 0 : index
    %c0_2 = arith.constant 0 : index
    %5 = vector.load %arg1[%c0_1, %c0_2] : memref<16x256xf32, #tpu.memory_space<vmem>>, vector<16x256xf32>
    %6 = arith.truncf %1 : vector<8x128xf32> to vector<8x128xbf16>
    %c0_3 = arith.constant 0 : index
    %c0_4 = arith.constant 0 : index
    %7 = vector.load %arg3[%c0_3, %c0_4] : memref<128x128xbf16, #tpu.memory_space<vmem>>, vector<128x128xbf16>
    %cst = arith.constant dense<0.000000e+00> : vector<8x128xf32>
    %8 = tpu.matmul %6, %7, %cst {dimension_numbers = #tpu.dot_dimension_numbers<[1], [0], [0], [1], [0, 0, 1, 1], [], []>} : vector<8x128xbf16>, vector<128x128xbf16>, vector<8x128xf32> -> vector<8x128xf32>
    %9 = vector.extract_strided_slice %5 {offsets = [0, 0], sizes = [1, 128], strides = [1, 1]} : vector<16x256xf32> to vector<1x128xf32>
    %10 = vector.broadcast %9 : vector<1x128xf32> to vector<8x128xf32>
    %11 = arith.addf %8, %10 : vector<8x128xf32>
    %cst_5 = arith.constant 0.000000e+00 : f32
    %12 = vector.broadcast %cst_5 : f32 to vector<8x128xf32>
    %13 = arith.cmpf ogt, %11, %12 : vector<8x128xf32>
    %cst_6 = arith.constant 0.00999999977 : f32
    %14 = vector.broadcast %cst_6 : f32 to vector<8x128xf32>
    %15 = arith.mulf %14, %11 : vector<8x128xf32>
    %16 = arith.select %13, %11, %15 : vector<8x128xi1>, vector<8x128xf32>
    %17 = arith.truncf %16 : vector<8x128xf32> to vector<8x128xbf16>
    %c0_7 = arith.constant 0 : index
    %c0_8 = arith.constant 0 : index
    %18 = vector.load %arg4[%c0_7, %c0_8] : memref<128x128xbf16, #tpu.memory_space<vmem>>, vector<128x128xbf16>
    %cst_9 = arith.constant dense<0.000000e+00> : vector<8x128xf32>
    %19 = tpu.matmul %17, %18, %cst_9 {dimension_numbers = #tpu.dot_dimension_numbers<[1], [0], [0], [1], [0, 0, 1, 1], [], []>} : vector<8x128xbf16>, vector<128x128xbf16>, vector<8x128xf32> -> vector<8x128xf32>
    %20 = vector.extract_strided_slice %5 {offsets = [0, 128], sizes = [1, 128], strides = [1, 1]} : vector<16x256xf32> to vector<1x128xf32>
    %21 = vector.broadcast %20 : vector<1x128xf32> to vector<8x128xf32>
    %22 = arith.addf %19, %21 : vector<8x128xf32>
    %cst_10 = arith.constant 0.000000e+00 : f32
    %23 = vector.broadcast %cst_10 : f32 to vector<8x128xf32>
    %24 = arith.cmpf ogt, %22, %23 : vector<8x128xf32>
    %cst_11 = arith.constant 0.00999999977 : f32
    %25 = vector.broadcast %cst_11 : f32 to vector<8x128xf32>
    %26 = arith.mulf %25, %22 : vector<8x128xf32>
    %27 = arith.select %24, %22, %26 : vector<8x128xi1>, vector<8x128xf32>
    %28 = arith.truncf %27 : vector<8x128xf32> to vector<8x128xbf16>
    %c0_12 = arith.constant 0 : index
    %c0_13 = arith.constant 0 : index
    %29 = vector.load %arg5[%c0_12, %c0_13] : memref<128x384xbf16, #tpu.memory_space<vmem>>, vector<128x384xbf16>
    %cst_14 = arith.constant dense<0.000000e+00> : vector<8x384xf32>
    %30 = tpu.matmul %28, %29, %cst_14 {dimension_numbers = #tpu.dot_dimension_numbers<[1], [0], [0], [1], [0, 0, 1, 1], [], []>} : vector<8x128xbf16>, vector<128x384xbf16>, vector<8x384xf32> -> vector<8x384xf32>
    %31 = vector.extract_strided_slice %30 {offsets = [0, 0], sizes = [8, 64], strides = [1, 1]} : vector<8x384xf32> to vector<8x64xf32>
    %32 = vector.extract_strided_slice %5 {offsets = [1, 0], sizes = [1, 64], strides = [1, 1]} : vector<16x256xf32> to vector<1x64xf32>
    %33 = vector.broadcast %32 : vector<1x64xf32> to vector<8x64xf32>
    %34 = arith.addf %31, %33 : vector<8x64xf32>
    %35 = vector.extract_strided_slice %30 {offsets = [0, 64], sizes = [8, 64], strides = [1, 1]} : vector<8x384xf32> to vector<8x64xf32>
    %36 = vector.extract_strided_slice %5 {offsets = [1, 64], sizes = [1, 64], strides = [1, 1]} : vector<16x256xf32> to vector<1x64xf32>
    %37 = vector.broadcast %36 : vector<1x64xf32> to vector<8x64xf32>
    %38 = arith.addf %35, %37 : vector<8x64xf32>
    %39 = vector.extract_strided_slice %30 {offsets = [0, 128], sizes = [8, 128], strides = [1, 1]} : vector<8x384xf32> to vector<8x128xf32>
    %40 = vector.extract_strided_slice %5 {offsets = [1, 128], sizes = [1, 128], strides = [1, 1]} : vector<16x256xf32> to vector<1x128xf32>
    %41 = vector.broadcast %40 : vector<1x128xf32> to vector<8x128xf32>
    %42 = arith.addf %39, %41 : vector<8x128xf32>
    %43 = vector.extract_strided_slice %30 {offsets = [0, 256], sizes = [8, 128], strides = [1, 1]} : vector<8x384xf32> to vector<8x128xf32>
    %44 = vector.extract_strided_slice %5 {offsets = [2, 0], sizes = [1, 128], strides = [1, 1]} : vector<16x256xf32> to vector<1x128xf32>
    %45 = vector.broadcast %44 : vector<1x128xf32> to vector<8x128xf32>
    %46 = arith.addf %43, %45 : vector<8x128xf32>
    %47 = math.tanh %38 : vector<8x64xf32>
    %48 = math.tanh %46 : vector<8x128xf32>
    %cst_15 = arith.constant 5.000000e-01 : f32
    %49 = vector.broadcast %cst_15 : f32 to vector<8x64xf32>
    %50 = arith.mulf %49, %47 : vector<8x64xf32>
    %51 = math.exp %50 : vector<8x64xf32>
    %52 = arith.mulf %3, %51 : vector<8x64xf32>
    %53 = arith.addf %34, %52 : vector<8x64xf32>
    %cst_16 = arith.constant 5.000000e-01 : f32
    %54 = vector.broadcast %cst_16 : f32 to vector<8x128xf32>
    %55 = arith.mulf %54, %48 : vector<8x128xf32>
    %56 = math.exp %55 : vector<8x128xf32>
    %57 = arith.mulf %2, %56 : vector<8x128xf32>
    %58 = arith.addf %42, %57 : vector<8x128xf32>
    %c0_17 = arith.constant 0 : index
    %c0_18 = arith.constant 0 : index
    %59 = vector.load %arg17[%c0_17, %c0_18] : memref<8x512xf32, #tpu.memory_space<vmem>>, vector<8x128xf32>
    tpu.vector_store %arg17[%c0_17, %c0_18], %42 {strides = array<i32>} : memref<8x512xf32, #tpu.memory_space<vmem>>, vector<8x128xf32>,
    %c0_19 = arith.constant 0 : index
    %c128 = arith.constant 128 : index
    %60 = vector.load %arg17[%c0_19, %c128] : memref<8x512xf32, #tpu.memory_space<vmem>>, vector<8x128xf32>
    tpu.vector_store %arg17[%c0_19, %c128], %46 {strides = array<i32>} : memref<8x512xf32, #tpu.memory_space<vmem>>, vector<8x128xf32>,
    %c0_20 = arith.constant 0 : index
    %c256 = arith.constant 256 : index
    %61 = vector.load %arg17[%c0_20, %c256] : memref<8x512xf32, #tpu.memory_space<vmem>>, vector<8x128xf32>
    tpu.vector_store %arg17[%c0_20, %c256], %58 {strides = array<i32>} : memref<8x512xf32, #tpu.memory_space<vmem>>, vector<8x128xf32>,
    %c0_21 = arith.constant 0 : index
    %c0_22 = arith.constant 0 : index
    %62 = vector.load %arg18[%c0_21, %c0_22] : memref<8x256xf32, #tpu.memory_space<vmem>>, vector<8x64xf32>
    tpu.vector_store %arg18[%c0_21, %c0_22], %34 {strides = array<i32>} : memref<8x256xf32, #tpu.memory_space<vmem>>, vector<8x64xf32>,
    %c0_23 = arith.constant 0 : index
    %c64 = arith.constant 64 : index
    %63 = vector.load %arg18[%c0_23, %c64] : memref<8x256xf32, #tpu.memory_space<vmem>>, vector<8x64xf32>
    tpu.vector_store %arg18[%c0_23, %c64], %38 {strides = array<i32>} : memref<8x256xf32, #tpu.memory_space<vmem>>, vector<8x64xf32>,
    %c0_24 = arith.constant 0 : index
    %c128_25 = arith.constant 128 : index
    %64 = vector.load %arg18[%c0_24, %c128_25] : memref<8x256xf32, #tpu.memory_space<vmem>>, vector<8x64xf32>
    tpu.vector_store %arg18[%c0_24, %c128_25], %53 {strides = array<i32>} : memref<8x256xf32, #tpu.memory_space<vmem>>, vector<8x64xf32>,
    %65 = arith.truncf %53 : vector<8x64xf32> to vector<8x64xbf16>
    %66 = arith.truncf %58 : vector<8x128xf32> to vector<8x128xbf16>
    %c0_26 = arith.constant 0 : index
    %c0_27 = arith.constant 0 : index
    %67 = vector.load %arg6[%c0_26, %c0_27] : memref<64x256xbf16, #tpu.memory_space<vmem>>, vector<64x256xbf16>
    %cst_28 = arith.constant dense<0.000000e+00> : vector<8x256xf32>
    %68 = tpu.matmul %65, %67, %cst_28 {dimension_numbers = #tpu.dot_dimension_numbers<[1], [0], [0], [1], [0, 0, 1, 1], [], []>} : vector<8x64xbf16>, vector<64x256xbf16>, vector<8x256xf32> -> vector<8x256xf32>
    %c0_29 = arith.constant 0 : index
    %c0_30 = arith.constant 0 : index
    %69 = vector.load %arg7[%c0_29, %c0_30] : memref<128x256xbf16, #tpu.memory_space<vmem>>, vector<128x256xbf16>
    %cst_31 = arith.constant dense<0.000000e+00> : vector<8x256xf32>
    %70 = tpu.matmul %66, %69, %cst_31 {dimension_numbers = #tpu.dot_dimension_numbers<[1], [0], [0], [1], [0, 0, 1, 1], [], []>} : vector<8x128xbf16>, vector<128x256xbf16>, vector<8x256xf32> -> vector<8x256xf32>
    %71 = arith.addf %68, %70 : vector<8x256xf32>
    %72 = vector.extract_strided_slice %5 {offsets = [3, 0], sizes = [1, 256], strides = [1, 1]} : vector<16x256xf32> to vector<1x256xf32>
    %73 = vector.broadcast %72 : vector<1x256xf32> to vector<8x256xf32>
    %74 = arith.addf %71, %73 : vector<8x256xf32>
    %cst_32 = arith.constant 0.000000e+00 : f32
    %75 = vector.broadcast %cst_32 : f32 to vector<8x256xf32>
    %76 = arith.cmpf ogt, %74, %75 : vector<8x256xf32>
    %cst_33 = arith.constant 0.00999999977 : f32
    %77 = vector.broadcast %cst_33 : f32 to vector<8x256xf32>
    %78 = arith.mulf %77, %74 : vector<8x256xf32>
    %79 = arith.select %76, %74, %78 : vector<8x256xi1>, vector<8x256xf32>
    %80 = arith.truncf %79 : vector<8x256xf32> to vector<8x256xbf16>
    %81 = vector.extract_strided_slice %80 {offsets = [0, 0], sizes = [8, 128], strides = [1, 1]} : vector<8x256xbf16> to vector<8x128xbf16>
    %c0_34 = arith.constant 0 : index
    %c0_35 = arith.constant 0 : index
    %82 = vector.load %arg8[%c0_34, %c0_35] : memref<128x128xbf16, #tpu.memory_space<vmem>>, vector<128x128xbf16>
    %cst_36 = arith.constant dense<0.000000e+00> : vector<8x128xf32>
    %83 = tpu.matmul %81, %82, %cst_36 {dimension_numbers = #tpu.dot_dimension_numbers<[1], [0], [0], [1], [0, 0, 1, 1], [], []>} : vector<8x128xbf16>, vector<128x128xbf16>, vector<8x128xf32> -> vector<8x128xf32>
    %84 = vector.extract_strided_slice %5 {offsets = [4, 0], sizes = [1, 128], strides = [1, 1]} : vector<16x256xf32> to vector<1x128xf32>
    %85 = vector.broadcast %84 : vector<1x128xf32> to vector<8x128xf32>
    %86 = arith.addf %83, %85 : vector<8x128xf32>
    %cst_37 = arith.constant 0.000000e+00 : f32
    %87 = vector.broadcast %cst_37 : f32 to vector<8x128xf32>
    %88 = arith.cmpf ogt, %86, %87 : vector<8x128xf32>
    %cst_38 = arith.constant 0.00999999977 : f32
    %89 = vector.broadcast %cst_38 : f32 to vector<8x128xf32>
    %90 = arith.mulf %89, %86 : vector<8x128xf32>
    %91 = arith.select %88, %86, %90 : vector<8x128xi1>, vector<8x128xf32>
    %92 = vector.extract_strided_slice %80 {offsets = [0, 128], sizes = [8, 128], strides = [1, 1]} : vector<8x256xbf16> to vector<8x128xbf16>
    %c0_39 = arith.constant 0 : index
    %c0_40 = arith.constant 0 : index
    %93 = vector.load %arg9[%c0_39, %c0_40] : memref<128x128xbf16, #tpu.memory_space<vmem>>, vector<128x128xbf16>
    %cst_41 = arith.constant dense<0.000000e+00> : vector<8x128xf32>
    %94 = tpu.matmul %92, %93, %cst_41 {dimension_numbers = #tpu.dot_dimension_numbers<[1], [0], [0], [1], [0, 0, 1, 1], [], []>} : vector<8x128xbf16>, vector<128x128xbf16>, vector<8x128xf32> -> vector<8x128xf32>
    %95 = vector.extract_strided_slice %5 {offsets = [4, 128], sizes = [1, 128], strides = [1, 1]} : vector<16x256xf32> to vector<1x128xf32>
    %96 = vector.broadcast %95 : vector<1x128xf32> to vector<8x128xf32>
    %97 = arith.addf %94, %96 : vector<8x128xf32>
    %cst_42 = arith.constant 0.000000e+00 : f32
    %98 = vector.broadcast %cst_42 : f32 to vector<8x128xf32>
    %99 = arith.cmpf ogt, %97, %98 : vector<8x128xf32>
    %cst_43 = arith.constant 0.00999999977 : f32
    %100 = vector.broadcast %cst_43 : f32 to vector<8x128xf32>
    %101 = arith.mulf %100, %97 : vector<8x128xf32>
    %102 = arith.select %99, %97, %101 : vector<8x128xi1>, vector<8x128xf32>
    %103 = tpu.concatenate %91, %102 in 1 : vector<8x128xf32>, vector<8x128xf32> -> vector<8x256xf32>
    %104 = arith.truncf %103 : vector<8x256xf32> to vector<8x256xbf16>
    %c0_44 = arith.constant 0 : index
    %c0_45 = arith.constant 0 : index
    %105 = vector.load %arg10[%c0_44, %c0_45] : memref<256x16xbf16, #tpu.memory_space<vmem>>, vector<256x16xbf16>
    %cst_46 = arith.constant dense<0.000000e+00> : vector<8x16xf32>
    %106 = tpu.matmul %104, %105, %cst_46 {dimension_numbers = #tpu.dot_dimension_numbers<[1], [0], [0], [1], [0, 0, 1, 1], [], []>} : vector<8x256xbf16>, vector<256x16xbf16>, vector<8x16xf32> -> vector<8x16xf32>
    %107 = vector.extract_strided_slice %5 {offsets = [5, 0], sizes = [1, 16], strides = [1, 1]} : vector<16x256xf32> to vector<1x16xf32>
    %108 = vector.broadcast %107 : vector<1x16xf32> to vector<8x16xf32>
    %109 = arith.addf %106, %108 : vector<8x16xf32>
    %110 = vector.extract_strided_slice %109 {offsets = [0, 0], sizes = [8, 8], strides = [1, 1]} : vector<8x16xf32> to vector<8x8xf32>
    %111 = vector.extract_strided_slice %109 {offsets = [0, 8], sizes = [8, 8], strides = [1, 1]} : vector<8x16xf32> to vector<8x8xf32>
    %cst_47 = arith.constant dense<0xFF800000> : vector<8xf32>
    %112 = vector.multi_reduction <maximumf>, %110, %cst_47 [1] : vector<8x8xf32> to vector<8xf32>
    %113 = vector.shape_cast %112 : vector<8xf32> to vector<8x1xf32>
    %114 = vector.broadcast %113 : vector<8x1xf32> to vector<8x8xf32>
    %115 = arith.subf %110, %114 : vector<8x8xf32>
    %116 = math.exp %115 : vector<8x8xf32>
    %cst_48 = arith.constant dense<0.000000e+00> : vector<8xf32>
    %117 = vector.multi_reduction <add>, %116, %cst_48 [1] : vector<8x8xf32> to vector<8xf32>
    %118 = vector.shape_cast %117 : vector<8xf32> to vector<8x1xf32>
    %119 = vector.broadcast %118 : vector<8x1xf32> to vector<8x8xf32>
    %120 = arith.divf %116, %119 : vector<8x8xf32>
    %cst_49 = arith.constant 0.999998986 : f32
    %121 = vector.broadcast %cst_49 : f32 to vector<8x8xf32>
    %122 = arith.mulf %121, %120 : vector<8x8xf32>
    %cst_50 = arith.constant 1.250000e-07 : f32
    %123 = vector.broadcast %cst_50 : f32 to vector<8x8xf32>
    %124 = arith.addf %123, %122 : vector<8x8xf32>
    %125 = math.log %124 : vector<8x8xf32>
    %126 = arith.addf %125, %4 : vector<8x8xf32>
    %cst_51 = arith.constant 1.000000e-01 : f32
    %127 = vector.broadcast %cst_51 : f32 to vector<8x8xf32>
    %128 = arith.divf %126, %127 : vector<8x8xf32>
    %cst_52 = arith.constant dense<0xFF800000> : vector<8xf32>
    %129 = vector.multi_reduction <maximumf>, %128, %cst_52 [1] : vector<8x8xf32> to vector<8xf32>
    %130 = vector.shape_cast %129 : vector<8xf32> to vector<8x1xf32>
    %131 = vector.broadcast %130 : vector<8x1xf32> to vector<8x8xf32>
    %132 = arith.subf %128, %131 : vector<8x8xf32>
    %133 = math.exp %132 : vector<8x8xf32>
    %cst_53 = arith.constant dense<0.000000e+00> : vector<8xf32>
    %134 = vector.multi_reduction <add>, %133, %cst_53 [1] : vector<8x8xf32> to vector<8xf32>
    %135 = vector.shape_cast %134 : vector<8xf32> to vector<8x1xf32>
    %136 = vector.broadcast %135 : vector<8x1xf32> to vector<8x8xf32>
    %137 = arith.divf %133, %136 : vector<8x8xf32>
    %c0_54 = arith.constant 0 : index
    %c192 = arith.constant 192 : index
    %138 = vector.load %arg18[%c0_54, %c192] : memref<8x256xf32, #tpu.memory_space<vmem>>, vector<8x8xf32>
    tpu.vector_store %arg18[%c0_54, %c192], %124 {strides = array<i32>} : memref<8x256xf32, #tpu.memory_space<vmem>>, vector<8x8xf32>,
    %c0_55 = arith.constant 0 : index
    %c200 = arith.constant 200 : index
    %139 = vector.load %arg18[%c0_55, %c200] : memref<8x256xf32, #tpu.memory_space<vmem>>, vector<8x8xf32>
    tpu.vector_store %arg18[%c0_55, %c200], %137 {strides = array<i32>} : memref<8x256xf32, #tpu.memory_space<vmem>>, vector<8x8xf32>,
    %c0_56 = arith.constant 0 : index
    %c208 = arith.constant 208 : index
    %140 = vector.load %arg18[%c0_56, %c208] : memref<8x256xf32, #tpu.memory_space<vmem>>, vector<8x8xf32>
    tpu.vector_store %arg18[%c0_56, %c208], %111 {strides = array<i32>} : memref<8x256xf32, #tpu.memory_space<vmem>>, vector<8x8xf32>,
    %c0_57 = arith.constant 0 : index
    %c0_58 = arith.constant 0 : index
    %141 = vector.load %arg11[%c0_57, %c0_58] : memref<128x128xbf16, #tpu.memory_space<vmem>>, vector<128x128xbf16>
    %cst_59 = arith.constant dense<0.000000e+00> : vector<8x128xf32>
    %142 = tpu.matmul %66, %141, %cst_59 {dimension_numbers = #tpu.dot_dimension_numbers<[1], [0], [0], [1], [0, 0, 1, 1], [], []>} : vector<8x128xbf16>, vector<128x128xbf16>, vector<8x128xf32> -> vector<8x128xf32>
    %143 = vector.extract_strided_slice %5 {offsets = [6, 0], sizes = [1, 128], strides = [1, 1]} : vector<16x256xf32> to vector<1x128xf32>
    %144 = vector.broadcast %143 : vector<1x128xf32> to vector<8x128xf32>
    %145 = arith.addf %142, %144 : vector<8x128xf32>
    %cst_60 = arith.constant 0.000000e+00 : f32
    %146 = vector.broadcast %cst_60 : f32 to vector<8x128xf32>
    %147 = arith.cmpf ogt, %145, %146 : vector<8x128xf32>
    %cst_61 = arith.constant 0.00999999977 : f32
    %148 = vector.broadcast %cst_61 : f32 to vector<8x128xf32>
    %149 = arith.mulf %148, %145 : vector<8x128xf32>
    %150 = arith.select %147, %145, %149 : vector<8x128xi1>, vector<8x128xf32>
    %151 = arith.truncf %150 : vector<8x128xf32> to vector<8x128xbf16>
    %c0_62 = arith.constant 0 : index
    %c0_63 = arith.constant 0 : index
    %152 = vector.load %arg12[%c0_62, %c0_63] : memref<128x128xbf16, #tpu.memory_space<vmem>>, vector<128x128xbf16>
    %cst_64 = arith.constant dense<0.000000e+00> : vector<8x128xf32>
    %153 = tpu.matmul %151, %152, %cst_64 {dimension_numbers = #tpu.dot_dimension_numbers<[1], [0], [0], [1], [0, 0, 1, 1], [], []>} : vector<8x128xbf16>, vector<128x128xbf16>, vector<8x128xf32> -> vector<8x128xf32>
    %154 = vector.extract_strided_slice %5 {offsets = [6, 128], sizes = [1, 128], strides = [1, 1]} : vector<16x256xf32> to vector<1x128xf32>
    %155 = vector.broadcast %154 : vector<1x128xf32> to vector<8x128xf32>
    %156 = arith.addf %153, %155 : vector<8x128xf32>
    %cst_65 = arith.constant 0.000000e+00 : f32
    %157 = vector.broadcast %cst_65 : f32 to vector<8x128xf32>
    %158 = arith.cmpf ogt, %156, %157 : vector<8x128xf32>
    %cst_66 = arith.constant 0.00999999977 : f32
    %159 = vector.broadcast %cst_66 : f32 to vector<8x128xf32>
    %160 = arith.mulf %159, %156 : vector<8x128xf32>
    %161 = arith.select %158, %156, %160 : vector<8x128xi1>, vector<8x128xf32>
    %162 = arith.truncf %161 : vector<8x128xf32> to vector<8x128xbf16>
    %c0_67 = arith.constant 0 : index
    %c0_68 = arith.constant 0 : index
    %163 = vector.load %arg13[%c0_67, %c0_68] : memref<128x128xbf16, #tpu.memory_space<vmem>>, vector<128x128xbf16>
    %cst_69 = arith.constant dense<0.000000e+00> : vector<8x128xf32>
    %164 = tpu.matmul %162, %163, %cst_69 {dimension_numbers = #tpu.dot_dimension_numbers<[1], [0], [0], [1], [0, 0, 1, 1], [], []>} : vector<8x128xbf16>, vector<128x128xbf16>, vector<8x128xf32> -> vector<8x128xf32>
    %165 = vector.extract_strided_slice %5 {offsets = [7, 0], sizes = [1, 128], strides = [1, 1]} : vector<16x256xf32> to vector<1x128xf32>
    %166 = vector.broadcast %165 : vector<1x128xf32> to vector<8x128xf32>
    %167 = arith.addf %164, %166 : vector<8x128xf32>
    %c0_70 = arith.constant 0 : index
    %c384 = arith.constant 384 : index
    %168 = vector.load %arg17[%c0_70, %c384] : memref<8x512xf32, #tpu.memory_space<vmem>>, vector<8x128xf32>
    tpu.vector_store %arg17[%c0_70, %c384], %167 {strides = array<i32>} : memref<8x512xf32, #tpu.memory_space<vmem>>, vector<8x128xf32>,
    %169 = vector.extract_strided_slice %5 {offsets = [2, 128], sizes = [1, 128], strides = [1, 1]} : vector<16x256xf32> to vector<1x128xf32>
    %cst_71 = arith.constant 7.000000e+00 : f32
    %170 = vector.broadcast %cst_71 : f32 to vector<1x128xf32>
    %171 = arith.addf %169, %170 : vector<1x128xf32>
    %cst_72 = arith.constant 0.000000e+00 : f32
    %172 = vector.broadcast %cst_72 : f32 to vector<1x128xf32>
    %173 = arith.maximumf %171, %172 : vector<1x128xf32>
    %174 = math.absf %171 : vector<1x128xf32>
    %cst_73 = arith.constant 0.000000e+00 : f32
    %175 = vector.broadcast %cst_73 : f32 to vector<1x128xf32>
    %176 = arith.subf %175, %174 : vector<1x128xf32>
    %177 = math.exp %176 : vector<1x128xf32>
    %cst_74 = arith.constant 1.000000e+00 : f32
    %178 = vector.broadcast %cst_74 : f32 to vector<1x128xf32>
    %179 = arith.addf %178, %177 : vector<1x128xf32>
    %180 = math.log %179 : vector<1x128xf32>
    %181 = arith.addf %173, %180 : vector<1x128xf32>
    %cst_75 = arith.constant -7.000000e+00 : f32
    %182 = vector.broadcast %cst_75 : f32 to vector<1x128xf32>
    %183 = arith.addf %182, %181 : vector<1x128xf32>
    %cst_76 = arith.constant 7.000000e+00 : f32
    %184 = vector.broadcast %cst_76 : f32 to vector<1x128xf32>
    %185 = arith.subf %184, %183 : vector<1x128xf32>
    %cst_77 = arith.constant 0.000000e+00 : f32
    %186 = vector.broadcast %cst_77 : f32 to vector<1x128xf32>
    %187 = arith.maximumf %185, %186 : vector<1x128xf32>
    %188 = math.absf %185 : vector<1x128xf32>
    %cst_78 = arith.constant 0.000000e+00 : f32
    %189 = vector.broadcast %cst_78 : f32 to vector<1x128xf32>
    %190 = arith.subf %189, %188 : vector<1x128xf32>
    %191 = math.exp %190 : vector<1x128xf32>
    %cst_79 = arith.constant 1.000000e+00 : f32
    %192 = vector.broadcast %cst_79 : f32 to vector<1x128xf32>
    %193 = arith.addf %192, %191 : vector<1x128xf32>
    %194 = math.log %193 : vector<1x128xf32>
    %195 = arith.addf %187, %194 : vector<1x128xf32>
    %cst_80 = arith.constant 7.000000e+00 : f32
    %196 = vector.broadcast %cst_80 : f32 to vector<1x128xf32>
    %197 = arith.subf %196, %195 : vector<1x128xf32>
    %198 = arith.subf %1, %167 : vector<8x128xf32>
    %cst_81 = arith.constant 0.000000e+00 : f32
    %199 = vector.broadcast %cst_81 : f32 to vector<1x128xf32>
    %200 = arith.subf %199, %197 : vector<1x128xf32>
    %201 = math.exp %200 : vector<1x128xf32>
    %202 = vector.broadcast %201 : vector<1x128xf32> to vector<8x128xf32>
    %203 = arith.mulf %198, %202 : vector<8x128xf32>
    %204 = arith.mulf %203, %203 : vector<8x128xf32>
    %cst_82 = arith.constant -5.000000e-01 : f32
    %205 = vector.broadcast %cst_82 : f32 to vector<8x128xf32>
    %206 = arith.mulf %205, %204 : vector<8x128xf32>
    %207 = vector.broadcast %197 : vector<1x128xf32> to vector<8x128xf32>
    %208 = arith.subf %206, %207 : vector<8x128xf32>
    %cst_83 = arith.constant 0.918938517 : f32
    %209 = vector.broadcast %cst_83 : f32 to vector<8x128xf32>
    %210 = arith.subf %208, %209 : vector<8x128xf32>
    %211 = vector.shape_cast %210 : vector<8x128xf32> to vector<1x8x128xf32>
    %cst_84 = arith.constant dense<0.000000e+00> : vector<1xf32>
    %212 = vector.multi_reduction <add>, %211, %cst_84 [1, 2] : vector<1x8x128xf32> to vector<1xf32>
    %213 = vector.shape_cast %212 : vector<1xf32> to vector<1x1x1xf32>
    %214 = vector.extract %213[0, 0, 0] : f32 from vector<1x1x1xf32>
    %cst_85 = arith.constant 0.000000e+00 : f32
    %215 = arith.subf %cst_85, %214 : f32
    %cst_86 = arith.constant 8.000000e+00 : f32
    %216 = arith.divf %215, %cst_86 : f32
    %c0_87 = arith.constant 0 : index
    %c0_88 = arith.constant 0 : index
    %217 = vector.load %arg14[%c0_87, %c0_88] : memref<64x128xbf16, #tpu.memory_space<vmem>>, vector<64x128xbf16>
    %cst_89 = arith.constant dense<0.000000e+00> : vector<8x128xf32>
    %218 = tpu.matmul %65, %217, %cst_89 {dimension_numbers = #tpu.dot_dimension_numbers<[1], [0], [0], [1], [0, 0, 1, 1], [], []>} : vector<8x64xbf16>, vector<64x128xbf16>, vector<8x128xf32> -> vector<8x128xf32>
    %219 = vector.extract_strided_slice %5 {offsets = [7, 128], sizes = [1, 128], strides = [1, 1]} : vector<16x256xf32> to vector<1x128xf32>
    %220 = vector.broadcast %219 : vector<1x128xf32> to vector<8x128xf32>
    %221 = arith.addf %218, %220 : vector<8x128xf32>
    %cst_90 = arith.constant 0.000000e+00 : f32
    %222 = vector.broadcast %cst_90 : f32 to vector<8x128xf32>
    %223 = arith.cmpf ogt, %221, %222 : vector<8x128xf32>
    %cst_91 = arith.constant 0.00999999977 : f32
    %224 = vector.broadcast %cst_91 : f32 to vector<8x128xf32>
    %225 = arith.mulf %224, %221 : vector<8x128xf32>
    %226 = arith.select %223, %221, %225 : vector<8x128xi1>, vector<8x128xf32>
    %227 = arith.truncf %226 : vector<8x128xf32> to vector<8x128xbf16>
    %c0_92 = arith.constant 0 : index
    %c0_93 = arith.constant 0 : index
    %228 = vector.load %arg15[%c0_92, %c0_93] : memref<128x128xbf16, #tpu.memory_space<vmem>>, vector<128x128xbf16>
    %cst_94 = arith.constant dense<0.000000e+00> : vector<8x128xf32>
    %229 = tpu.matmul %227, %228, %cst_94 {dimension_numbers = #tpu.dot_dimension_numbers<[1], [0], [0], [1], [0, 0, 1, 1], [], []>} : vector<8x128xbf16>, vector<128x128xbf16>, vector<8x128xf32> -> vector<8x128xf32>
    %230 = vector.extract_strided_slice %5 {offsets = [8, 0], sizes = [1, 128], strides = [1, 1]} : vector<16x256xf32> to vector<1x128xf32>
    %231 = vector.broadcast %230 : vector<1x128xf32> to vector<8x128xf32>
    %232 = arith.addf %229, %231 : vector<8x128xf32>
    %cst_95 = arith.constant 0.000000e+00 : f32
    %233 = vector.broadcast %cst_95 : f32 to vector<8x128xf32>
    %234 = arith.cmpf ogt, %232, %233 : vector<8x128xf32>
    %cst_96 = arith.constant 0.00999999977 : f32
    %235 = vector.broadcast %cst_96 : f32 to vector<8x128xf32>
    %236 = arith.mulf %235, %232 : vector<8x128xf32>
    %237 = arith.select %234, %232, %236 : vector<8x128xi1>, vector<8x128xf32>
    %238 = arith.truncf %237 : vector<8x128xf32> to vector<8x128xbf16>
    %c0_97 = arith.constant 0 : index
    %c0_98 = arith.constant 0 : index
    %239 = vector.load %arg16[%c0_97, %c0_98] : memref<128x2048xbf16, #tpu.memory_space<vmem>>, vector<128x2048xbf16>
    %cst_99 = arith.constant dense<0.000000e+00> : vector<8x2048xf32>
    %240 = tpu.matmul %238, %239, %cst_99 {dimension_numbers = #tpu.dot_dimension_numbers<[1], [0], [0], [1], [0, 0, 1, 1], [], []>} : vector<8x128xbf16>, vector<128x2048xbf16>, vector<8x2048xf32> -> vector<8x2048xf32>
    %c0_100 = arith.constant 0 : index
    %c0_101 = arith.constant 0 : index
    %241 = vector.load %arg2[%c0_100, %c0_101] : memref<1x2048xf32, #tpu.memory_space<vmem>>, vector<1x2048xf32>
    %242 = vector.broadcast %241 : vector<1x2048xf32> to vector<8x2048xf32>
    %243 = arith.addf %240, %242 : vector<8x2048xf32>
    %244 = math.exp %48 : vector<8x128xf32>
    %245 = vector.extract_strided_slice %243 {offsets = [0, 0], sizes = [8, 128], strides = [1, 1]} : vector<8x2048xf32> to vector<8x128xf32>
    %246 = vector.extract_strided_slice %243 {offsets = [0, 128], sizes = [8, 128], strides = [1, 1]} : vector<8x2048xf32> to vector<8x128xf32>
    %247 = math.tanh %246 : vector<8x128xf32>
    %cst_102 = arith.constant 0.000000e+00 : f32
    %248 = vector.broadcast %cst_102 : f32 to vector<8x128xf32>
    %249 = arith.subf %248, %247 : vector<8x128xf32>
    %250 = math.exp %249 : vector<8x128xf32>
    %cst_103 = arith.constant -1.000000e+00 : f32
    %251 = vector.broadcast %cst_103 : f32 to vector<8x128xf32>
    %252 = arith.addf %251, %247 : vector<8x128xf32>
    %253 = arith.subf %252, %48 : vector<8x128xf32>
    %254 = arith.mulf %244, %250 : vector<8x128xf32>
    %255 = arith.addf %253, %254 : vector<8x128xf32>
    %256 = arith.subf %42, %245 : vector<8x128xf32>
    %257 = arith.mulf %256, %256 : vector<8x128xf32>
    %258 = arith.mulf %257, %250 : vector<8x128xf32>
    %259 = arith.addf %255, %258 : vector<8x128xf32>
    %cst_104 = arith.constant 5.000000e-01 : f32
    %260 = vector.broadcast %cst_104 : f32 to vector<8x128xf32>
    %261 = arith.mulf %260, %259 : vector<8x128xf32>
    %cst_105 = arith.constant dense<0.000000e+00> : vector<8xf32>
    %262 = vector.multi_reduction <add>, %261, %cst_105 [1] : vector<8x128xf32> to vector<8xf32>
    %263 = vector.shape_cast %262 : vector<8xf32> to vector<8x1xf32>
    %264 = vector.extract_strided_slice %124 {offsets = [0, 0], sizes = [8, 1], strides = [1, 1]} : vector<8x8xf32> to vector<8x1xf32>
    %265 = arith.mulf %263, %264 : vector<8x1xf32>
    %266 = vector.shape_cast %265 : vector<8x1xf32> to vector<1x8x1xf32>
    %cst_106 = arith.constant dense<0.000000e+00> : vector<1xf32>
    %267 = vector.multi_reduction <add>, %266, %cst_106 [1, 2] : vector<1x8x1xf32> to vector<1xf32>
    %268 = vector.shape_cast %267 : vector<1xf32> to vector<1x1x1xf32>
    %269 = vector.extract %268[0, 0, 0] : f32 from vector<1x1x1xf32>
    %cst_107 = arith.constant 0.000000e+00 : f32
    %270 = arith.addf %cst_107, %269 : f32
    %271 = vector.extract_strided_slice %243 {offsets = [0, 256], sizes = [8, 128], strides = [1, 1]} : vector<8x2048xf32> to vector<8x128xf32>
    %272 = vector.extract_strided_slice %243 {offsets = [0, 384], sizes = [8, 128], strides = [1, 1]} : vector<8x2048xf32> to vector<8x128xf32>
    %273 = math.tanh %272 : vector<8x128xf32>
    %cst_108 = arith.constant 0.000000e+00 : f32
    %274 = vector.broadcast %cst_108 : f32 to vector<8x128xf32>
    %275 = arith.subf %274, %273 : vector<8x128xf32>
    %276 = math.exp %275 : vector<8x128xf32>
    %cst_109 = arith.constant -1.000000e+00 : f32
    %277 = vector.broadcast %cst_109 : f32 to vector<8x128xf32>
    %278 = arith.addf %277, %273 : vector<8x128xf32>
    %279 = arith.subf %278, %48 : vector<8x128xf32>
    %280 = arith.mulf %244, %276 : vector<8x128xf32>
    %281 = arith.addf %279, %280 : vector<8x128xf32>
    %282 = arith.subf %42, %271 : vector<8x128xf32>
    %283 = arith.mulf %282, %282 : vector<8x128xf32>
    %284 = arith.mulf %283, %276 : vector<8x128xf32>
    %285 = arith.addf %281, %284 : vector<8x128xf32>
    %cst_110 = arith.constant 5.000000e-01 : f32
    %286 = vector.broadcast %cst_110 : f32 to vector<8x128xf32>
    %287 = arith.mulf %286, %285 : vector<8x128xf32>
    %cst_111 = arith.constant dense<0.000000e+00> : vector<8xf32>
    %288 = vector.multi_reduction <add>, %287, %cst_111 [1] : vector<8x128xf32> to vector<8xf32>
    %289 = vector.shape_cast %288 : vector<8xf32> to vector<8x1xf32>
    %290 = vector.extract_strided_slice %124 {offsets = [0, 1], sizes = [8, 1], strides = [1, 1]} : vector<8x8xf32> to vector<8x1xf32>
    %291 = arith.mulf %289, %290 : vector<8x1xf32>
    %292 = vector.shape_cast %291 : vector<8x1xf32> to vector<1x8x1xf32>
    %cst_112 = arith.constant dense<0.000000e+00> : vector<1xf32>
    %293 = vector.multi_reduction <add>, %292, %cst_112 [1, 2] : vector<1x8x1xf32> to vector<1xf32>
    %294 = vector.shape_cast %293 : vector<1xf32> to vector<1x1x1xf32>
    %295 = vector.extract %294[0, 0, 0] : f32 from vector<1x1x1xf32>
    %296 = arith.addf %270, %295 : f32
    %297 = vector.extract_strided_slice %243 {offsets = [0, 512], sizes = [8, 128], strides = [1, 1]} : vector<8x2048xf32> to vector<8x128xf32>
    %298 = vector.extract_strided_slice %243 {offsets = [0, 640], sizes = [8, 128], strides = [1, 1]} : vector<8x2048xf32> to vector<8x128xf32>
    %299 = math.tanh %298 : vector<8x128xf32>
    %cst_113 = arith.constant 0.000000e+00 : f32
    %300 = vector.broadcast %cst_113 : f32 to vector<8x128xf32>
    %301 = arith.subf %300, %299 : vector<8x128xf32>
    %302 = math.exp %301 : vector<8x128xf32>
    %cst_114 = arith.constant -1.000000e+00 : f32
    %303 = vector.broadcast %cst_114 : f32 to vector<8x128xf32>
    %304 = arith.addf %303, %299 : vector<8x128xf32>
    %305 = arith.subf %304, %48 : vector<8x128xf32>
    %306 = arith.mulf %244, %302 : vector<8x128xf32>
    %307 = arith.addf %305, %306 : vector<8x128xf32>
    %308 = arith.subf %42, %297 : vector<8x128xf32>
    %309 = arith.mulf %308, %308 : vector<8x128xf32>
    %310 = arith.mulf %309, %302 : vector<8x128xf32>
    %311 = arith.addf %307, %310 : vector<8x128xf32>
    %cst_115 = arith.constant 5.000000e-01 : f32
    %312 = vector.broadcast %cst_115 : f32 to vector<8x128xf32>
    %313 = arith.mulf %312, %311 : vector<8x128xf32>
    %cst_116 = arith.constant dense<0.000000e+00> : vector<8xf32>
    %314 = vector.multi_reduction <add>, %313, %cst_116 [1] : vector<8x128xf32> to vector<8xf32>
    %315 = vector.shape_cast %314 : vector<8xf32> to vector<8x1xf32>
    %316 = vector.extract_strided_slice %124 {offsets = [0, 2], sizes = [8, 1], strides = [1, 1]} : vector<8x8xf32> to vector<8x1xf32>
    %317 = arith.mulf %315, %316 : vector<8x1xf32>
    %318 = vector.shape_cast %317 : vector<8x1xf32> to vector<1x8x1xf32>
    %cst_117 = arith.constant dense<0.000000e+00> : vector<1xf32>
    %319 = vector.multi_reduction <add>, %318, %cst_117 [1, 2] : vector<1x8x1xf32> to vector<1xf32>
    %320 = vector.shape_cast %319 : vector<1xf32> to vector<1x1x1xf32>
    %321 = vector.extract %320[0, 0, 0] : f32 from vector<1x1x1xf32>
    %322 = arith.addf %296, %321 : f32
    %323 = vector.extract_strided_slice %243 {offsets = [0, 768], sizes = [8, 128], strides = [1, 1]} : vector<8x2048xf32> to vector<8x128xf32>
    %324 = vector.extract_strided_slice %243 {offsets = [0, 896], sizes = [8, 128], strides = [1, 1]} : vector<8x2048xf32> to vector<8x128xf32>
    %325 = math.tanh %324 : vector<8x128xf32>
    %cst_118 = arith.constant 0.000000e+00 : f32
    %326 = vector.broadcast %cst_118 : f32 to vector<8x128xf32>
    %327 = arith.subf %326, %325 : vector<8x128xf32>
    %328 = math.exp %327 : vector<8x128xf32>
    %cst_119 = arith.constant -1.000000e+00 : f32
    %329 = vector.broadcast %cst_119 : f32 to vector<8x128xf32>
    %330 = arith.addf %329, %325 : vector<8x128xf32>
    %331 = arith.subf %330, %48 : vector<8x128xf32>
    %332 = arith.mulf %244, %328 : vector<8x128xf32>
    %333 = arith.addf %331, %332 : vector<8x128xf32>
    %334 = arith.subf %42, %323 : vector<8x128xf32>
    %335 = arith.mulf %334, %334 : vector<8x128xf32>
    %336 = arith.mulf %335, %328 : vector<8x128xf32>
    %337 = arith.addf %333, %336 : vector<8x128xf32>
    %cst_120 = arith.constant 5.000000e-01 : f32
    %338 = vector.broadcast %cst_120 : f32 to vector<8x128xf32>
    %339 = arith.mulf %338, %337 : vector<8x128xf32>
    %cst_121 = arith.constant dense<0.000000e+00> : vector<8xf32>
    %340 = vector.multi_reduction <add>, %339, %cst_121 [1] : vector<8x128xf32> to vector<8xf32>
    %341 = vector.shape_cast %340 : vector<8xf32> to vector<8x1xf32>
    %342 = vector.extract_strided_slice %124 {offsets = [0, 3], sizes = [8, 1], strides = [1, 1]} : vector<8x8xf32> to vector<8x1xf32>
    %343 = arith.mulf %341, %342 : vector<8x1xf32>
    %344 = vector.shape_cast %343 : vector<8x1xf32> to vector<1x8x1xf32>
    %cst_122 = arith.constant dense<0.000000e+00> : vector<1xf32>
    %345 = vector.multi_reduction <add>, %344, %cst_122 [1, 2] : vector<1x8x1xf32> to vector<1xf32>
    %346 = vector.shape_cast %345 : vector<1xf32> to vector<1x1x1xf32>
    %347 = vector.extract %346[0, 0, 0] : f32 from vector<1x1x1xf32>
    %348 = arith.addf %322, %347 : f32
    %349 = vector.extract_strided_slice %243 {offsets = [0, 1024], sizes = [8, 128], strides = [1, 1]} : vector<8x2048xf32> to vector<8x128xf32>
    %350 = vector.extract_strided_slice %243 {offsets = [0, 1152], sizes = [8, 128], strides = [1, 1]} : vector<8x2048xf32> to vector<8x128xf32>
    %351 = math.tanh %350 : vector<8x128xf32>
    %cst_123 = arith.constant 0.000000e+00 : f32
    %352 = vector.broadcast %cst_123 : f32 to vector<8x128xf32>
    %353 = arith.subf %352, %351 : vector<8x128xf32>
    %354 = math.exp %353 : vector<8x128xf32>
    %cst_124 = arith.constant -1.000000e+00 : f32
    %355 = vector.broadcast %cst_124 : f32 to vector<8x128xf32>
    %356 = arith.addf %355, %351 : vector<8x128xf32>
    %357 = arith.subf %356, %48 : vector<8x128xf32>
    %358 = arith.mulf %244, %354 : vector<8x128xf32>
    %359 = arith.addf %357, %358 : vector<8x128xf32>
    %360 = arith.subf %42, %349 : vector<8x128xf32>
    %361 = arith.mulf %360, %360 : vector<8x128xf32>
    %362 = arith.mulf %361, %354 : vector<8x128xf32>
    %363 = arith.addf %359, %362 : vector<8x128xf32>
    %cst_125 = arith.constant 5.000000e-01 : f32
    %364 = vector.broadcast %cst_125 : f32 to vector<8x128xf32>
    %365 = arith.mulf %364, %363 : vector<8x128xf32>
    %cst_126 = arith.constant dense<0.000000e+00> : vector<8xf32>
    %366 = vector.multi_reduction <add>, %365, %cst_126 [1] : vector<8x128xf32> to vector<8xf32>
    %367 = vector.shape_cast %366 : vector<8xf32> to vector<8x1xf32>
    %368 = vector.extract_strided_slice %124 {offsets = [0, 4], sizes = [8, 1], strides = [1, 1]} : vector<8x8xf32> to vector<8x1xf32>
    %369 = arith.mulf %367, %368 : vector<8x1xf32>
    %370 = vector.shape_cast %369 : vector<8x1xf32> to vector<1x8x1xf32>
    %cst_127 = arith.constant dense<0.000000e+00> : vector<1xf32>
    %371 = vector.multi_reduction <add>, %370, %cst_127 [1, 2] : vector<1x8x1xf32> to vector<1xf32>
    %372 = vector.shape_cast %371 : vector<1xf32> to vector<1x1x1xf32>
    %373 = vector.extract %372[0, 0, 0] : f32 from vector<1x1x1xf32>
    %374 = arith.addf %348, %373 : f32
    %375 = vector.extract_strided_slice %243 {offsets = [0, 1280], sizes = [8, 128], strides = [1, 1]} : vector<8x2048xf32> to vector<8x128xf32>
    %376 = vector.extract_strided_slice %243 {offsets = [0, 1408], sizes = [8, 128], strides = [1, 1]} : vector<8x2048xf32> to vector<8x128xf32>
    %377 = math.tanh %376 : vector<8x128xf32>
    %cst_128 = arith.constant 0.000000e+00 : f32
    %378 = vector.broadcast %cst_128 : f32 to vector<8x128xf32>
    %379 = arith.subf %378, %377 : vector<8x128xf32>
    %380 = math.exp %379 : vector<8x128xf32>
    %cst_129 = arith.constant -1.000000e+00 : f32
    %381 = vector.broadcast %cst_129 : f32 to vector<8x128xf32>
    %382 = arith.addf %381, %377 : vector<8x128xf32>
    %383 = arith.subf %382, %48 : vector<8x128xf32>
    %384 = arith.mulf %244, %380 : vector<8x128xf32>
    %385 = arith.addf %383, %384 : vector<8x128xf32>
    %386 = arith.subf %42, %375 : vector<8x128xf32>
    %387 = arith.mulf %386, %386 : vector<8x128xf32>
    %388 = arith.mulf %387, %380 : vector<8x128xf32>
    %389 = arith.addf %385, %388 : vector<8x128xf32>
    %cst_130 = arith.constant 5.000000e-01 : f32
    %390 = vector.broadcast %cst_130 : f32 to vector<8x128xf32>
    %391 = arith.mulf %390, %389 : vector<8x128xf32>
    %cst_131 = arith.constant dense<0.000000e+00> : vector<8xf32>
    %392 = vector.multi_reduction <add>, %391, %cst_131 [1] : vector<8x128xf32> to vector<8xf32>
    %393 = vector.shape_cast %392 : vector<8xf32> to vector<8x1xf32>
    %394 = vector.extract_strided_slice %124 {offsets = [0, 5], sizes = [8, 1], strides = [1, 1]} : vector<8x8xf32> to vector<8x1xf32>
    %395 = arith.mulf %393, %394 : vector<8x1xf32>
    %396 = vector.shape_cast %395 : vector<8x1xf32> to vector<1x8x1xf32>
    %cst_132 = arith.constant dense<0.000000e+00> : vector<1xf32>
    %397 = vector.multi_reduction <add>, %396, %cst_132 [1, 2] : vector<1x8x1xf32> to vector<1xf32>
    %398 = vector.shape_cast %397 : vector<1xf32> to vector<1x1x1xf32>
    %399 = vector.extract %398[0, 0, 0] : f32 from vector<1x1x1xf32>
    %400 = arith.addf %374, %399 : f32
    %401 = vector.extract_strided_slice %243 {offsets = [0, 1536], sizes = [8, 128], strides = [1, 1]} : vector<8x2048xf32> to vector<8x128xf32>
    %402 = vector.extract_strided_slice %243 {offsets = [0, 1664], sizes = [8, 128], strides = [1, 1]} : vector<8x2048xf32> to vector<8x128xf32>
    %403 = math.tanh %402 : vector<8x128xf32>
    %cst_133 = arith.constant 0.000000e+00 : f32
    %404 = vector.broadcast %cst_133 : f32 to vector<8x128xf32>
    %405 = arith.subf %404, %403 : vector<8x128xf32>
    %406 = math.exp %405 : vector<8x128xf32>
    %cst_134 = arith.constant -1.000000e+00 : f32
    %407 = vector.broadcast %cst_134 : f32 to vector<8x128xf32>
    %408 = arith.addf %407, %403 : vector<8x128xf32>
    %409 = arith.subf %408, %48 : vector<8x128xf32>
    %410 = arith.mulf %244, %406 : vector<8x128xf32>
    %411 = arith.addf %409, %410 : vector<8x128xf32>
    %412 = arith.subf %42, %401 : vector<8x128xf32>
    %413 = arith.mulf %412, %412 : vector<8x128xf32>
    %414 = arith.mulf %413, %406 : vector<8x128xf32>
    %415 = arith.addf %411, %414 : vector<8x128xf32>
    %cst_135 = arith.constant 5.000000e-01 : f32
    %416 = vector.broadcast %cst_135 : f32 to vector<8x128xf32>
    %417 = arith.mulf %416, %415 : vector<8x128xf32>
    %cst_136 = arith.constant dense<0.000000e+00> : vector<8xf32>
    %418 = vector.multi_reduction <add>, %417, %cst_136 [1] : vector<8x128xf32> to vector<8xf32>
    %419 = vector.shape_cast %418 : vector<8xf32> to vector<8x1xf32>
    %420 = vector.extract_strided_slice %124 {offsets = [0, 6], sizes = [8, 1], strides = [1, 1]} : vector<8x8xf32> to vector<8x1xf32>
    %421 = arith.mulf %419, %420 : vector<8x1xf32>
    %422 = vector.shape_cast %421 : vector<8x1xf32> to vector<1x8x1xf32>
    %cst_137 = arith.constant dense<0.000000e+00> : vector<1xf32>
    %423 = vector.multi_reduction <add>, %422, %cst_137 [1, 2] : vector<1x8x1xf32> to vector<1xf32>
    %424 = vector.shape_cast %423 : vector<1xf32> to vector<1x1x1xf32>
    %425 = vector.extract %424[0, 0, 0] : f32 from vector<1x1x1xf32>
    %426 = arith.addf %400, %425 : f32
    %427 = vector.extract_strided_slice %243 {offsets = [0, 1792], sizes = [8, 128], strides = [1, 1]} : vector<8x2048xf32> to vector<8x128xf32>
    %428 = vector.extract_strided_slice %243 {offsets = [0, 1920], sizes = [8, 128], strides = [1, 1]} : vector<8x2048xf32> to vector<8x128xf32>
    %429 = math.tanh %428 : vector<8x128xf32>
    %cst_138 = arith.constant 0.000000e+00 : f32
    %430 = vector.broadcast %cst_138 : f32 to vector<8x128xf32>
    %431 = arith.subf %430, %429 : vector<8x128xf32>
    %432 = math.exp %431 : vector<8x128xf32>
    %cst_139 = arith.constant -1.000000e+00 : f32
    %433 = vector.broadcast %cst_139 : f32 to vector<8x128xf32>
    %434 = arith.addf %433, %429 : vector<8x128xf32>
    %435 = arith.subf %434, %48 : vector<8x128xf32>
    %436 = arith.mulf %244, %432 : vector<8x128xf32>
    %437 = arith.addf %435, %436 : vector<8x128xf32>
    %438 = arith.subf %42, %427 : vector<8x128xf32>
    %439 = arith.mulf %438, %438 : vector<8x128xf32>
    %440 = arith.mulf %439, %432 : vector<8x128xf32>
    %441 = arith.addf %437, %440 : vector<8x128xf32>
    %cst_140 = arith.constant 5.000000e-01 : f32
    %442 = vector.broadcast %cst_140 : f32 to vector<8x128xf32>
    %443 = arith.mulf %442, %441 : vector<8x128xf32>
    %cst_141 = arith.constant dense<0.000000e+00> : vector<8xf32>
    %444 = vector.multi_reduction <add>, %443, %cst_141 [1] : vector<8x128xf32> to vector<8xf32>
    %445 = vector.shape_cast %444 : vector<8xf32> to vector<8x1xf32>
    %446 = vector.extract_strided_slice %124 {offsets = [0, 7], sizes = [8, 1], strides = [1, 1]} : vector<8x8xf32> to vector<8x1xf32>
    %447 = arith.mulf %445, %446 : vector<8x1xf32>
    %448 = vector.shape_cast %447 : vector<8x1xf32> to vector<1x8x1xf32>
    %cst_142 = arith.constant dense<0.000000e+00> : vector<1xf32>
    %449 = vector.multi_reduction <add>, %448, %cst_142 [1, 2] : vector<1x8x1xf32> to vector<1xf32>
    %450 = vector.shape_cast %449 : vector<1xf32> to vector<1x1x1xf32>
    %451 = vector.extract %450[0, 0, 0] : f32 from vector<1x1x1xf32>
    %452 = arith.addf %426, %451 : f32
    %cst_143 = arith.constant 8.000000e+00 : f32
    %453 = arith.divf %452, %cst_143 : f32
    %cst_144 = arith.constant 1.000000e+00 : f32
    %454 = vector.broadcast %cst_144 : f32 to vector<8x64xf32>
    %455 = arith.addf %454, %47 : vector<8x64xf32>
    %456 = arith.mulf %34, %34 : vector<8x64xf32>
    %457 = arith.subf %455, %456 : vector<8x64xf32>
    %458 = math.exp %47 : vector<8x64xf32>
    %459 = arith.subf %457, %458 : vector<8x64xf32>
    %cst_145 = arith.constant -5.000000e-01 : f32
    %460 = vector.broadcast %cst_145 : f32 to vector<8x64xf32>
    %461 = arith.mulf %460, %459 : vector<8x64xf32>
    %462 = vector.shape_cast %461 : vector<8x64xf32> to vector<1x8x64xf32>
    %cst_146 = arith.constant dense<0.000000e+00> : vector<1xf32>
    %463 = vector.multi_reduction <add>, %462, %cst_146 [1, 2] : vector<1x8x64xf32> to vector<1xf32>
    %464 = vector.shape_cast %463 : vector<1xf32> to vector<1x1x1xf32>
    %465 = vector.extract %464[0, 0, 0] : f32 from vector<1x1x1xf32>
    %cst_147 = arith.constant 8.000000e+00 : f32
    %466 = arith.divf %465, %cst_147 : f32
    %467 = tpu.iota {dimensions = array<i32: 1>} : vector<8x40xi32>
    %c0_i32 = arith.constant 0 : i32
    %468 = vector.broadcast %c0_i32 : i32 to vector<8x40xi32>
    %469 = arith.cmpi eq, %467, %468 : vector<8x40xi32>
    %c1_i32 = arith.constant 1 : i32
    %470 = vector.broadcast %c1_i32 : i32 to vector<8x40xi32>
    %471 = arith.cmpi eq, %467, %470 : vector<8x40xi32>
    %c2_i32 = arith.constant 2 : i32
    %472 = vector.broadcast %c2_i32 : i32 to vector<8x40xi32>
    %473 = arith.cmpi eq, %467, %472 : vector<8x40xi32>
    %cst_148 = arith.constant 0.000000e+00 : f32
    %474 = vector.broadcast %466 : f32 to vector<8x40xf32>
    %475 = vector.broadcast %cst_148 : f32 to vector<8x40xf32>
    %476 = arith.select %473, %474, %475 : vector<8x40xi1>, vector<8x40xf32>
    %477 = vector.broadcast %453 : f32 to vector<8x40xf32>
    %478 = arith.select %471, %477, %476 : vector<8x40xi1>, vector<8x40xf32>
    %479 = vector.broadcast %216 : f32 to vector<8x40xf32>
    %480 = arith.select %469, %479, %478 : vector<8x40xi1>, vector<8x40xf32>
    %c0_149 = arith.constant 0 : index
    %c216 = arith.constant 216 : index
    %481 = vector.load %arg18[%c0_149, %c216] : memref<8x256xf32, #tpu.memory_space<vmem>>, vector<8x40xf32>
    tpu.vector_store %arg18[%c0_149, %c216], %480 {strides = array<i32>} : memref<8x256xf32, #tpu.memory_space<vmem>>, vector<8x40xf32>,
    return
  }
}

</mosaic_0001>

<llo_original>
// kernel: forward.3
$region0: #{forward.3}
  #allocation0 [shape = 'u32[]', space=smem, size = 0x4, offset = 0x4, fixed_abs, tag = 'smem constant byte address 0x4 - core index']
  #allocation1 [shape = 'u32[144,128]{1,0:T(1,128)}', space=vmem, size = 0x12000, scoped, tag = 'internal scratch']
  %s0 = inlined_call_operand.vmem [shape: f32[8,384], index: 0, kind: input, shape index: {}]
  %s1 = inlined_call_operand.hbm [shape: f32[16,256], index: 1, kind: input, shape index: {}]
  %s2 = inlined_call_operand.hbm [shape: f32[1,2048], index: 2, kind: input, shape index: {}]
  %s3 = inlined_call_operand.vmem [shape: bf16[128,128], index: 3, kind: input, shape index: {}]
  %s4 = inlined_call_operand.hbm [shape: bf16[128,128], index: 4, kind: input, shape index: {}]
  %s5 = inlined_call_operand.vmem [shape: bf16[128,384], index: 5, kind: input, shape index: {}]
  %s6 = inlined_call_operand.hbm [shape: bf16[64,256], index: 6, kind: input, shape index: {}]
  %s7 = inlined_call_operand.vmem [shape: bf16[128,256], index: 7, kind: input, shape index: {}]
  %s8 = inlined_call_operand.hbm [shape: bf16[128,128], index: 8, kind: input, shape index: {}]
  %s9 = inlined_call_operand.hbm [shape: bf16[128,128], index: 9, kind: input, shape index: {}]
  %s10 = inlined_call_operand.vmem [shape: bf16[256,16], index: 10, kind: input, shape index: {}]
  %s11 = inlined_call_operand.hbm [shape: bf16[128,128], index: 11, kind: input, shape index: {}]
  %s12 = inlined_call_operand.hbm [shape: bf16[128,128], index: 12, kind: input, shape index: {}]
  %s13 = inlined_call_operand.hbm [shape: bf16[128,128], index: 13, kind: input, shape index: {}]
  %s14 = inlined_call_operand.hbm [shape: bf16[64,128], index: 14, kind: input, shape index: {}]
  %s15 = inlined_call_operand.hbm [shape: bf16[128,128], index: 15, kind: input, shape index: {}]
  %s16 = inlined_call_operand.hbm [shape: bf16[128,2048], index: 16, kind: input, shape index: {}]
  %s17 = inlined_call_operand.vmem [shape: f32[8,512], index: 17, kind: output, shape index: {0}]
  %s18 = inlined_call_operand.vmem [shape: f32[8,256], index: 18, kind: output, shape index: {1}]
  %19 = xla_tuple %s17, %s18
  %s20 = sld [smem:[#allocation0]]
  $region134: #{forward.3} parent=0
    _
  %s22 = ssub.s32 1, %s20
  %s23 = scalar_select 0, %s22, %s20
  $region1: #{forward.3} parent=0
    #allocation2 [shape = 'u8[16384]{0}', space=vmem, size = 0x4000, scoped, tag = 'input window, operand 1, single buffered']
    #allocation3 [shape = 's32[1]{0}', space=sflag, size = 0x4, scoped, tag = 'scoped memory for forward.3']
    #allocation4 [shape = 'u8[8192]{0}', space=vmem, size = 0x2000, scoped, tag = 'input window, operand 2, single buffered']
    #allocation5 [shape = 's32[1]{0}', space=sflag, size = 0x4, scoped, tag = 'scoped memory for forward.3']
    #allocation6 [shape = 'u8[32768]{0}', space=vmem, size = 0x8000, scoped, tag = 'input window, operand 4, single buffered']
    #allocation7 [shape = 'u8[32768]{0}', space=vmem, size = 0x8000, scoped, tag = 'input window, operand 6, single buffered']
    #allocation8 [shape = 's32[1]{0}', space=sflag, size = 0x4, scoped, tag = 'scoped memory for forward.3']
    #allocation9 [shape = 'u8[32768]{0}', space=vmem, size = 0x8000, scoped, tag = 'input window, operand 8, single buffered']
    #allocation10 [shape = 'u8[32768]{0}', space=vmem, size = 0x8000, scoped, tag = 'input window, operand 9, single buffered']
    #allocation11 [shape = 's32[1]{0}', space=sflag, size = 0x4, scoped, tag = 'scoped memory for forward.3']
    #allocation12 [shape = 'u8[32768]{0}', space=vmem, size = 0x8000, scoped, tag = 'input window, operand 11, single buffered']
    #allocation13 [shape = 'u8[32768]{0}', space=vmem, size = 0x8000, scoped, tag = 'input window, operand 12, single buffered']
    #allocation14 [shape = 's32[1]{0}', space=sflag, size = 0x4, scoped, tag = 'scoped memory for forward.3']
    #allocation15 [shape = 'u8[32768]{0}', space=vmem, size = 0x8000, scoped, tag = 'input window, operand 13, single buffered']
    #allocation16 [shape = 'u8[16384]{0}', space=vmem, size = 0x4000, scoped, tag = 'input window, operand 14, single buffered']
    #allocation17 [shape = 's32[1]{0}', space=sflag, size = 0x4, scoped, tag = 'scoped memory for forward.3']
    #allocation18 [shape = 'u8[32768]{0}', space=vmem, size = 0x8000, scoped, tag = 'input window, operand 15, single buffered']
    #allocation19 [shape = 'u8[524288]{0}', space=vmem, size = 0x80000, scoped, tag = 'input window, operand 16, single buffered']
    #allocation20 [shape = 's32[1]{0}', space=sflag, size = 0x4, scoped, tag = 'scoped memory for forward.3']
    %24 = vsyncpa [#allocation3], 0
    %25 = vsyncpa [#allocation5], 0
    %26 = vsyncpa [#allocation8], 0
    %27 = vsyncpa [#allocation11], 0
    %28 = vsyncpa [#allocation14], 0
    %29 = vsyncpa [#allocation17], 0
    %30 = vsyncpa [#allocation20], 0
    // Predicated region
    $region2: #{forward.3} parent=1 // pred_check
      _
    $region3: #{forward.3} parent=1 // pred_check_branch
      %32 = sbr.rel (0) target = $region5
    $region4: #{forward.3} parent=1 // pred_region
      _
    $region5: #{forward.3} parent=1 // pred_fallthru
      _
    // Predicated region
    $region6: #{forward.3} parent=1 // pred_check
      _
    $region7: #{forward.3} parent=1 // pred_check_branch
      %34 = sbr.rel (0) target = $region9
    $region8: #{forward.3} parent=1 // pred_region
      %s36 = ssub.s32 512, 512
      %37 = vsyncadd [#allocation3], %s36
      %s38 = sshll.u32 [#allocation2], 4
      %s39 = int_to_ptr.vmem [resolvable:$true] %s38
      %44 = dma.hbm_to_vmem [thread:$0]  %s1, 512, %s39, [#allocation3], 256, 256, 16
    $region9: #{forward.3} parent=1 // pred_fallthru
      _
    // Predicated region
    $region10: #{forward.3} parent=1 // pred_check
      _
    $region11: #{forward.3} parent=1 // pred_check_branch
      %46 = sbr.rel (0) target = $region13
    $region12: #{forward.3} parent=1 // pred_region
      %s48 = ssub.s32 256, 256
      %49 = vsyncadd [#allocation5], %s48
      %s51 = sshll.u32 [#allocation4], 4
      %s52 = int_to_ptr.vmem [resolvable:$true] %s51
      %54 = dma.hbm_to_vmem [thread:$0]  %s2, 256, %s52, [#allocation5]
    $region13: #{forward.3} parent=1 // pred_fallthru
      _
    // Predicated region
    $region14: #{forward.3} parent=1 // pred_check
      _
    $region15: #{forward.3} parent=1 // pred_check_branch
      %56 = sbr.rel (0) target = $region17
    $region16: #{forward.3} parent=1 // pred_region
      _
    $region17: #{forward.3} parent=1 // pred_fallthru
      _
    // Predicated region
    $region18: #{forward.3} parent=1 // pred_check
      _
    $region19: #{forward.3} parent=1 // pred_check_branch
      %58 = sbr.rel (0) target = $region21
    $region20: #{forward.3} parent=1 // pred_region
      %s60 = ssub.s32 1024, 1024
      %61 = vsyncadd [#allocation5], %s60
      %s62 = sshll.u32 [#allocation6], 4
      %s63 = int_to_ptr.vmem [resolvable:$true] %s62
      %68 = dma.hbm_to_vmem [thread:$0]  %s4, 1024, %s63, [#allocation5], 64, 64, 4
    $region21: #{forward.3} parent=1 // pred_fallthru
      _
    // Predicated region
    $region22: #{forward.3} parent=1 // pred_check
      _
    $region23: #{forward.3} parent=1 // pred_check_branch
      %70 = sbr.rel (0) target = $region25
    $region24: #{forward.3} parent=1 // pred_region
      _
    $region25: #{forward.3} parent=1 // pred_fallthru
      _
    // Predicated region
    $region26: #{forward.3} parent=1 // pred_check
      _
    $region27: #{forward.3} parent=1 // pred_check_branch
      %72 = sbr.rel (0) target = $region29
    $region28: #{forward.3} parent=1 // pred_region
      %s74 = ssub.s32 1024, 1024
      %75 = vsyncadd [#allocation8], %s74
      %s76 = sshll.u32 [#allocation7], 4
      %s77 = int_to_ptr.vmem [resolvable:$true] %s76
      %82 = dma.hbm_to_vmem [thread:$0]  %s6, 1024, %s77, [#allocation8], 128, 128, 8
    $region29: #{forward.3} parent=1 // pred_fallthru
      _
    // Predicated region
    $region30: #{forward.3} parent=1 // pred_check
      _
    $region31: #{forward.3} parent=1 // pred_check_branch
      %84 = sbr.rel (0) target = $region33
    $region32: #{forward.3} parent=1 // pred_region
      _
    $region33: #{forward.3} parent=1 // pred_fallthru
      _
    // Predicated region
    $region34: #{forward.3} parent=1 // pred_check
      _
    $region35: #{forward.3} parent=1 // pred_check_branch
      %86 = sbr.rel (0) target = $region37
    $region36: #{forward.3} parent=1 // pred_region
      %s88 = ssub.s32 1024, 1024
      %89 = vsyncadd [#allocation8], %s88
      %s90 = sshll.u32 [#allocation9], 4
      %s91 = int_to_ptr.vmem [resolvable:$true] %s90
      %96 = dma.hbm_to_vmem [thread:$0]  %s8, 1024, %s91, [#allocation8], 64, 64, 4
    $region37: #{forward.3} parent=1 // pred_fallthru
      _
    // Predicated region
    $region38: #{forward.3} parent=1 // pred_check
      _
    $region39: #{forward.3} parent=1 // pred_check_branch
      %98 = sbr.rel (0) target = $region41
    $region40: #{forward.3} parent=1 // pred_region
      %s100 = ssub.s32 1024, 1024
      %101 = vsyncadd [#allocation11], %s100
      %s102 = sshll.u32 [#allocation10], 4
      %s103 = int_to_ptr.vmem [resolvable:$true] %s102
      %108 = dma.hbm_to_vmem [thread:$0]  %s9, 1024, %s103, [#allocation11], 64, 64, 4
    $region41: #{forward.3} parent=1 // pred_fallthru
      _
    // Predicated region
    $region42: #{forward.3} parent=1 // pred_check
      _
    $region43: #{forward.3} parent=1 // pred_check_branch
      %110 = sbr.rel (0) target = $region45
    $region44: #{forward.3} parent=1 // pred_region
      _
    $region45: #{forward.3} parent=1 // pred_fallthru
      _
    // Predicated region
    $region46: #{forward.3} parent=1 // pred_check
      _
    $region47: #{forward.3} parent=1 // pred_check_branch
      %112 = sbr.rel (0) target = $region49
    $region48: #{forward.3} parent=1 // pred_region
      %s114 = ssub.s32 1024, 1024
      %115 = vsyncadd [#allocation11], %s114
      %s116 = sshll.u32 [#allocation12], 4
      %s117 = int_to_ptr.vmem [resolvable:$true] %s116
      %122 = dma.hbm_to_vmem [thread:$0]  %s11, 1024, %s117, [#allocation11], 64, 64, 4
    $region49: #{forward.3} parent=1 // pred_fallthru
      _
    // Predicated region
    $region50: #{forward.3} parent=1 // pred_check
      _
    $region51: #{forward.3} parent=1 // pred_check_branch
      %124 = sbr.rel (0) target = $region53
    $region52: #{forward.3} parent=1 // pred_region
      %s126 = ssub.s32 1024, 1024
      %127 = vsyncadd [#allocation14], %s126
      %s128 = sshll.u32 [#allocation13], 4
      %s129 = int_to_ptr.vmem [resolvable:$true] %s128
      %134 = dma.hbm_to_vmem [thread:$0]  %s12, 1024, %s129, [#allocation14], 64, 64, 4
    $region53: #{forward.3} parent=1 // pred_fallthru
      _
    // Predicated region
    $region54: #{forward.3} parent=1 // pred_check
      _
    $region55: #{forward.3} parent=1 // pred_check_branch
      %136 = sbr.rel (0) target = $region57
    $region56: #{forward.3} parent=1 // pred_region
      %s138 = ssub.s32 1024, 1024
      %139 = vsyncadd [#allocation14], %s138
      %s140 = sshll.u32 [#allocation15], 4
      %s141 = int_to_ptr.vmem [resolvable:$true] %s140
      %146 = dma.hbm_to_vmem [thread:$0]  %s13, 1024, %s141, [#allocation14], 64, 64, 4
    $region57: #{forward.3} parent=1 // pred_fallthru
      _
    // Predicated region
    $region58: #{forward.3} parent=1 // pred_check
      _
    $region59: #{forward.3} parent=1 // pred_check_branch
      %148 = sbr.rel (0) target = $region61
    $region60: #{forward.3} parent=1 // pred_region
      %s150 = ssub.s32 512, 512
      %151 = vsyncadd [#allocation17], %s150
      %s152 = sshll.u32 [#allocation16], 4
      %s153 = int_to_ptr.vmem [resolvable:$true] %s152
      %158 = dma.hbm_to_vmem [thread:$0]  %s14, 512, %s153, [#allocation17], 64, 64, 4
    $region61: #{forward.3} parent=1 // pred_fallthru
      _
    // Predicated region
    $region62: #{forward.3} parent=1 // pred_check
      _
    $region63: #{forward.3} parent=1 // pred_check_branch
      %160 = sbr.rel (0) target = $region65
    $region64: #{forward.3} parent=1 // pred_region
      %s162 = ssub.s32 1024, 1024
      %163 = vsyncadd [#allocation17], %s162
      %s164 = sshll.u32 [#allocation18], 4
      %s165 = int_to_ptr.vmem [resolvable:$true] %s164
      %170 = dma.hbm_to_vmem [thread:$0]  %s15, 1024, %s165, [#allocation17], 64, 64, 4
    $region65: #{forward.3} parent=1 // pred_fallthru
      _
    // Predicated region
    $region66: #{forward.3} parent=1 // pred_check
      _
    $region67: #{forward.3} parent=1 // pred_check_branch
      %172 = sbr.rel (0) target = $region69
    $region68: #{forward.3} parent=1 // pred_region
      %s174 = ssub.s32 16384, 16384
      %175 = vsyncadd [#allocation20], %s174
      %s176 = sshll.u32 [#allocation19], 4
      %s177 = int_to_ptr.vmem [resolvable:$true] %s176
      %182 = dma.hbm_to_vmem [thread:$0]  %s16, 16384, %s177, [#allocation20], 1024, 1024, 64
    $region69: #{forward.3} parent=1 // pred_fallthru
      _
    // Predicated region
    $region70: #{forward.3} parent=1 // pred_check
      _
    $region71: #{forward.3} parent=1 // pred_check_branch
      %184 = sbr.rel (0) target = $region73
    $region72: #{forward.3} parent=1 // pred_region
      %185 = dma.done [#allocation3], 512
    $region73: #{forward.3} parent=1 // pred_fallthru
      _
    // Predicated region
    $region74: #{forward.3} parent=1 // pred_check
      _
    $region75: #{forward.3} parent=1 // pred_check_branch
      %187 = sbr.rel (0) target = $region77
    $region76: #{forward.3} parent=1 // pred_region
      %188 = dma.done [#allocation5], 256
    $region77: #{forward.3} parent=1 // pred_fallthru
      _
    // Predicated region
    $region78: #{forward.3} parent=1 // pred_check
      _
    $region79: #{forward.3} parent=1 // pred_check_branch
      %190 = sbr.rel (0) target = $region81
    $region80: #{forward.3} parent=1 // pred_region
      %191 = dma.done [#allocation5], 1024
    $region81: #{forward.3} parent=1 // pred_fallthru
      _
    // Predicated region
    $region82: #{forward.3} parent=1 // pred_check
      _
    $region83: #{forward.3} parent=1 // pred_check_branch
      %193 = sbr.rel (0) target = $region85
    $region84: #{forward.3} parent=1 // pred_region
      %194 = dma.done [#allocation8], 1024
    $region85: #{forward.3} parent=1 // pred_fallthru
      _
    // Predicated region
    $region86: #{forward.3} parent=1 // pred_check
      _
    $region87: #{forward.3} parent=1 // pred_check_branch
      %196 = sbr.rel (0) target = $region89
    $region88: #{forward.3} parent=1 // pred_region
      %197 = dma.done [#allocation8], 1024
    $region89: #{forward.3} parent=1 // pred_fallthru
      _
    // Predicated region
    $region90: #{forward.3} parent=1 // pred_check
      _
    $region91: #{forward.3} parent=1 // pred_check_branch
      %199 = sbr.rel (0) target = $region93
    $region92: #{forward.3} parent=1 // pred_region
      %200 = dma.done [#allocation11], 1024
    $region93: #{forward.3} parent=1 // pred_fallthru
      _
    // Predicated region
    $region94: #{forward.3} parent=1 // pred_check
      _
    $region95: #{forward.3} parent=1 // pred_check_branch
      %202 = sbr.rel (0) target = $region97
    $region96: #{forward.3} parent=1 // pred_region
      %203 = dma.done [#allocation11], 1024
    $region97: #{forward.3} parent=1 // pred_fallthru
      _
    // Predicated region
    $region98: #{forward.3} parent=1 // pred_check
      _
    $region99: #{forward.3} parent=1 // pred_check_branch
      %205 = sbr.rel (0) target = $region101
    $region100: #{forward.3} parent=1 // pred_region
      %206 = dma.done [#allocation14], 1024
    $region101: #{forward.3} parent=1 // pred_fallthru
      _
    // Predicated region
    $region102: #{forward.3} parent=1 // pred_check
      _
    $region103: #{forward.3} parent=1 // pred_check_branch
      %208 = sbr.rel (0) target = $region105
    $region104: #{forward.3} parent=1 // pred_region
      %209 = dma.done [#allocation14], 1024
    $region105: #{forward.3} parent=1 // pred_fallthru
      _
    // Predicated region
    $region106: #{forward.3} parent=1 // pred_check
      _
    $region107: #{forward.3} parent=1 // pred_check_branch
      %211 = sbr.rel (0) target = $region109
    $region108: #{forward.3} parent=1 // pred_region
      %212 = dma.done [#allocation17], 512
    $region109: #{forward.3} parent=1 // pred_fallthru
      _
    // Predicated region
    $region110: #{forward.3} parent=1 // pred_check
      _
    $region111: #{forward.3} parent=1 // pred_check_branch
      %214 = sbr.rel (0) target = $region113
    $region112: #{forward.3} parent=1 // pred_region
      %215 = dma.done [#allocation17], 1024
    $region113: #{forward.3} parent=1 // pred_fallthru
      _
    // Predicated region
    $region114: #{forward.3} parent=1 // pred_check
      _
    $region115: #{forward.3} parent=1 // pred_check_branch
      %217 = sbr.rel (0) target = $region117
    $region116: #{forward.3} parent=1 // pred_region
      %218 = dma.done [#allocation20], 16384
    $region117: #{forward.3} parent=1 // pred_fallthru
      _
    %v220 = vld [vmem:[%s0] sm:$0xff]
    %v221 = vld [vmem:[%s0 + $0x8] sm:$0xff]
    %v222 = vld [vmem:[%s0 + $0x10] sm:$0xff]
    %v223 = vld [vmem:[#allocation2] sm:$0xff]
    %v224 = vld [vmem:[#allocation2 + $0x8] sm:$0xff]
    %v225 = vld [vmem:[#allocation2 + $0x10] sm:$0xff]
    %v226 = vpack.c.bf16 %v220, %v220
    %v227 = vld [vmem:[%s3] sm:$0xf]
    %v228 = vld [vmem:[%s3 + $0x4] sm:$0xf]
    %v229 = vld [vmem:[%s3 + $0x8] sm:$0xf]
    %v230 = vld [vmem:[%s3 + $0xc] sm:$0xf]
    %v231 = vld [vmem:[%s3 + $0x10] sm:$0xf]
    %v232 = vld [vmem:[%s3 + $0x14] sm:$0xf]
    %v233 = vld [vmem:[%s3 + $0x18] sm:$0xf]
    %v234 = vld [vmem:[%s3 + $0x1c] sm:$0xf]
    %v235 = vld [vmem:[%s3 + $0x20] sm:$0xf]
    %v236 = vld [vmem:[%s3 + $0x24] sm:$0xf]
    %v237 = vld [vmem:[%s3 + $0x28] sm:$0xf]
    %v238 = vld [vmem:[%s3 + $0x2c] sm:$0xf]
    %v239 = vld [vmem:[%s3 + $0x30] sm:$0xf]
    %v240 = vld [vmem:[%s3 + $0x34] sm:$0xf]
    %v241 = vld [vmem:[%s3 + $0x38] sm:$0xf]
    %v242 = vld [vmem:[%s3 + $0x3c] sm:$0xf]
    %v243 = vlaneseq
    %v244 = vshrl.u32 %v243, 7
    %v245 = vsub.s32 0, %v244
    %v246 = vrot.slane %v223, %v245
    %v263 = vunpack.c.l.b16 %v227
    %v264 = vunpack.c.l.b16 %v228
    %v265 = vunpack.c.l.b16 %v229
    %v266 = vunpack.c.l.b16 %v230
    %v267 = vunpack.c.l.b16 %v231
    %v268 = vunpack.c.l.b16 %v232
    %v269 = vunpack.c.l.b16 %v233
    %v270 = vunpack.c.l.b16 %v234
    %v271 = vunpack.c.l.b16 %v235
    %v272 = vunpack.c.l.b16 %v236
    %v273 = vunpack.c.l.b16 %v237
    %v274 = vunpack.c.l.b16 %v238
    %v275 = vunpack.c.l.b16 %v239
    %v276 = vunpack.c.l.b16 %v240
    %v277 = vunpack.c.l.b16 %v241
    %v278 = vunpack.c.l.b16 %v242
    %v279 = vpack.c.b16 %v264, %v263
    %v280 = vpack.c.b16 %v266, %v265
    %v281 = vpack.c.b16 %v268, %v267
    %v282 = vpack.c.b16 %v270, %v269
    %v283 = vpack.c.b16 %v272, %v271
    %v284 = vpack.c.b16 %v274, %v273
    %v285 = vpack.c.b16 %v276, %v275
    %v286 = vpack.c.b16 %v278, %v277
    %295 = vmatprep.subr.bf16.mxu0 0
    %296 = vmatpush1.bf16.msra.mxu0 %v286
    %297 = vmatprep.subr.bf16.mxu0 0
    %298 = vmatpush1.bf16.msra.mxu0 %v285
    %299 = vmatprep.subr.bf16.mxu0 0
    %300 = vmatpush1.bf16.msra.mxu0 %v284
    %301 = vmatprep.subr.bf16.mxu0 0
    %302 = vmatpush1.bf16.msra.mxu0 %v283
    %303 = vmatprep.subr.bf16.mxu0 0
    %304 = vmatpush1.bf16.msra.mxu0 %v282
    %305 = vmatprep.subr.bf16.mxu0 0
    %306 = vmatpush1.bf16.msra.mxu0 %v281
    %307 = vmatprep.subr.bf16.mxu0 0
    %308 = vmatpush1.bf16.msra.mxu0 %v280
    %309 = vmatprep.subr.bf16.mxu0 0
    %310 = vmatpush1.bf16.msra.mxu0 %v279
    %311 = vmatprep.subr.bf16.mxu0 0
    %312 = vmatpush2.bf16.msra.mxu0 0
    %313 = vmatprep.subr.bf16.mxu0 0
    %314 = vmatpush2.bf16.msra.mxu0 0
    %315 = vmatprep.subr.bf16.mxu0 0
    %316 = vmatpush2.bf16.msra.mxu0 0
    %317 = vmatprep.subr.bf16.mxu0 0
    %318 = vmatpush2.bf16.msra.mxu0 0
    %319 = vmatprep.subr.bf16.mxu0 0
    %320 = vmatpush2.bf16.msra.mxu0 0
    %321 = vmatprep.subr.bf16.mxu0 0
    %322 = vmatpush2.bf16.msra.mxu0 0
    %323 = vmatprep.subr.bf16.mxu0 0
    %324 = vmatpush2.bf16.msra.mxu0 0
    %325 = vmatprep.subr.bf16.mxu0 0
    %326 = vmatpush2.bf16.msra.mxu0 0
    %327 = vmatprep.mubr.bf16.mxu0 0
    %328 = vmatmul.mubr.bf16.gmra.mxu0 %v226
    %v329 = vpop.f32.mrf.mxu0
    %v330 = vadd.f32 %v246, %v329
    %v331 = vpop.f32.mrf.mxu0
    %v332 = vpop.f32.mrf.mxu0
    %v333 = vpop.f32.mrf.mxu0
    %334 = vdwg.mxu0
    %vm335 = vcmp.gt.f32.partialorder %v330, 0.0
    %v336 = vmul.f32 %v330, 0.01
    %v337 = vsel %vm335, %v330, %v336
    %v338 = vpack.c.bf16 %v337, %v337
    %v339 = vld [vmem:[#allocation6] sm:$0xf]
    %v340 = vld [vmem:[#allocation6 + $0x4] sm:$0xf]
    %v341 = vld [vmem:[#allocation6 + $0x8] sm:$0xf]
    %v342 = vld [vmem:[#allocation6 + $0xc] sm:$0xf]
    %v343 = vld [vmem:[#allocation6 + $0x10] sm:$0xf]
    %v344 = vld [vmem:[#allocation6 + $0x14] sm:$0xf]
    %v345 = vld [vmem:[#allocation6 + $0x18] sm:$0xf]
    %v346 = vld [vmem:[#allocation6 + $0x1c] sm:$0xf]
    %v347 = vld [vmem:[#allocation6 + $0x20] sm:$0xf]
    %v348 = vld [vmem:[#allocation6 + $0x24] sm:$0xf]
    %v349 = vld [vmem:[#allocation6 + $0x28] sm:$0xf]
    %v350 = vld [vmem:[#allocation6 + $0x2c] sm:$0xf]
    %v351 = vld [vmem:[#allocation6 + $0x30] sm:$0xf]
    %v352 = vld [vmem:[#allocation6 + $0x34] sm:$0xf]
    %v353 = vld [vmem:[#allocation6 + $0x38] sm:$0xf]
    %v354 = vld [vmem:[#allocation6 + $0x3c] sm:$0xf]
    %v355 = vlaneseq
    %v356 = vshrl.u32 %v355, 7
    %v357 = vsub.s32 0, %v356
    %v358 = vrot.slane %v224, %v357
    %v375 = vunpack.c.l.b16 %v339
    %v376 = vunpack.c.l.b16 %v340
    %v377 = vunpack.c.l.b16 %v341
    %v378 = vunpack.c.l.b16 %v342
    %v379 = vunpack.c.l.b16 %v343
    %v380 = vunpack.c.l.b16 %v344
    %v381 = vunpack.c.l.b16 %v345
    %v382 = vunpack.c.l.b16 %v346
    %v383 = vunpack.c.l.b16 %v347
    %v384 = vunpack.c.l.b16 %v348
    %v385 = vunpack.c.l.b16 %v349
    %v386 = vunpack.c.l.b16 %v350
    %v387 = vunpack.c.l.b16 %v351
    %v388 = vunpack.c.l.b16 %v352
    %v389 = vunpack.c.l.b16 %v353
    %v390 = vunpack.c.l.b16 %v354
    %v391 = vpack.c.b16 %v376, %v375
    %v392 = vpack.c.b16 %v378, %v377
    %v393 = vpack.c.b16 %v380, %v379
    %v394 = vpack.c.b16 %v382, %v381
    %v395 = vpack.c.b16 %v384, %v383
    %v396 = vpack.c.b16 %v386, %v385
    %v397 = vpack.c.b16 %v388, %v387
    %v398 = vpack.c.b16 %v390, %v389
    %407 = vmatprep.subr.bf16.mxu0 0
    %408 = vmatpush1.bf16.msra.mxu0 %v398
    %409 = vmatprep.subr.bf16.mxu0 0
    %410 = vmatpush1.bf16.msra.mxu0 %v397
    %411 = vmatprep.subr.bf16.mxu0 0
    %412 = vmatpush1.bf16.msra.mxu0 %v396
    %413 = vmatprep.subr.bf16.mxu0 0
    %414 = vmatpush1.bf16.msra.mxu0 %v395
    %415 = vmatprep.subr.bf16.mxu0 0
    %416 = vmatpush1.bf16.msra.mxu0 %v394
    %417 = vmatprep.subr.bf16.mxu0 0
    %418 = vmatpush1.bf16.msra.mxu0 %v393
    %419 = vmatprep.subr.bf16.mxu0 0
    %420 = vmatpush1.bf16.msra.mxu0 %v392
    %421 = vmatprep.subr.bf16.mxu0 0
    %422 = vmatpush1.bf16.msra.mxu0 %v391
    %423 = vmatprep.subr.bf16.mxu0 0
    %424 = vmatpush2.bf16.msra.mxu0 0
    %425 = vmatprep.subr.bf16.mxu0 0
    %426 = vmatpush2.bf16.msra.mxu0 0
    %427 = vmatprep.subr.bf16.mxu0 0
    %428 = vmatpush2.bf16.msra.mxu0 0
    %429 = vmatprep.subr.bf16.mxu0 0
    %430 = vmatpush2.bf16.msra.mxu0 0
    %431 = vmatprep.subr.bf16.mxu0 0
    %432 = vmatpush2.bf16.msra.mxu0 0
    %433 = vmatprep.subr.bf16.mxu0 0
    %434 = vmatpush2.bf16.msra.mxu0 0
    %435 = vmatprep.subr.bf16.mxu0 0
    %436 = vmatpush2.bf16.msra.mxu0 0
    %437 = vmatprep.subr.bf16.mxu0 0
    %438 = vmatpush2.bf16.msra.mxu0 0
    %439 = vmatprep.mubr.bf16.mxu0 0
    %440 = vmatmul.mubr.bf16.gmra.mxu0 %v338
    %v441 = vpop.f32.mrf.mxu0
    %v442 = vadd.f32 %v358, %v441
    %v443 = vpop.f32.mrf.mxu0
    %v444 = vpop.f32.mrf.mxu0
    %v445 = vpop.f32.mrf.mxu0
    %446 = vdwg.mxu0
    %vm447 = vcmp.gt.f32.partialorder %v442, 0.0
    %v448 = vmul.f32 %v442, 0.01
    %v449 = vsel %vm447, %v442, %v448
    %v450 = vpack.c.bf16 %v449, %v449
    %v451 = vld [vmem:[%s5] sm:$0xff]
    %v452 = vld [vmem:[%s5 + $0x8] sm:$0xf]
    %v453 = vld [vmem:[%s5 + $0xc] sm:$0xff]
    %v454 = vld [vmem:[%s5 + $0x14] sm:$0xf]
    %v455 = vld [vmem:[%s5 + $0x18] sm:$0xff]
    %v456 = vld [vmem:[%s5 + $0x20] sm:$0xf]
    %v457 = vld [vmem:[%s5 + $0x24] sm:$0xff]
    %v458 = vld [vmem:[%s5 + $0x2c] sm:$0xf]
    %v459 = vld [vmem:[%s5 + $0x30] sm:$0xff]
    %v460 = vld [vmem:[%s5 + $0x38] sm:$0xf]
    %v461 = vld [vmem:[%s5 + $0x3c] sm:$0xff]
    %v462 = vld [vmem:[%s5 + $0x44] sm:$0xf]
    %v463 = vld [vmem:[%s5 + $0x48] sm:$0xff]
    %v464 = vld [vmem:[%s5 + $0x50] sm:$0xf]
    %v465 = vld [vmem:[%s5 + $0x54] sm:$0xff]
    %v466 = vld [vmem:[%s5 + $0x5c] sm:$0xf]
    %v467 = vld [vmem:[%s5 + $0x60] sm:$0xff]
    %v468 = vld [vmem:[%s5 + $0x68] sm:$0xf]
    %v469 = vld [vmem:[%s5 + $0x6c] sm:$0xff]
    %v470 = vld [vmem:[%s5 + $0x74] sm:$0xf]
    %v471 = vld [vmem:[%s5 + $0x78] sm:$0xff]
    %v472 = vld [vmem:[%s5 + $0x80] sm:$0xf]
    %v473 = vld [vmem:[%s5 + $0x84] sm:$0xff]
    %v474 = vld [vmem:[%s5 + $0x8c] sm:$0xf]
    %v475 = vld [vmem:[%s5 + $0x90] sm:$0xff]
    %v476 = vld [vmem:[%s5 + $0x98] sm:$0xf]
    %v477 = vld [vmem:[%s5 + $0x9c] sm:$0xff]
    %v478 = vld [vmem:[%s5 + $0xa4] sm:$0xf]
    %v479 = vld [vmem:[%s5 + $0xa8] sm:$0xff]
    %v480 = vld [vmem:[%s5 + $0xb0] sm:$0xf]
    %v481 = vld [vmem:[%s5 + $0xb4] sm:$0xff]
    %v482 = vld [vmem:[%s5 + $0xbc] sm:$0xf]
    %v515 = vunpack.c.l.b16 %v451
    %v516 = vunpack.c.h.b16 %v451
    %v517 = vunpack.c.l.b16 %v452
    %v518 = vunpack.c.l.b16 %v453
    %v519 = vunpack.c.h.b16 %v453
    %v520 = vunpack.c.l.b16 %v454
    %v521 = vunpack.c.l.b16 %v455
    %v522 = vunpack.c.h.b16 %v455
    %v523 = vunpack.c.l.b16 %v456
    %v524 = vunpack.c.l.b16 %v457
    %v525 = vunpack.c.h.b16 %v457
    %v526 = vunpack.c.l.b16 %v458
    %v527 = vunpack.c.l.b16 %v459
    %v528 = vunpack.c.h.b16 %v459
    %v529 = vunpack.c.l.b16 %v460
    %v530 = vunpack.c.l.b16 %v461
    %v531 = vunpack.c.h.b16 %v461
    %v532 = vunpack.c.l.b16 %v462
    %v533 = vunpack.c.l.b16 %v463
    %v534 = vunpack.c.h.b16 %v463
    %v535 = vunpack.c.l.b16 %v464
    %v536 = vunpack.c.l.b16 %v465
    %v537 = vunpack.c.h.b16 %v465
    %v538 = vunpack.c.l.b16 %v466
    %v539 = vunpack.c.l.b16 %v467
    %v540 = vunpack.c.h.b16 %v467
    %v541 = vunpack.c.l.b16 %v468
    %v542 = vunpack.c.l.b16 %v469
    %v543 = vunpack.c.h.b16 %v469
    %v544 = vunpack.c.l.b16 %v470
    %v545 = vunpack.c.l.b16 %v471
    %v546 = vunpack.c.h.b16 %v471
    %v547 = vunpack.c.l.b16 %v472
    %v548 = vunpack.c.l.b16 %v473
    %v549 = vunpack.c.h.b16 %v473
    %v550 = vunpack.c.l.b16 %v474
    %v551 = vunpack.c.l.b16 %v475
    %v552 = vunpack.c.h.b16 %v475
    %v553 = vunpack.c.l.b16 %v476
    %v554 = vunpack.c.l.b16 %v477
    %v555 = vunpack.c.h.b16 %v477
    %v556 = vunpack.c.l.b16 %v478
    %v557 = vunpack.c.l.b16 %v479
    %v558 = vunpack.c.h.b16 %v479
    %v559 = vunpack.c.l.b16 %v480
    %v560 = vunpack.c.l.b16 %v481
    %v561 = vunpack.c.h.b16 %v481
    %v562 = vunpack.c.l.b16 %v482
    %v563 = vpack.c.b16 %v518, %v515
    %v564 = vpack.c.b16 %v519, %v516
    %v565 = vpack.c.b16 %v520, %v517
    %v566 = vpack.c.b16 %v524, %v521
    %v567 = vpack.c.b16 %v525, %v522
    %v568 = vpack.c.b16 %v526, %v523
    %v569 = vpack.c.b16 %v530, %v527
    %v570 = vpack.c.b16 %v531, %v528
    %v571 = vpack.c.b16 %v532, %v529
    %v572 = vpack.c.b16 %v536, %v533
    %v573 = vpack.c.b16 %v537, %v534
    %v574 = vpack.c.b16 %v538, %v535
    %v575 = vpack.c.b16 %v542, %v539
    %v576 = vpack.c.b16 %v543, %v540
    %v577 = vpack.c.b16 %v544, %v541
    %v578 = vpack.c.b16 %v548, %v545
    %v579 = vpack.c.b16 %v549, %v546
    %v580 = vpack.c.b16 %v550, %v547
    %v581 = vpack.c.b16 %v554, %v551
    %v582 = vpack.c.b16 %v555, %v552
    %v583 = vpack.c.b16 %v556, %v553
    %v584 = vpack.c.b16 %v560, %v557
    %v585 = vpack.c.b16 %v561, %v558
    %v586 = vpack.c.b16 %v562, %v559
    %611 = vmatprep.subr.bf16.mxu0 %v585
    %612 = vmatpush1.bf16.msra.mxu0 %v584
    %613 = vmatprep.subr.bf16.mxu0 %v582
    %614 = vmatpush1.bf16.msra.mxu0 %v581
    %615 = vmatprep.subr.bf16.mxu0 %v579
    %616 = vmatpush1.bf16.msra.mxu0 %v578
    %617 = vmatprep.subr.bf16.mxu0 %v576
    %618 = vmatpush1.bf16.msra.mxu0 %v575
    %619 = vmatprep.subr.bf16.mxu0 %v573
    %620 = vmatpush1.bf16.msra.mxu0 %v572
    %621 = vmatprep.subr.bf16.mxu0 %v570
    %622 = vmatpush1.bf16.msra.mxu0 %v569
    %623 = vmatprep.subr.bf16.mxu0 %v567
    %624 = vmatpush1.bf16.msra.mxu0 %v566
    %625 = vmatprep.subr.bf16.mxu0 %v564
    %626 = vmatpush1.bf16.msra.mxu0 %v563
    %627 = vmatprep.subr.bf16.mxu0 0
    %628 = vmatpush2.bf16.msra.mxu0 0
    %629 = vmatprep.subr.bf16.mxu0 0
    %630 = vmatpush2.bf16.msra.mxu0 0
    %631 = vmatprep.subr.bf16.mxu0 0
    %632 = vmatpush2.bf16.msra.mxu0 0
    %633 = vmatprep.subr.bf16.mxu0 0
    %634 = vmatpush2.bf16.msra.mxu0 0
    %635 = vmatprep.subr.bf16.mxu0 0
    %636 = vmatpush2.bf16.msra.mxu0 0
    %637 = vmatprep.subr.bf16.mxu0 0
    %638 = vmatpush2.bf16.msra.mxu0 0
    %639 = vmatprep.subr.bf16.mxu0 0
    %640 = vmatpush2.bf16.msra.mxu0 0
    %641 = vmatprep.subr.bf16.mxu0 0
    %642 = vmatpush2.bf16.msra.mxu0 0
    %643 = vmatprep.mubr.bf16.mxu0 0
    %644 = vmatmul.mubr.bf16.gmra.mxu0 %v450
    %v645 = vpop.f32.mrf.mxu0
    %v646 = vadd.f32 0.0, %v645
    %v647 = vpop.f32.mrf.mxu0
    %v648 = vadd.f32 0.0, %v647
    %v649 = vpop.f32.mrf.mxu0
    %v650 = vpop.f32.mrf.mxu0
    %651 = vdwg.mxu0
    %652 = vmatprep.subr.bf16.mxu0 0
    %653 = vmatpush1.bf16.msra.mxu0 %v586
    %654 = vmatprep.subr.bf16.mxu0 0
    %655 = vmatpush1.bf16.msra.mxu0 %v583
    %656 = vmatprep.subr.bf16.mxu0 0
    %657 = vmatpush1.bf16.msra.mxu0 %v580
    %658 = vmatprep.subr.bf16.mxu0 0
    %659 = vmatpush1.bf16.msra.mxu0 %v577
    %660 = vmatprep.subr.bf16.mxu0 0
    %661 = vmatpush1.bf16.msra.mxu0 %v574
    %662 = vmatprep.subr.bf16.mxu0 0
    %663 = vmatpush1.bf16.msra.mxu0 %v571
    %664 = vmatprep.subr.bf16.mxu0 0
    %665 = vmatpush1.bf16.msra.mxu0 %v568
    %666 = vmatprep.subr.bf16.mxu0 0
    %667 = vmatpush1.bf16.msra.mxu0 %v565
    %668 = vmatprep.subr.bf16.mxu0 0
    %669 = vmatpush2.bf16.msra.mxu0 0
    %670 = vmatprep.subr.bf16.mxu0 0
    %671 = vmatpush2.bf16.msra.mxu0 0
    %672 = vmatprep.subr.bf16.mxu0 0
    %673 = vmatpush2.bf16.msra.mxu0 0
    %674 = vmatprep.subr.bf16.mxu0 0
    %675 = vmatpush2.bf16.msra.mxu0 0
    %676 = vmatprep.subr.bf16.mxu0 0
    %677 = vmatpush2.bf16.msra.mxu0 0
    %678 = vmatprep.subr.bf16.mxu0 0
    %679 = vmatpush2.bf16.msra.mxu0 0
    %680 = vmatprep.subr.bf16.mxu0 0
    %681 = vmatpush2.bf16.msra.mxu0 0
    %682 = vmatprep.subr.bf16.mxu0 0
    %683 = vmatpush2.bf16.msra.mxu0 0
    %684 = vmatprep.mubr.bf16.mxu0 0
    %685 = vmatmul.mubr.bf16.gmra.mxu0 %v450
    %v686 = vpop.f32.mrf.mxu0
    %v687 = vadd.f32 0.0, %v686
    %v688 = vpop.f32.mrf.mxu0
    %v689 = vpop.f32.mrf.mxu0
    %v690 = vpop.f32.mrf.mxu0
    %691 = vdwg.mxu0
    %v692 = vlaneseq
    %v693 = vshrl.u32 %v692, 7
    %v694 = vsub.s32 1, %v693
    %v695 = vrot.slane %v223, %v694
    %v696 = vadd.f32 %v646, %v695
    %v697 = vlaneseq
    %v698 = vshrl.u32 %v697, 7
    %v699 = vsub.s32 1, %v698
    %v700 = vrot.slane %v224, %v699
    %v701 = vadd.f32 %v648, %v700
    %v702 = vlaneseq
    %v703 = vshrl.u32 %v702, 7
    %v704 = vsub.s32 2, %v703
    %v705 = vrot.slane %v223, %v704
    %v706 = vadd.f32 %v687, %v705
    %v707 = vtanh.pop %v696
    %v708 = vtanh.pop %v706
    %v709 = vmul.f32 %v707, 0.5
    %v710 = vmul.f32 %v709, 1.442695
    %v711 = vpow.pop %v710
    %713 = vrot.lane.b32.xlu0 %v711, 64
    %v714 = vpop.permute.xlu0 %713
    %v716 = vmul.f32 %v222, %v714
    %v717 = vadd.f32 %v696, %v716
    %v718 = vmul.f32 %v708, 0.5
    %v719 = vmul.f32 %v718, 1.442695
    %v720 = vpow.pop %v719
    %v721 = vmul.f32 %v221, %v720
    %v722 = vadd.f32 %v701, %v721
    %723 = vst [vmem:[%s17] sm:$0xff] %v701
    %724 = vst [vmem:[%s17 + $0x8] sm:$0xff] %v706
    %725 = vst [vmem:[%s17 + $0x10] sm:$0xff] %v722
    %vm726 = vcmask 523264
    %727 = vst.msk [vmem:[%s18] sm:$0xff] %vm726, %v696
    %vm728 = vcmask 1048064
    %729 = vst.msk [vmem:[%s18] sm:$0xff] %vm728, %v696
    %730 = vst.msk [vmem:[%s18 + $0x8] sm:$0xff] %vm726, %v717
    %v731 = vpack.c.bf16 %v717, %v717
    %v732 = vpack.c.bf16 %v722, %v722
    %v733 = vld [vmem:[#allocation7] sm:$0xff]
    %v734 = vld [vmem:[#allocation7 + $0x8] sm:$0xff]
    %v735 = vld [vmem:[#allocation7 + $0x10] sm:$0xff]
    %v736 = vld [vmem:[#allocation7 + $0x18] sm:$0xff]
    %v737 = vld [vmem:[#allocation7 + $0x20] sm:$0xff]
    %v738 = vld [vmem:[#allocation7 + $0x28] sm:$0xff]
    %v739 = vld [vmem:[#allocation7 + $0x30] sm:$0xff]
    %v740 = vld [vmem:[#allocation7 + $0x38] sm:$0xff]
    %v741 = vld [vmem:[%s7] sm:$0xff]
    %v742 = vld [vmem:[%s7 + $0x8] sm:$0xff]
    %v743 = vld [vmem:[%s7 + $0x10] sm:$0xff]
    %v744 = vld [vmem:[%s7 + $0x18] sm:$0xff]
    %v745 = vld [vmem:[%s7 + $0x20] sm:$0xff]
    %v746 = vld [vmem:[%s7 + $0x28] sm:$0xff]
    %v747 = vld [vmem:[%s7 + $0x30] sm:$0xff]
    %v748 = vld [vmem:[%s7 + $0x38] sm:$0xff]
    %v749 = vld [vmem:[%s7 + $0x40] sm:$0xff]
    %v750 = vld [vmem:[%s7 + $0x48] sm:$0xff]
    %v751 = vld [vmem:[%s7 + $0x50] sm:$0xff]
    %v752 = vld [vmem:[%s7 + $0x58] sm:$0xff]
    %v753 = vld [vmem:[%s7 + $0x60] sm:$0xff]
    %v754 = vld [vmem:[%s7 + $0x68] sm:$0xff]
    %v755 = vld [vmem:[%s7 + $0x70] sm:$0xff]
    %v756 = vld [vmem:[%s7 + $0x78] sm:$0xff]
    %v773 = vunpack.c.l.b16 %v741
    %v774 = vunpack.c.h.b16 %v741
    %v775 = vunpack.c.l.b16 %v742
    %v776 = vunpack.c.h.b16 %v742
    %v777 = vunpack.c.l.b16 %v743
    %v778 = vunpack.c.h.b16 %v743
    %v779 = vunpack.c.l.b16 %v744
    %v780 = vunpack.c.h.b16 %v744
    %v781 = vunpack.c.l.b16 %v745
    %v782 = vunpack.c.h.b16 %v745
    %v783 = vunpack.c.l.b16 %v746
    %v784 = vunpack.c.h.b16 %v746
    %v785 = vunpack.c.l.b16 %v747
    %v786 = vunpack.c.h.b16 %v747
    %v787 = vunpack.c.l.b16 %v748
    %v788 = vunpack.c.h.b16 %v748
    %v789 = vunpack.c.l.b16 %v749
    %v790 = vunpack.c.h.b16 %v749
    %v791 = vunpack.c.l.b16 %v750
    %v792 = vunpack.c.h.b16 %v750
    %v793 = vunpack.c.l.b16 %v751
    %v794 = vunpack.c.h.b16 %v751
    %v795 = vunpack.c.l.b16 %v752
    %v796 = vunpack.c.h.b16 %v752
    %v797 = vunpack.c.l.b16 %v753
    %v798 = vunpack.c.h.b16 %v753
    %v799 = vunpack.c.l.b16 %v754
    %v800 = vunpack.c.h.b16 %v754
    %v801 = vunpack.c.l.b16 %v755
    %v802 = vunpack.c.h.b16 %v755
    %v803 = vunpack.c.l.b16 %v756
    %v804 = vunpack.c.h.b16 %v756
    %v805 = vpack.c.b16 %v775, %v773
    %v806 = vpack.c.b16 %v776, %v774
    %v807 = vpack.c.b16 %v779, %v777
    %v808 = vpack.c.b16 %v780, %v778
    %v809 = vpack.c.b16 %v783, %v781
    %v810 = vpack.c.b16 %v784, %v782
    %v811 = vpack.c.b16 %v787, %v785
    %v812 = vpack.c.b16 %v788, %v786
    %v813 = vpack.c.b16 %v791, %v789
    %v814 = vpack.c.b16 %v792, %v790
    %v815 = vpack.c.b16 %v795, %v793
    %v816 = vpack.c.b16 %v796, %v794
    %v817 = vpack.c.b16 %v799, %v797
    %v818 = vpack.c.b16 %v800, %v798
    %v819 = vpack.c.b16 %v803, %v801
    %v820 = vpack.c.b16 %v804, %v802
    %837 = vmatprep.subr.bf16.mxu0 %v820
    %838 = vmatpush1.bf16.msra.mxu0 %v819
    %839 = vmatprep.subr.bf16.mxu0 %v818
    %840 = vmatpush1.bf16.msra.mxu0 %v817
    %841 = vmatprep.subr.bf16.mxu0 %v816
    %842 = vmatpush1.bf16.msra.mxu0 %v815
    %843 = vmatprep.subr.bf16.mxu0 %v814
    %844 = vmatpush1.bf16.msra.mxu0 %v813
    %845 = vmatprep.subr.bf16.mxu0 %v812
    %846 = vmatpush1.bf16.msra.mxu0 %v811
    %847 = vmatprep.subr.bf16.mxu0 %v810
    %848 = vmatpush1.bf16.msra.mxu0 %v809
    %849 = vmatprep.subr.bf16.mxu0 %v808
    %850 = vmatpush1.bf16.msra.mxu0 %v807
    %851 = vmatprep.subr.bf16.mxu0 %v806
    %852 = vmatpush1.bf16.msra.mxu0 %v805
    %853 = vmatprep.subr.bf16.mxu0 0
    %854 = vmatpush2.bf16.msra.mxu0 0
    %855 = vmatprep.subr.bf16.mxu0 0
    %856 = vmatpush2.bf16.msra.mxu0 0
    %857 = vmatprep.subr.bf16.mxu0 0
    %858 = vmatpush2.bf16.msra.mxu0 0
    %859 = vmatprep.subr.bf16.mxu0 0
    %860 = vmatpush2.bf16.msra.mxu0 0
    %861 = vmatprep.subr.bf16.mxu0 0
    %862 = vmatpush2.bf16.msra.mxu0 0
    %863 = vmatprep.subr.bf16.mxu0 0
    %864 = vmatpush2.bf16.msra.mxu0 0
    %865 = vmatprep.subr.bf16.mxu0 0
    %866 = vmatpush2.bf16.msra.mxu0 0
    %867 = vmatprep.subr.bf16.mxu0 0
    %868 = vmatpush2.bf16.msra.mxu0 0
    %869 = vmatprep.mubr.bf16.mxu0 0
    %870 = vmatmul.mubr.bf16.gmra.mxu0 %v732
    %v871 = vpop.f32.mrf.mxu0
    %v872 = vadd.f32 0.0, %v871
    %v873 = vpop.f32.mrf.mxu0
    %v874 = vadd.f32 0.0, %v873
    %v875 = vpop.f32.mrf.mxu0
    %v876 = vpop.f32.mrf.mxu0
    %877 = vdwg.mxu0
    %v886 = vunpack.c.l.b16 %v733
    %v887 = vunpack.c.h.b16 %v733
    %v888 = vunpack.c.l.b16 %v734
    %v889 = vunpack.c.h.b16 %v734
    %v890 = vunpack.c.l.b16 %v735
    %v891 = vunpack.c.h.b16 %v735
    %v892 = vunpack.c.l.b16 %v736
    %v893 = vunpack.c.h.b16 %v736
    %v894 = vunpack.c.l.b16 %v737
    %v895 = vunpack.c.h.b16 %v737
    %v896 = vunpack.c.l.b16 %v738
    %v897 = vunpack.c.h.b16 %v738
    %v898 = vunpack.c.l.b16 %v739
    %v899 = vunpack.c.h.b16 %v739
    %v900 = vunpack.c.l.b16 %v740
    %v901 = vunpack.c.h.b16 %v740
    %v902 = vpack.c.b16 %v888, %v886
    %v903 = vpack.c.b16 %v889, %v887
    %v904 = vpack.c.b16 %v892, %v890
    %v905 = vpack.c.b16 %v893, %v891
    %v906 = vpack.c.b16 %v896, %v894
    %v907 = vpack.c.b16 %v897, %v895
    %v908 = vpack.c.b16 %v900, %v898
    %v909 = vpack.c.b16 %v901, %v899
    %v919 = vsel %vm726, %v731, 0
    %921 = vmatprep.subr.bf16.mxu0 0
    %922 = vmatpush1.bf16.msra.mxu0 0
    %923 = vmatprep.subr.bf16.mxu0 0
    %924 = vmatpush1.bf16.msra.mxu0 0
    %925 = vmatprep.subr.bf16.mxu0 0
    %926 = vmatpush1.bf16.msra.mxu0 0
    %927 = vmatprep.subr.bf16.mxu0 0
    %928 = vmatpush1.bf16.msra.mxu0 0
    %929 = vmatprep.subr.bf16.mxu0 %v909
    %930 = vmatpush1.bf16.msra.mxu0 %v908
    %931 = vmatprep.subr.bf16.mxu0 %v907
    %932 = vmatpush1.bf16.msra.mxu0 %v906
    %933 = vmatprep.subr.bf16.mxu0 %v905
    %934 = vmatpush1.bf16.msra.mxu0 %v904
    %935 = vmatprep.subr.bf16.mxu0 %v903
    %936 = vmatpush1.bf16.msra.mxu0 %v902
    %937 = vmatprep.subr.bf16.mxu0 0
    %938 = vmatpush2.bf16.msra.mxu0 0
    %939 = vmatprep.subr.bf16.mxu0 0
    %940 = vmatpush2.bf16.msra.mxu0 0
    %941 = vmatprep.subr.bf16.mxu0 0
    %942 = vmatpush2.bf16.msra.mxu0 0
    %943 = vmatprep.subr.bf16.mxu0 0
    %944 = vmatpush2.bf16.msra.mxu0 0
    %945 = vmatprep.subr.bf16.mxu0 0
    %946 = vmatpush2.bf16.msra.mxu0 0
    %947 = vmatprep.subr.bf16.mxu0 0
    %948 = vmatpush2.bf16.msra.mxu0 0
    %949 = vmatprep.subr.bf16.mxu0 0
    %950 = vmatpush2.bf16.msra.mxu0 0
    %951 = vmatprep.subr.bf16.mxu0 0
    %952 = vmatpush2.bf16.msra.mxu0 0
    %953 = vmatprep.mubr.bf16.mxu0 0
    %954 = vmatmul.mubr.bf16.gmra.mxu0 %v919
    %v955 = vpop.f32.mrf.mxu0
    %v956 = vadd.f32 %v872, %v955
    %v957 = vpop.f32.mrf.mxu0
    %v958 = vadd.f32 %v874, %v957
    %v959 = vpop.f32.mrf.mxu0
    %v960 = vpop.f32.mrf.mxu0
    %961 = vdwg.mxu0
    %v962 = vlaneseq
    %v963 = vshrl.u32 %v962, 7
    %v964 = vsub.s32 3, %v963
    %v965 = vrot.slane %v223, %v964
    %v966 = vlaneseq
    %v967 = vshrl.u32 %v966, 7
    %v968 = vsub.s32 3, %v967
    %v969 = vrot.slane %v224, %v968
    %v970 = vadd.f32 %v956, %v965
    %v971 = vadd.f32 %v958, %v969
    %vm972 = vcmp.gt.f32.partialorder %v970, 0.0
    %vm973 = vcmp.gt.f32.partialorder %v971, 0.0
    %v974 = vmul.f32 %v970, 0.01
    %v975 = vmul.f32 %v971, 0.01
    %v976 = vsel %vm972, %v970, %v974
    %v977 = vsel %vm973, %v971, %v975
    %v978 = vpack.c.bf16 %v976, %v976
    %v979 = vpack.c.bf16 %v977, %v977
    %v980 = vld [vmem:[#allocation9] sm:$0xf]
    %v981 = vld [vmem:[#allocation9 + $0x4] sm:$0xf]
    %v982 = vld [vmem:[#allocation9 + $0x8] sm:$0xf]
    %v983 = vld [vmem:[#allocation9 + $0xc] sm:$0xf]
    %v984 = vld [vmem:[#allocation9 + $0x10] sm:$0xf]
    %v985 = vld [vmem:[#allocation9 + $0x14] sm:$0xf]
    %v986 = vld [vmem:[#allocation9 + $0x18] sm:$0xf]
    %v987 = vld [vmem:[#allocation9 + $0x1c] sm:$0xf]
    %v988 = vld [vmem:[#allocation9 + $0x20] sm:$0xf]
    %v989 = vld [vmem:[#allocation9 + $0x24] sm:$0xf]
    %v990 = vld [vmem:[#allocation9 + $0x28] sm:$0xf]
    %v991 = vld [vmem:[#allocation9 + $0x2c] sm:$0xf]
    %v992 = vld [vmem:[#allocation9 + $0x30] sm:$0xf]
    %v993 = vld [vmem:[#allocation9 + $0x34] sm:$0xf]
    %v994 = vld [vmem:[#allocation9 + $0x38] sm:$0xf]
    %v995 = vld [vmem:[#allocation9 + $0x3c] sm:$0xf]
    %v996 = vlaneseq
    %v997 = vshrl.u32 %v996, 7
    %v998 = vsub.s32 4, %v997
    %v999 = vrot.slane %v223, %v998
    %v1016 = vunpack.c.l.b16 %v980
    %v1017 = vunpack.c.l.b16 %v981
    %v1018 = vunpack.c.l.b16 %v982
    %v1019 = vunpack.c.l.b16 %v983
    %v1020 = vunpack.c.l.b16 %v984
    %v1021 = vunpack.c.l.b16 %v985
    %v1022 = vunpack.c.l.b16 %v986
    %v1023 = vunpack.c.l.b16 %v987
    %v1024 = vunpack.c.l.b16 %v988
    %v1025 = vunpack.c.l.b16 %v989
    %v1026 = vunpack.c.l.b16 %v990
    %v1027 = vunpack.c.l.b16 %v991
    %v1028 = vunpack.c.l.b16 %v992
    %v1029 = vunpack.c.l.b16 %v993
    %v1030 = vunpack.c.l.b16 %v994
    %v1031 = vunpack.c.l.b16 %v995
    %v1032 = vpack.c.b16 %v1017, %v1016
    %v1033 = vpack.c.b16 %v1019, %v1018
    %v1034 = vpack.c.b16 %v1021, %v1020
    %v1035 = vpack.c.b16 %v1023, %v1022
    %v1036 = vpack.c.b16 %v1025, %v1024
    %v1037 = vpack.c.b16 %v1027, %v1026
    %v1038 = vpack.c.b16 %v1029, %v1028
    %v1039 = vpack.c.b16 %v1031, %v1030
    %1048 = vmatprep.subr.bf16.mxu0 0
    %1049 = vmatpush1.bf16.msra.mxu0 %v1039
    %1050 = vmatprep.subr.bf16.mxu0 0
    %1051 = vmatpush1.bf16.msra.mxu0 %v1038
    %1052 = vmatprep.subr.bf16.mxu0 0
    %1053 = vmatpush1.bf16.msra.mxu0 %v1037
    %1054 = vmatprep.subr.bf16.mxu0 0
    %1055 = vmatpush1.bf16.msra.mxu0 %v1036
    %1056 = vmatprep.subr.bf16.mxu0 0
    %1057 = vmatpush1.bf16.msra.mxu0 %v1035
    %1058 = vmatprep.subr.bf16.mxu0 0
    %1059 = vmatpush1.bf16.msra.mxu0 %v1034
    %1060 = vmatprep.subr.bf16.mxu0 0
    %1061 = vmatpush1.bf16.msra.mxu0 %v1033
    %1062 = vmatprep.subr.bf16.mxu0 0
    %1063 = vmatpush1.bf16.msra.mxu0 %v1032
    %1064 = vmatprep.subr.bf16.mxu0 0
    %1065 = vmatpush2.bf16.msra.mxu0 0
    %1066 = vmatprep.subr.bf16.mxu0 0
    %1067 = vmatpush2.bf16.msra.mxu0 0
    %1068 = vmatprep.subr.bf16.mxu0 0
    %1069 = vmatpush2.bf16.msra.mxu0 0
    %1070 = vmatprep.subr.bf16.mxu0 0
    %1071 = vmatpush2.bf16.msra.mxu0 0
    %1072 = vmatprep.subr.bf16.mxu0 0
    %1073 = vmatpush2.bf16.msra.mxu0 0
    %1074 = vmatprep.subr.bf16.mxu0 0
    %1075 = vmatpush2.bf16.msra.mxu0 0
    %1076 = vmatprep.subr.bf16.mxu0 0
    %1077 = vmatpush2.bf16.msra.mxu0 0
    %1078 = vmatprep.subr.bf16.mxu0 0
    %1079 = vmatpush2.bf16.msra.mxu0 0
    %1080 = vmatprep.mubr.bf16.mxu0 0
    %1081 = vmatmul.mubr.bf16.gmra.mxu0 %v978
    %v1082 = vpop.f32.mrf.mxu0
    %v1083 = vadd.f32 %v999, %v1082
    %v1084 = vpop.f32.mrf.mxu0
    %v1085 = vpop.f32.mrf.mxu0
    %v1086 = vpop.f32.mrf.mxu0
    %1087 = vdwg.mxu0
    %vm1088 = vcmp.gt.f32.partialorder %v1083, 0.0
    %v1089 = vmul.f32 %v1083, 0.01
    %v1090 = vsel %vm1088, %v1083, %v1089
    %v1091 = vld [vmem:[#allocation10] sm:$0xf]
    %v1092 = vld [vmem:[#allocation10 + $0x4] sm:$0xf]
    %v1093 = vld [vmem:[#allocation10 + $0x8] sm:$0xf]
    %v1094 = vld [vmem:[#allocation10 + $0xc] sm:$0xf]
    %v1095 = vld [vmem:[#allocation10 + $0x10] sm:$0xf]
    %v1096 = vld [vmem:[#allocation10 + $0x14] sm:$0xf]
    %v1097 = vld [vmem:[#allocation10 + $0x18] sm:$0xf]
    %v1098 = vld [vmem:[#allocation10 + $0x1c] sm:$0xf]
    %v1099 = vld [vmem:[#allocation10 + $0x20] sm:$0xf]
    %v1100 = vld [vmem:[#allocation10 + $0x24] sm:$0xf]
    %v1101 = vld [vmem:[#allocation10 + $0x28] sm:$0xf]
    %v1102 = vld [vmem:[#allocation10 + $0x2c] sm:$0xf]
    %v1103 = vld [vmem:[#allocation10 + $0x30] sm:$0xf]
    %v1104 = vld [vmem:[#allocation10 + $0x34] sm:$0xf]
    %v1105 = vld [vmem:[#allocation10 + $0x38] sm:$0xf]
    %v1106 = vld [vmem:[#allocation10 + $0x3c] sm:$0xf]
    %v1107 = vlaneseq
    %v1108 = vshrl.u32 %v1107, 7
    %v1109 = vsub.s32 4, %v1108
    %v1110 = vrot.slane %v224, %v1109
    %v1127 = vunpack.c.l.b16 %v1091
    %v1128 = vunpack.c.l.b16 %v1092
    %v1129 = vunpack.c.l.b16 %v1093
    %v1130 = vunpack.c.l.b16 %v1094
    %v1131 = vunpack.c.l.b16 %v1095
    %v1132 = vunpack.c.l.b16 %v1096
    %v1133 = vunpack.c.l.b16 %v1097
    %v1134 = vunpack.c.l.b16 %v1098
    %v1135 = vunpack.c.l.b16 %v1099
    %v1136 = vunpack.c.l.b16 %v1100
    %v1137 = vunpack.c.l.b16 %v1101
    %v1138 = vunpack.c.l.b16 %v1102
    %v1139 = vunpack.c.l.b16 %v1103
    %v1140 = vunpack.c.l.b16 %v1104
    %v1141 = vunpack.c.l.b16 %v1105
    %v1142 = vunpack.c.l.b16 %v1106
    %v1143 = vpack.c.b16 %v1128, %v1127
    %v1144 = vpack.c.b16 %v1130, %v1129
    %v1145 = vpack.c.b16 %v1132, %v1131
    %v1146 = vpack.c.b16 %v1134, %v1133
    %v1147 = vpack.c.b16 %v1136, %v1135
    %v1148 = vpack.c.b16 %v1138, %v1137
    %v1149 = vpack.c.b16 %v1140, %v1139
    %v1150 = vpack.c.b16 %v1142, %v1141
    %1159 = vmatprep.subr.bf16.mxu0 0
    %1160 = vmatpush1.bf16.msra.mxu0 %v1150
    %1161 = vmatprep.subr.bf16.mxu0 0
    %1162 = vmatpush1.bf16.msra.mxu0 %v1149
    %1163 = vmatprep.subr.bf16.mxu0 0
    %1164 = vmatpush1.bf16.msra.mxu0 %v1148
    %1165 = vmatprep.subr.bf16.mxu0 0
    %1166 = vmatpush1.bf16.msra.mxu0 %v1147
    %1167 = vmatprep.subr.bf16.mxu0 0
    %1168 = vmatpush1.bf16.msra.mxu0 %v1146
    %1169 = vmatprep.subr.bf16.mxu0 0
    %1170 = vmatpush1.bf16.msra.mxu0 %v1145
    %1171 = vmatprep.subr.bf16.mxu0 0
    %1172 = vmatpush1.bf16.msra.mxu0 %v1144
    %1173 = vmatprep.subr.bf16.mxu0 0
    %1174 = vmatpush1.bf16.msra.mxu0 %v1143
    %1175 = vmatprep.subr.bf16.mxu0 0
    %1176 = vmatpush2.bf16.msra.mxu0 0
    %1177 = vmatprep.subr.bf16.mxu0 0
    %1178 = vmatpush2.bf16.msra.mxu0 0
    %1179 = vmatprep.subr.bf16.mxu0 0
    %1180 = vmatpush2.bf16.msra.mxu0 0
    %1181 = vmatprep.subr.bf16.mxu0 0
    %1182 = vmatpush2.bf16.msra.mxu0 0
    %1183 = vmatprep.subr.bf16.mxu0 0
    %1184 = vmatpush2.bf16.msra.mxu0 0
    %1185 = vmatprep.subr.bf16.mxu0 0
    %1186 = vmatpush2.bf16.msra.mxu0 0
    %1187 = vmatprep.subr.bf16.mxu0 0
    %1188 = vmatpush2.bf16.msra.mxu0 0
    %1189 = vmatprep.subr.bf16.mxu0 0
    %1190 = vmatpush2.bf16.msra.mxu0 0
    %1191 = vmatprep.mubr.bf16.mxu0 0
    %1192 = vmatmul.mubr.bf16.gmra.mxu0 %v979
    %v1193 = vpop.f32.mrf.mxu0
    %v1194 = vadd.f32 %v1110, %v1193
    %v1195 = vpop.f32.mrf.mxu0
    %v1196 = vpop.f32.mrf.mxu0
    %v1197 = vpop.f32.mrf.mxu0
    %1198 = vdwg.mxu0
    %vm1199 = vcmp.gt.f32.partialorder %v1194, 0.0
    %v1200 = vmul.f32 %v1194, 0.01
    %v1201 = vsel %vm1199, %v1194, %v1200
    %v1202 = vpack.c.bf16 %v1090, %v1090
    %v1203 = vpack.c.bf16 %v1201, %v1201
    %v1204 = vld [vmem:[%s10] sm:$0xf]
    %v1205 = vld [vmem:[%s10 + $0x4] sm:$0xf]
    %v1206 = vld [vmem:[%s10 + $0x8] sm:$0xf]
    %v1207 = vld [vmem:[%s10 + $0xc] sm:$0xf]
    %v1208 = vld [vmem:[%s10 + $0x10] sm:$0xf]
    %v1209 = vld [vmem:[%s10 + $0x14] sm:$0xf]
    %v1210 = vld [vmem:[%s10 + $0x18] sm:$0xf]
    %v1211 = vld [vmem:[%s10 + $0x1c] sm:$0xf]
    %v1212 = vld [vmem:[%s10 + $0x20] sm:$0xf]
    %v1213 = vld [vmem:[%s10 + $0x24] sm:$0xf]
    %v1214 = vld [vmem:[%s10 + $0x28] sm:$0xf]
    %v1215 = vld [vmem:[%s10 + $0x2c] sm:$0xf]
    %v1216 = vld [vmem:[%s10 + $0x30] sm:$0xf]
    %v1217 = vld [vmem:[%s10 + $0x34] sm:$0xf]
    %v1218 = vld [vmem:[%s10 + $0x38] sm:$0xf]
    %v1219 = vld [vmem:[%s10 + $0x3c] sm:$0xf]
    %v1220 = vld [vmem:[%s10 + $0x40] sm:$0xf]
    %v1221 = vld [vmem:[%s10 + $0x44] sm:$0xf]
    %v1222 = vld [vmem:[%s10 + $0x48] sm:$0xf]
    %v1223 = vld [vmem:[%s10 + $0x4c] sm:$0xf]
    %v1224 = vld [vmem:[%s10 + $0x50] sm:$0xf]
    %v1225 = vld [vmem:[%s10 + $0x54] sm:$0xf]
    %v1226 = vld [vmem:[%s10 + $0x58] sm:$0xf]
    %v1227 = vld [vmem:[%s10 + $0x5c] sm:$0xf]
    %v1228 = vld [vmem:[%s10 + $0x60] sm:$0xf]
    %v1229 = vld [vmem:[%s10 + $0x64] sm:$0xf]
    %v1230 = vld [vmem:[%s10 + $0x68] sm:$0xf]
    %v1231 = vld [vmem:[%s10 + $0x6c] sm:$0xf]
    %v1232 = vld [vmem:[%s10 + $0x70] sm:$0xf]
    %v1233 = vld [vmem:[%s10 + $0x74] sm:$0xf]
    %v1234 = vld [vmem:[%s10 + $0x78] sm:$0xf]
    %v1235 = vld [vmem:[%s10 + $0x7c] sm:$0xf]
    %v1236 = vlaneseq
    %v1237 = vshrl.u32 %v1236, 7
    %v1238 = vsub.s32 5, %v1237
    %v1239 = vrot.slane %v223, %v1238
    %v1272 = vunpack.c.l.b16 %v1204
    %v1273 = vunpack.c.l.b16 %v1205
    %v1274 = vunpack.c.l.b16 %v1206
    %v1275 = vunpack.c.l.b16 %v1207
    %v1276 = vunpack.c.l.b16 %v1208
    %v1277 = vunpack.c.l.b16 %v1209
    %v1278 = vunpack.c.l.b16 %v1210
    %v1279 = vunpack.c.l.b16 %v1211
    %v1280 = vunpack.c.l.b16 %v1212
    %v1281 = vunpack.c.l.b16 %v1213
    %v1282 = vunpack.c.l.b16 %v1214
    %v1283 = vunpack.c.l.b16 %v1215
    %v1284 = vunpack.c.l.b16 %v1216
    %v1285 = vunpack.c.l.b16 %v1217
    %v1286 = vunpack.c.l.b16 %v1218
    %v1287 = vunpack.c.l.b16 %v1219
    %v1288 = vunpack.c.l.b16 %v1220
    %v1289 = vunpack.c.l.b16 %v1221
    %v1290 = vunpack.c.l.b16 %v1222
    %v1291 = vunpack.c.l.b16 %v1223
    %v1292 = vunpack.c.l.b16 %v1224
    %v1293 = vunpack.c.l.b16 %v1225
    %v1294 = vunpack.c.l.b16 %v1226
    %v1295 = vunpack.c.l.b16 %v1227
    %v1296 = vunpack.c.l.b16 %v1228
    %v1297 = vunpack.c.l.b16 %v1229
    %v1298 = vunpack.c.l.b16 %v1230
    %v1299 = vunpack.c.l.b16 %v1231
    %v1300 = vunpack.c.l.b16 %v1232
    %v1301 = vunpack.c.l.b16 %v1233
    %v1302 = vunpack.c.l.b16 %v1234
    %v1303 = vunpack.c.l.b16 %v1235
    %v1304 = vpack.c.b16 %v1273, %v1272
    %v1305 = vpack.c.b16 %v1275, %v1274
    %v1306 = vpack.c.b16 %v1277, %v1276
    %v1307 = vpack.c.b16 %v1279, %v1278
    %v1308 = vpack.c.b16 %v1281, %v1280
    %v1309 = vpack.c.b16 %v1283, %v1282
    %v1310 = vpack.c.b16 %v1285, %v1284
    %v1311 = vpack.c.b16 %v1287, %v1286
    %v1312 = vpack.c.b16 %v1289, %v1288
    %v1313 = vpack.c.b16 %v1291, %v1290
    %v1314 = vpack.c.b16 %v1293, %v1292
    %v1315 = vpack.c.b16 %v1295, %v1294
    %v1316 = vpack.c.b16 %v1297, %v1296
    %v1317 = vpack.c.b16 %v1299, %v1298
    %v1318 = vpack.c.b16 %v1301, %v1300
    %v1319 = vpack.c.b16 %v1303, %v1302
    %1336 = vmatprep.subr.bf16.mxu0 0
    %1337 = vmatpush1.bf16.msra.mxu0 %v1311
    %1338 = vmatprep.subr.bf16.mxu0 0
    %1339 = vmatpush1.bf16.msra.mxu0 %v1310
    %1340 = vmatprep.subr.bf16.mxu0 0
    %1341 = vmatpush1.bf16.msra.mxu0 %v1309
    %1342 = vmatprep.subr.bf16.mxu0 0
    %1343 = vmatpush1.bf16.msra.mxu0 %v1308
    %1344 = vmatprep.subr.bf16.mxu0 0
    %1345 = vmatpush1.bf16.msra.mxu0 %v1307
    %1346 = vmatprep.subr.bf16.mxu0 0
    %1347 = vmatpush1.bf16.msra.mxu0 %v1306
    %1348 = vmatprep.subr.bf16.mxu0 0
    %1349 = vmatpush1.bf16.msra.mxu0 %v1305
    %1350 = vmatprep.subr.bf16.mxu0 0
    %1351 = vmatpush1.bf16.msra.mxu0 %v1304
    %1352 = vmatprep.subr.bf16.mxu0 0
    %1353 = vmatpush2.bf16.msra.mxu0 %v1319
    %1354 = vmatprep.subr.bf16.mxu0 0
    %1355 = vmatpush2.bf16.msra.mxu0 %v1318
    %1356 = vmatprep.subr.bf16.mxu0 0
    %1357 = vmatpush2.bf16.msra.mxu0 %v1317
    %1358 = vmatprep.subr.bf16.mxu0 0
    %1359 = vmatpush2.bf16.msra.mxu0 %v1316
    %1360 = vmatprep.subr.bf16.mxu0 0
    %1361 = vmatpush2.bf16.msra.mxu0 %v1315
    %1362 = vmatprep.subr.bf16.mxu0 0
    %1363 = vmatpush2.bf16.msra.mxu0 %v1314
    %1364 = vmatprep.subr.bf16.mxu0 0
    %1365 = vmatpush2.bf16.msra.mxu0 %v1313
    %1366 = vmatprep.subr.bf16.mxu0 0
    %1367 = vmatpush2.bf16.msra.mxu0 %v1312
    %1368 = vmatprep.mubr.bf16.mxu0 %v1203
    %1369 = vmatmul.mubr.bf16.gmra.mxu0 %v1202
    %v1370 = vpop.f32.mrf.mxu0
    %v1371 = vadd.f32 %v1239, %v1370
    %v1372 = vpop.f32.mrf.mxu0
    %v1373 = vpop.f32.mrf.mxu0
    %v1374 = vpop.f32.mrf.mxu0
    %1375 = vdwg.mxu0
    %vm1376 = vcmask 64512
    %v1377 = vsel %vm1376, %v1371, -inf
    %1378 = vmax.xlane.f32.xlu0 %v1377
    %v1379 = vpop.xlane.xlu0 %1378
    %v1380 = vsub.f32 %v1371, %v1379
    %v1381 = vmul.f32 %v1380, 1.442695
    %v1382 = vpow.pop %v1381
    %v1383 = vsel %vm1376, %v1382, 0.0
    %1384 = vadd.xlane.f32.xlu0 %v1383
    %v1385 = vpop.xlane.xlu0 %1384
    %v1386 = vrcp.pop %v1385
    %v1387 = vmul.f32 %v1382, %v1386
    %v1388 = vmul.f32 %v1387, 0.999999
    %v1389 = vadd.f32 %v1388, 1.25e-07
    %v1390 = vlog2.pop %v1389
    %v1391 = vmul.f32 %v1390, 0.6931472
    %1393 = vrot.lane.b32.xlu0 %v222, 64
    %v1394 = vpop.permute.xlu0 %1393
    %v1396 = vadd.f32 %v1391, %v1394
    %v1397 = vrcp.pop 0.1
    %v1398 = vmul.f32 %v1396, %v1397
    %v1399 = vsel %vm1376, %v1398, -inf
    %1400 = vmax.xlane.f32.xlu0 %v1399
    %v1401 = vpop.xlane.xlu0 %1400
    %v1402 = vsub.f32 %v1398, %v1401
    %v1403 = vmul.f32 %v1402, 1.442695
    %v1404 = vpow.pop %v1403
    %v1405 = vsel %vm1376, %v1404, 0.0
    %1406 = vadd.xlane.f32.xlu0 %v1405
    %v1407 = vpop.xlane.xlu0 %1406
    %v1408 = vrcp.pop %v1407
    %v1409 = vmul.f32 %v1404, %v1408
    %1411 = vrot.lane.b32.xlu0 %v1389, 64
    %v1412 = vpop.permute.xlu0 %1411
    %vm1414 = vcmask 589312
    %1415 = vst.msk [vmem:[%s18 + $0x8] sm:$0xff] %vm1414, %v1412
    %1417 = vrot.lane.b32.xlu0 %v1409, 72
    %v1418 = vpop.permute.xlu0 %1417
    %vm1420 = vcmask 654912
    %1421 = vst.msk [vmem:[%s18 + $0x8] sm:$0xff] %vm1420, %v1418
    %1423 = vrot.lane.b32.xlu0 %v1371, 72
    %v1424 = vpop.permute.xlu0 %1423
    %vm1426 = vcmask 720512
    %1427 = vst.msk [vmem:[%s18 + $0x8] sm:$0xff] %vm1426, %v1424
    %v1428 = vld [vmem:[#allocation12] sm:$0xf]
    %v1429 = vld [vmem:[#allocation12 + $0x4] sm:$0xf]
    %v1430 = vld [vmem:[#allocation12 + $0x8] sm:$0xf]
    %v1431 = vld [vmem:[#allocation12 + $0xc] sm:$0xf]
    %v1432 = vld [vmem:[#allocation12 + $0x10] sm:$0xf]
    %v1433 = vld [vmem:[#allocation12 + $0x14] sm:$0xf]
    %v1434 = vld [vmem:[#allocation12 + $0x18] sm:$0xf]
    %v1435 = vld [vmem:[#allocation12 + $0x1c] sm:$0xf]
    %v1436 = vld [vmem:[#allocation12 + $0x20] sm:$0xf]
    %v1437 = vld [vmem:[#allocation12 + $0x24] sm:$0xf]
    %v1438 = vld [vmem:[#allocation12 + $0x28] sm:$0xf]
    %v1439 = vld [vmem:[#allocation12 + $0x2c] sm:$0xf]
    %v1440 = vld [vmem:[#allocation12 + $0x30] sm:$0xf]
    %v1441 = vld [vmem:[#allocation12 + $0x34] sm:$0xf]
    %v1442 = vld [vmem:[#allocation12 + $0x38] sm:$0xf]
    %v1443 = vld [vmem:[#allocation12 + $0x3c] sm:$0xf]
    %v1444 = vlaneseq
    %v1445 = vshrl.u32 %v1444, 7
    %v1446 = vsub.s32 6, %v1445
    %v1447 = vrot.slane %v223, %v1446
    %v1464 = vunpack.c.l.b16 %v1428
    %v1465 = vunpack.c.l.b16 %v1429
    %v1466 = vunpack.c.l.b16 %v1430
    %v1467 = vunpack.c.l.b16 %v1431
    %v1468 = vunpack.c.l.b16 %v1432
    %v1469 = vunpack.c.l.b16 %v1433
    %v1470 = vunpack.c.l.b16 %v1434
    %v1471 = vunpack.c.l.b16 %v1435
    %v1472 = vunpack.c.l.b16 %v1436
    %v1473 = vunpack.c.l.b16 %v1437
    %v1474 = vunpack.c.l.b16 %v1438
    %v1475 = vunpack.c.l.b16 %v1439
    %v1476 = vunpack.c.l.b16 %v1440
    %v1477 = vunpack.c.l.b16 %v1441
    %v1478 = vunpack.c.l.b16 %v1442
    %v1479 = vunpack.c.l.b16 %v1443
    %v1480 = vpack.c.b16 %v1465, %v1464
    %v1481 = vpack.c.b16 %v1467, %v1466
    %v1482 = vpack.c.b16 %v1469, %v1468
    %v1483 = vpack.c.b16 %v1471, %v1470
    %v1484 = vpack.c.b16 %v1473, %v1472
    %v1485 = vpack.c.b16 %v1475, %v1474
    %v1486 = vpack.c.b16 %v1477, %v1476
    %v1487 = vpack.c.b16 %v1479, %v1478
    %1496 = vmatprep.subr.bf16.mxu0 0
    %1497 = vmatpush1.bf16.msra.mxu0 %v1487
    %1498 = vmatprep.subr.bf16.mxu0 0
    %1499 = vmatpush1.bf16.msra.mxu0 %v1486
    %1500 = vmatprep.subr.bf16.mxu0 0
    %1501 = vmatpush1.bf16.msra.mxu0 %v1485
    %1502 = vmatprep.subr.bf16.mxu0 0
    %1503 = vmatpush1.bf16.msra.mxu0 %v1484
    %1504 = vmatprep.subr.bf16.mxu0 0
    %1505 = vmatpush1.bf16.msra.mxu0 %v1483
    %1506 = vmatprep.subr.bf16.mxu0 0
    %1507 = vmatpush1.bf16.msra.mxu0 %v1482
    %1508 = vmatprep.subr.bf16.mxu0 0
    %1509 = vmatpush1.bf16.msra.mxu0 %v1481
    %1510 = vmatprep.subr.bf16.mxu0 0
    %1511 = vmatpush1.bf16.msra.mxu0 %v1480
    %1512 = vmatprep.subr.bf16.mxu0 0
    %1513 = vmatpush2.bf16.msra.mxu0 0
    %1514 = vmatprep.subr.bf16.mxu0 0
    %1515 = vmatpush2.bf16.msra.mxu0 0
    %1516 = vmatprep.subr.bf16.mxu0 0
    %1517 = vmatpush2.bf16.msra.mxu0 0
    %1518 = vmatprep.subr.bf16.mxu0 0
    %1519 = vmatpush2.bf16.msra.mxu0 0
    %1520 = vmatprep.subr.bf16.mxu0 0
    %1521 = vmatpush2.bf16.msra.mxu0 0
    %1522 = vmatprep.subr.bf16.mxu0 0
    %1523 = vmatpush2.bf16.msra.mxu0 0
    %1524 = vmatprep.subr.bf16.mxu0 0
    %1525 = vmatpush2.bf16.msra.mxu0 0
    %1526 = vmatprep.subr.bf16.mxu0 0
    %1527 = vmatpush2.bf16.msra.mxu0 0
    %1528 = vmatprep.mubr.bf16.mxu0 0
    %1529 = vmatmul.mubr.bf16.gmra.mxu0 %v732
    %v1530 = vpop.f32.mrf.mxu0
    %v1531 = vadd.f32 %v1447, %v1530
    %v1532 = vpop.f32.mrf.mxu0
    %v1533 = vpop.f32.mrf.mxu0
    %v1534 = vpop.f32.mrf.mxu0
    %1535 = vdwg.mxu0
    %vm1536 = vcmp.gt.f32.partialorder %v1531, 0.0
    %v1537 = vmul.f32 %v1531, 0.01
    %v1538 = vsel %vm1536, %v1531, %v1537
    %v1539 = vpack.c.bf16 %v1538, %v1538
    %v1540 = vld [vmem:[#allocation13] sm:$0xf]
    %v1541 = vld [vmem:[#allocation13 + $0x4] sm:$0xf]
    %v1542 = vld [vmem:[#allocation13 + $0x8] sm:$0xf]
    %v1543 = vld [vmem:[#allocation13 + $0xc] sm:$0xf]
    %v1544 = vld [vmem:[#allocation13 + $0x10] sm:$0xf]
    %v1545 = vld [vmem:[#allocation13 + $0x14] sm:$0xf]
    %v1546 = vld [vmem:[#allocation13 + $0x18] sm:$0xf]
    %v1547 = vld [vmem:[#allocation13 + $0x1c] sm:$0xf]
    %v1548 = vld [vmem:[#allocation13 + $0x20] sm:$0xf]
    %v1549 = vld [vmem:[#allocation13 + $0x24] sm:$0xf]
    %v1550 = vld [vmem:[#allocation13 + $0x28] sm:$0xf]
    %v1551 = vld [vmem:[#allocation13 + $0x2c] sm:$0xf]
    %v1552 = vld [vmem:[#allocation13 + $0x30] sm:$0xf]
    %v1553 = vld [vmem:[#allocation13 + $0x34] sm:$0xf]
    %v1554 = vld [vmem:[#allocation13 + $0x38] sm:$0xf]
    %v1555 = vld [vmem:[#allocation13 + $0x3c] sm:$0xf]
    %v1556 = vlaneseq
    %v1557 = vshrl.u32 %v1556, 7
    %v1558 = vsub.s32 6, %v1557
    %v1559 = vrot.slane %v224, %v1558
    %v1576 = vunpack.c.l.b16 %v1540
    %v1577 = vunpack.c.l.b16 %v1541
    %v1578 = vunpack.c.l.b16 %v1542
    %v1579 = vunpack.c.l.b16 %v1543
    %v1580 = vunpack.c.l.b16 %v1544
    %v1581 = vunpack.c.l.b16 %v1545
    %v1582 = vunpack.c.l.b16 %v1546
    %v1583 = vunpack.c.l.b16 %v1547
    %v1584 = vunpack.c.l.b16 %v1548
    %v1585 = vunpack.c.l.b16 %v1549
    %v1586 = vunpack.c.l.b16 %v1550
    %v1587 = vunpack.c.l.b16 %v1551
    %v1588 = vunpack.c.l.b16 %v1552
    %v1589 = vunpack.c.l.b16 %v1553
    %v1590 = vunpack.c.l.b16 %v1554
    %v1591 = vunpack.c.l.b16 %v1555
    %v1592 = vpack.c.b16 %v1577, %v1576
    %v1593 = vpack.c.b16 %v1579, %v1578
    %v1594 = vpack.c.b16 %v1581, %v1580
    %v1595 = vpack.c.b16 %v1583, %v1582
    %v1596 = vpack.c.b16 %v1585, %v1584
    %v1597 = vpack.c.b16 %v1587, %v1586
    %v1598 = vpack.c.b16 %v1589, %v1588
    %v1599 = vpack.c.b16 %v1591, %v1590
    %1608 = vmatprep.subr.bf16.mxu0 0
    %1609 = vmatpush1.bf16.msra.mxu0 %v1599
    %1610 = vmatprep.subr.bf16.mxu0 0
    %1611 = vmatpush1.bf16.msra.mxu0 %v1598
    %1612 = vmatprep.subr.bf16.mxu0 0
    %1613 = vmatpush1.bf16.msra.mxu0 %v1597
    %1614 = vmatprep.subr.bf16.mxu0 0
    %1615 = vmatpush1.bf16.msra.mxu0 %v1596
    %1616 = vmatprep.subr.bf16.mxu0 0
    %1617 = vmatpush1.bf16.msra.mxu0 %v1595
    %1618 = vmatprep.subr.bf16.mxu0 0
    %1619 = vmatpush1.bf16.msra.mxu0 %v1594
    %1620 = vmatprep.subr.bf16.mxu0 0
    %1621 = vmatpush1.bf16.msra.mxu0 %v1593
    %1622 = vmatprep.subr.bf16.mxu0 0
    %1623 = vmatpush1.bf16.msra.mxu0 %v1592
    %1624 = vmatprep.subr.bf16.mxu0 0
    %1625 = vmatpush2.bf16.msra.mxu0 0
    %1626 = vmatprep.subr.bf16.mxu0 0
    %1627 = vmatpush2.bf16.msra.mxu0 0
    %1628 = vmatprep.subr.bf16.mxu0 0
    %1629 = vmatpush2.bf16.msra.mxu0 0
    %1630 = vmatprep.subr.bf16.mxu0 0
    %1631 = vmatpush2.bf16.msra.mxu0 0
    %1632 = vmatprep.subr.bf16.mxu0 0
    %1633 = vmatpush2.bf16.msra.mxu0 0
    %1634 = vmatprep.subr.bf16.mxu0 0
    %1635 = vmatpush2.bf16.msra.mxu0 0
    %1636 = vmatprep.subr.bf16.mxu0 0
    %1637 = vmatpush2.bf16.msra.mxu0 0
    %1638 = vmatprep.subr.bf16.mxu0 0
    %1639 = vmatpush2.bf16.msra.mxu0 0
    %1640 = vmatprep.mubr.bf16.mxu0 0
    %1641 = vmatmul.mubr.bf16.gmra.mxu0 %v1539
    %v1642 = vpop.f32.mrf.mxu0
    %v1643 = vadd.f32 %v1559, %v1642
    %v1644 = vpop.f32.mrf.mxu0
    %v1645 = vpop.f32.mrf.mxu0
    %v1646 = vpop.f32.mrf.mxu0
    %1647 = vdwg.mxu0
    %vm1648 = vcmp.gt.f32.partialorder %v1643, 0.0
    %v1649 = vmul.f32 %v1643, 0.01
    %v1650 = vsel %vm1648, %v1643, %v1649
    %v1651 = vpack.c.bf16 %v1650, %v1650
    %v1652 = vld [vmem:[#allocation15] sm:$0xf]
    %v1653 = vld [vmem:[#allocation15 + $0x4] sm:$0xf]
    %v1654 = vld [vmem:[#allocation15 + $0x8] sm:$0xf]
    %v1655 = vld [vmem:[#allocation15 + $0xc] sm:$0xf]
    %v1656 = vld [vmem:[#allocation15 + $0x10] sm:$0xf]
    %v1657 = vld [vmem:[#allocation15 + $0x14] sm:$0xf]
    %v1658 = vld [vmem:[#allocation15 + $0x18] sm:$0xf]
    %v1659 = vld [vmem:[#allocation15 + $0x1c] sm:$0xf]
    %v1660 = vld [vmem:[#allocation15 + $0x20] sm:$0xf]
    %v1661 = vld [vmem:[#allocation15 + $0x24] sm:$0xf]
    %v1662 = vld [vmem:[#allocation15 + $0x28] sm:$0xf]
    %v1663 = vld [vmem:[#allocation15 + $0x2c] sm:$0xf]
    %v1664 = vld [vmem:[#allocation15 + $0x30] sm:$0xf]
    %v1665 = vld [vmem:[#allocation15 + $0x34] sm:$0xf]
    %v1666 = vld [vmem:[#allocation15 + $0x38] sm:$0xf]
    %v1667 = vld [vmem:[#allocation15 + $0x3c] sm:$0xf]
    %v1668 = vlaneseq
    %v1669 = vshrl.u32 %v1668, 7
    %v1670 = vsub.s32 7, %v1669
    %v1671 = vrot.slane %v223, %v1670
    %v1688 = vunpack.c.l.b16 %v1652
    %v1689 = vunpack.c.l.b16 %v1653
    %v1690 = vunpack.c.l.b16 %v1654
    %v1691 = vunpack.c.l.b16 %v1655
    %v1692 = vunpack.c.l.b16 %v1656
    %v1693 = vunpack.c.l.b16 %v1657
    %v1694 = vunpack.c.l.b16 %v1658
    %v1695 = vunpack.c.l.b16 %v1659
    %v1696 = vunpack.c.l.b16 %v1660
    %v1697 = vunpack.c.l.b16 %v1661
    %v1698 = vunpack.c.l.b16 %v1662
    %v1699 = vunpack.c.l.b16 %v1663
    %v1700 = vunpack.c.l.b16 %v1664
    %v1701 = vunpack.c.l.b16 %v1665
    %v1702 = vunpack.c.l.b16 %v1666
    %v1703 = vunpack.c.l.b16 %v1667
    %v1704 = vpack.c.b16 %v1689, %v1688
    %v1705 = vpack.c.b16 %v1691, %v1690
    %v1706 = vpack.c.b16 %v1693, %v1692
    %v1707 = vpack.c.b16 %v1695, %v1694
    %v1708 = vpack.c.b16 %v1697, %v1696
    %v1709 = vpack.c.b16 %v1699, %v1698
    %v1710 = vpack.c.b16 %v1701, %v1700
    %v1711 = vpack.c.b16 %v1703, %v1702
    %1720 = vmatprep.subr.bf16.mxu0 0
    %1721 = vmatpush1.bf16.msra.mxu0 %v1711
    %1722 = vmatprep.subr.bf16.mxu0 0
    %1723 = vmatpush1.bf16.msra.mxu0 %v1710
    %1724 = vmatprep.subr.bf16.mxu0 0
    %1725 = vmatpush1.bf16.msra.mxu0 %v1709
    %1726 = vmatprep.subr.bf16.mxu0 0
    %1727 = vmatpush1.bf16.msra.mxu0 %v1708
    %1728 = vmatprep.subr.bf16.mxu0 0
    %1729 = vmatpush1.bf16.msra.mxu0 %v1707
    %1730 = vmatprep.subr.bf16.mxu0 0
    %1731 = vmatpush1.bf16.msra.mxu0 %v1706
    %1732 = vmatprep.subr.bf16.mxu0 0
    %1733 = vmatpush1.bf16.msra.mxu0 %v1705
    %1734 = vmatprep.subr.bf16.mxu0 0
    %1735 = vmatpush1.bf16.msra.mxu0 %v1704
    %1736 = vmatprep.subr.bf16.mxu0 0
    %1737 = vmatpush2.bf16.msra.mxu0 0
    %1738 = vmatprep.subr.bf16.mxu0 0
    %1739 = vmatpush2.bf16.msra.mxu0 0
    %1740 = vmatprep.subr.bf16.mxu0 0
    %1741 = vmatpush2.bf16.msra.mxu0 0
    %1742 = vmatprep.subr.bf16.mxu0 0
    %1743 = vmatpush2.bf16.msra.mxu0 0
    %1744 = vmatprep.subr.bf16.mxu0 0
    %1745 = vmatpush2.bf16.msra.mxu0 0
    %1746 = vmatprep.subr.bf16.mxu0 0
    %1747 = vmatpush2.bf16.msra.mxu0 0
    %1748 = vmatprep.subr.bf16.mxu0 0
    %1749 = vmatpush2.bf16.msra.mxu0 0
    %1750 = vmatprep.subr.bf16.mxu0 0
    %1751 = vmatpush2.bf16.msra.mxu0 0
    %1752 = vmatprep.mubr.bf16.mxu0 0
    %1753 = vmatmul.mubr.bf16.gmra.mxu0 %v1651
    %v1754 = vpop.f32.mrf.mxu0
    %v1755 = vadd.f32 %v1671, %v1754
    %v1756 = vpop.f32.mrf.mxu0
    %v1757 = vpop.f32.mrf.mxu0
    %v1758 = vpop.f32.mrf.mxu0
    %1759 = vdwg.mxu0
    %1760 = vst [vmem:[%s17 + $0x18] sm:$0xff] %v1755
    %v1761 = vadd.f32 %v224, 7.0
    %v1762 = vmax.f32 %v1761, 0.0
    %v1763 = vand.u32 2147483647, %v1761
    %v1764 = vsub.f32 0.0, %v1763
    %v1765 = vmul.f32 %v1764, 1.442695
    %v1766 = vpow.pop %v1765
    %v1767 = vadd.f32 %v1766, 1.0
    %v1768 = vlog2.pop %v1767
    %v1769 = vmul.f32 %v1768, 0.6931472
    %v1770 = vadd.f32 %v1762, %v1769
    %v1771 = vadd.f32 %v1770, -7.0
    %v1772 = vsub.f32 7.0, %v1771
    %v1773 = vmax.f32 %v1772, 0.0
    %v1774 = vand.u32 2147483647, %v1772
    %v1775 = vsub.f32 0.0, %v1774
    %v1776 = vmul.f32 %v1775, 1.442695
    %v1777 = vpow.pop %v1776
    %v1778 = vadd.f32 %v1777, 1.0
    %v1779 = vlog2.pop %v1778
    %v1780 = vmul.f32 %v1779, 0.6931472
    %v1781 = vadd.f32 %v1773, %v1780
    %v1782 = vsub.f32 7.0, %v1781
    %v1783 = vsub.f32 %v220, %v1755
    %v1784 = vsub.f32 0.0, %v1782
    %v1785 = vmul.f32 %v1784, 1.442695
    %v1786 = vpow.pop %v1785
    %v1787 = vlaneseq
    %v1788 = vshrl.u32 %v1787, 7
    %v1789 = vsub.s32 2, %v1788
    %v1790 = vrot.slane %v1786, %v1789
    %v1791 = vmul.f32 %v1783, %v1790
    %v1792 = vmul.f32 %v1791, %v1791
    %v1793 = vmul.f32 %v1792, -0.5
    %v1794 = vlaneseq
    %v1795 = vshrl.u32 %v1794, 7
    %v1796 = vsub.s32 2, %v1795
    %v1797 = vrot.slane %v1782, %v1796
    %v1798 = vsub.f32 %v1793, %v1797
    %v1799 = vsub.f32 %v1798, 0.9189385
    %1800 = vadd.xlane.f32.xlu0 %v1799
    %v1801 = vpop.xlane.xlu0 %1800
    %v1802 = vrot.slane %v1801, 4
    %v1803 = vadd.f32 %v1801, %v1802
    %v1804 = vrot.slane %v1803, 2
    %v1805 = vadd.f32 %v1803, %v1804
    %v1806 = vrot.slane %v1805, 1
    %v1807 = vadd.f32 %v1805, %v1806
    %s1808 = vtos %v1807
    %s1809 = ssub.f32 0.0, %s1808
    %v1810 = vrcp.pop 8.0
    %s1811 = vtos %v1810
    %s1812 = smul.f32 %s1809, %s1811
    %v1813 = vld [vmem:[#allocation16] sm:$0xf]
    %v1814 = vld [vmem:[#allocation16 + $0x4] sm:$0xf]
    %v1815 = vld [vmem:[#allocation16 + $0x8] sm:$0xf]
    %v1816 = vld [vmem:[#allocation16 + $0xc] sm:$0xf]
    %v1817 = vld [vmem:[#allocation16 + $0x10] sm:$0xf]
    %v1818 = vld [vmem:[#allocation16 + $0x14] sm:$0xf]
    %v1819 = vld [vmem:[#allocation16 + $0x18] sm:$0xf]
    %v1820 = vld [vmem:[#allocation16 + $0x1c] sm:$0xf]
    %v1821 = vlaneseq
    %v1822 = vshrl.u32 %v1821, 7
    %v1823 = vsub.s32 7, %v1822
    %v1824 = vrot.slane %v224, %v1823
    %v1833 = vunpack.c.l.b16 %v1813
    %v1834 = vunpack.c.l.b16 %v1814
    %v1835 = vunpack.c.l.b16 %v1815
    %v1836 = vunpack.c.l.b16 %v1816
    %v1837 = vunpack.c.l.b16 %v1817
    %v1838 = vunpack.c.l.b16 %v1818
    %v1839 = vunpack.c.l.b16 %v1819
    %v1840 = vunpack.c.l.b16 %v1820
    %v1841 = vpack.c.b16 %v1834, %v1833
    %v1842 = vpack.c.b16 %v1836, %v1835
    %v1843 = vpack.c.b16 %v1838, %v1837
    %v1844 = vpack.c.b16 %v1840, %v1839
    %1849 = vmatprep.subr.bf16.mxu0 0
    %1850 = vmatpush1.bf16.msra.mxu0 0
    %1851 = vmatprep.subr.bf16.mxu0 0
    %1852 = vmatpush1.bf16.msra.mxu0 0
    %1853 = vmatprep.subr.bf16.mxu0 0
    %1854 = vmatpush1.bf16.msra.mxu0 0
    %1855 = vmatprep.subr.bf16.mxu0 0
    %1856 = vmatpush1.bf16.msra.mxu0 0
    %1857 = vmatprep.subr.bf16.mxu0 0
    %1858 = vmatpush1.bf16.msra.mxu0 %v1844
    %1859 = vmatprep.subr.bf16.mxu0 0
    %1860 = vmatpush1.bf16.msra.mxu0 %v1843
    %1861 = vmatprep.subr.bf16.mxu0 0
    %1862 = vmatpush1.bf16.msra.mxu0 %v1842
    %1863 = vmatprep.subr.bf16.mxu0 0
    %1864 = vmatpush1.bf16.msra.mxu0 %v1841
    %1865 = vmatprep.subr.bf16.mxu0 0
    %1866 = vmatpush2.bf16.msra.mxu0 0
    %1867 = vmatprep.subr.bf16.mxu0 0
    %1868 = vmatpush2.bf16.msra.mxu0 0
    %1869 = vmatprep.subr.bf16.mxu0 0
    %1870 = vmatpush2.bf16.msra.mxu0 0
    %1871 = vmatprep.subr.bf16.mxu0 0
    %1872 = vmatpush2.bf16.msra.mxu0 0
    %1873 = vmatprep.subr.bf16.mxu0 0
    %1874 = vmatpush2.bf16.msra.mxu0 0
    %1875 = vmatprep.subr.bf16.mxu0 0
    %1876 = vmatpush2.bf16.msra.mxu0 0
    %1877 = vmatprep.subr.bf16.mxu0 0
    %1878 = vmatpush2.bf16.msra.mxu0 0
    %1879 = vmatprep.subr.bf16.mxu0 0
    %1880 = vmatpush2.bf16.msra.mxu0 0
    %1881 = vmatprep.mubr.bf16.mxu0 0
    %1882 = vmatmul.mubr.bf16.gmra.mxu0 %v919
    %v1883 = vpop.f32.mrf.mxu0
    %v1884 = vadd.f32 %v1824, %v1883
    %v1885 = vpop.f32.mrf.mxu0
    %v1886 = vpop.f32.mrf.mxu0
    %v1887 = vpop.f32.mrf.mxu0
    %1888 = vdwg.mxu0
    %vm1889 = vcmp.gt.f32.partialorder %v1884, 0.0
    %v1890 = vmul.f32 %v1884, 0.01
    %v1891 = vsel %vm1889, %v1884, %v1890
    %v1892 = vpack.c.bf16 %v1891, %v1891
    %v1893 = vld [vmem:[#allocation18] sm:$0xf]
    %v1894 = vld [vmem:[#allocation18 + $0x4] sm:$0xf]
    %v1895 = vld [vmem:[#allocation18 + $0x8] sm:$0xf]
    %v1896 = vld [vmem:[#allocation18 + $0xc] sm:$0xf]
    %v1897 = vld [vmem:[#allocation18 + $0x10] sm:$0xf]
    %v1898 = vld [vmem:[#allocation18 + $0x14] sm:$0xf]
    %v1899 = vld [vmem:[#allocation18 + $0x18] sm:$0xf]
    %v1900 = vld [vmem:[#allocation18 + $0x1c] sm:$0xf]
    %v1901 = vld [vmem:[#allocation18 + $0x20] sm:$0xf]
    %v1902 = vld [vmem:[#allocation18 + $0x24] sm:$0xf]
    %v1903 = vld [vmem:[#allocation18 + $0x28] sm:$0xf]
    %v1904 = vld [vmem:[#allocation18 + $0x2c] sm:$0xf]
    %v1905 = vld [vmem:[#allocation18 + $0x30] sm:$0xf]
    %v1906 = vld [vmem:[#allocation18 + $0x34] sm:$0xf]
    %v1907 = vld [vmem:[#allocation18 + $0x38] sm:$0xf]
    %v1908 = vld [vmem:[#allocation18 + $0x3c] sm:$0xf]
    %v1909 = vlaneseq
    %v1910 = vshrl.u32 %v1909, 7
    %v1911 = vsub.s32 0, %v1910
    %v1912 = vrot.slane %v225, %v1911
    %v1929 = vunpack.c.l.b16 %v1893
    %v1930 = vunpack.c.l.b16 %v1894
    %v1931 = vunpack.c.l.b16 %v1895
    %v1932 = vunpack.c.l.b16 %v1896
    %v1933 = vunpack.c.l.b16 %v1897
    %v1934 = vunpack.c.l.b16 %v1898
    %v1935 = vunpack.c.l.b16 %v1899
    %v1936 = vunpack.c.l.b16 %v1900
    %v1937 = vunpack.c.l.b16 %v1901
    %v1938 = vunpack.c.l.b16 %v1902
    %v1939 = vunpack.c.l.b16 %v1903
    %v1940 = vunpack.c.l.b16 %v1904
    %v1941 = vunpack.c.l.b16 %v1905
    %v1942 = vunpack.c.l.b16 %v1906
    %v1943 = vunpack.c.l.b16 %v1907
    %v1944 = vunpack.c.l.b16 %v1908
    %v1945 = vpack.c.b16 %v1930, %v1929
    %v1946 = vpack.c.b16 %v1932, %v1931
    %v1947 = vpack.c.b16 %v1934, %v1933
    %v1948 = vpack.c.b16 %v1936, %v1935
    %v1949 = vpack.c.b16 %v1938, %v1937
    %v1950 = vpack.c.b16 %v1940, %v1939
    %v1951 = vpack.c.b16 %v1942, %v1941
    %v1952 = vpack.c.b16 %v1944, %v1943
    %1961 = vmatprep.subr.bf16.mxu0 0
    %1962 = vmatpush1.bf16.msra.mxu0 %v1952
    %1963 = vmatprep.subr.bf16.mxu0 0
    %1964 = vmatpush1.bf16.msra.mxu0 %v1951
    %1965 = vmatprep.subr.bf16.mxu0 0
    %1966 = vmatpush1.bf16.msra.mxu0 %v1950
    %1967 = vmatprep.subr.bf16.mxu0 0
    %1968 = vmatpush1.bf16.msra.mxu0 %v1949
    %1969 = vmatprep.subr.bf16.mxu0 0
    %1970 = vmatpush1.bf16.msra.mxu0 %v1948
    %1971 = vmatprep.subr.bf16.mxu0 0
    %1972 = vmatpush1.bf16.msra.mxu0 %v1947
    %1973 = vmatprep.subr.bf16.mxu0 0
    %1974 = vmatpush1.bf16.msra.mxu0 %v1946
    %1975 = vmatprep.subr.bf16.mxu0 0
    %1976 = vmatpush1.bf16.msra.mxu0 %v1945
    %1977 = vmatprep.subr.bf16.mxu0 0
    %1978 = vmatpush2.bf16.msra.mxu0 0
    %1979 = vmatprep.subr.bf16.mxu0 0
    %1980 = vmatpush2.bf16.msra.mxu0 0
    %1981 = vmatprep.subr.bf16.mxu0 0
    %1982 = vmatpush2.bf16.msra.mxu0 0
    %1983 = vmatprep.subr.bf16.mxu0 0
    %1984 = vmatpush2.bf16.msra.mxu0 0
    %1985 = vmatprep.subr.bf16.mxu0 0
    %1986 = vmatpush2.bf16.msra.mxu0 0
    %1987 = vmatprep.subr.bf16.mxu0 0
    %1988 = vmatpush2.bf16.msra.mxu0 0
    %1989 = vmatprep.subr.bf16.mxu0 0
    %1990 = vmatpush2.bf16.msra.mxu0 0
    %1991 = vmatprep.subr.bf16.mxu0 0
    %1992 = vmatpush2.bf16.msra.mxu0 0
    %1993 = vmatprep.mubr.bf16.mxu0 0
    %1994 = vmatmul.mubr.bf16.gmra.mxu0 %v1892
    %v1995 = vpop.f32.mrf.mxu0
    %v1996 = vadd.f32 %v1912, %v1995
    %v1997 = vpop.f32.mrf.mxu0
    %v1998 = vpop.f32.mrf.mxu0
    %v1999 = vpop.f32.mrf.mxu0
    %2000 = vdwg.mxu0
    %vm2001 = vcmp.gt.f32.partialorder %v1996, 0.0
    %v2002 = vmul.f32 %v1996, 0.01
    %v2003 = vsel %vm2001, %v1996, %v2002
    %v2004 = vpack.c.bf16 %v2003, %v2003
    %v2005 = vld [vmem:[#allocation19] sm:$0xff]
    %v2006 = vld [vmem:[#allocation19 + $0x8] sm:$0xff]
    %v2007 = vld [vmem:[#allocation19 + $0x10] sm:$0xff]
    %v2008 = vld [vmem:[#allocation19 + $0x18] sm:$0xff]
    %v2009 = vld [vmem:[#allocation19 + $0x20] sm:$0xff]
    %v2010 = vld [vmem:[#allocation19 + $0x28] sm:$0xff]
    %v2011 = vld [vmem:[#allocation19 + $0x30] sm:$0xff]
    %v2012 = vld [vmem:[#allocation19 + $0x38] sm:$0xff]
    %v2013 = vld [vmem:[#allocation19 + $0x40] sm:$0xff]
    %v2014 = vld [vmem:[#allocation19 + $0x48] sm:$0xff]
    %v2015 = vld [vmem:[#allocation19 + $0x50] sm:$0xff]
    %v2016 = vld [vmem:[#allocation19 + $0x58] sm:$0xff]
    %v2017 = vld [vmem:[#allocation19 + $0x60] sm:$0xff]
    %v2018 = vld [vmem:[#allocation19 + $0x68] sm:$0xff]
    %v2019 = vld [vmem:[#allocation19 + $0x70] sm:$0xff]
    %v2020 = vld [vmem:[#allocation19 + $0x78] sm:$0xff]
    %v2021 = vld [vmem:[#allocation19 + $0x80] sm:$0xff]
    %v2022 = vld [vmem:[#allocation19 + $0x88] sm:$0xff]
    %v2023 = vld [vmem:[#allocation19 + $0x90] sm:$0xff]
    %v2024 = vld [vmem:[#allocation19 + $0x98] sm:$0xff]
    %v2025 = vld [vmem:[#allocation19 + $0xa0] sm:$0xff]
    %v2026 = vld [vmem:[#allocation19 + $0xa8] sm:$0xff]
    %v2027 = vld [vmem:[#allocation19 + $0xb0] sm:$0xff]
    %v2028 = vld [vmem:[#allocation19 + $0xb8] sm:$0xff]
    %v2029 = vld [vmem:[#allocation19 + $0xc0] sm:$0xff]
    %v2030 = vld [vmem:[#allocation19 + $0xc8] sm:$0xff]
    %v2031 = vld [vmem:[#allocation19 + $0xd0] sm:$0xff]
    %v2032 = vld [vmem:[#allocation19 + $0xd8] sm:$0xff]
    %v2033 = vld [vmem:[#allocation19 + $0xe0] sm:$0xff]
    %v2034 = vld [vmem:[#allocation19 + $0xe8] sm:$0xff]
    %v2035 = vld [vmem:[#allocation19 + $0xf0] sm:$0xff]
    %v2036 = vld [vmem:[#allocation19 + $0xf8] sm:$0xff]
    %v2037 = vld [vmem:[#allocation19 + $0x100] sm:$0xff]
    %v2038 = vld [vmem:[#allocation19 + $0x108] sm:$0xff]
    %v2039 = vld [vmem:[#allocation19 + $0x110] sm:$0xff]
    %v2040 = vld [vmem:[#allocation19 + $0x118] sm:$0xff]
    %v2041 = vld [vmem:[#allocation19 + $0x120] sm:$0xff]
    %v2042 = vld [vmem:[#allocation19 + $0x128] sm:$0xff]
    %v2043 = vld [vmem:[#allocation19 + $0x130] sm:$0xff]
    %v2044 = vld [vmem:[#allocation19 + $0x138] sm:$0xff]
    %v2045 = vld [vmem:[#allocation19 + $0x140] sm:$0xff]
    %v2046 = vld [vmem:[#allocation19 + $0x148] sm:$0xff]
    %v2047 = vld [vmem:[#allocation19 + $0x150] sm:$0xff]
    %v2048 = vld [vmem:[#allocation19 + $0x158] sm:$0xff]
    %v2049 = vld [vmem:[#allocation19 + $0x160] sm:$0xff]
    %v2050 = vld [vmem:[#allocation19 + $0x168] sm:$0xff]
    %v2051 = vld [vmem:[#allocation19 + $0x170] sm:$0xff]
    %v2052 = vld [vmem:[#allocation19 + $0x178] sm:$0xff]
    %v2053 = vld [vmem:[#allocation19 + $0x180] sm:$0xff]
    %v2054 = vld [vmem:[#allocation19 + $0x188] sm:$0xff]
    %v2055 = vld [vmem:[#allocation19 + $0x190] sm:$0xff]
    %v2056 = vld [vmem:[#allocation19 + $0x198] sm:$0xff]
    %v2057 = vld [vmem:[#allocation19 + $0x1a0] sm:$0xff]
    %v2058 = vld [vmem:[#allocation19 + $0x1a8] sm:$0xff]
    %v2059 = vld [vmem:[#allocation19 + $0x1b0] sm:$0xff]
    %v2060 = vld [vmem:[#allocation19 + $0x1b8] sm:$0xff]
    %v2061 = vld [vmem:[#allocation19 + $0x1c0] sm:$0xff]
    %v2062 = vld [vmem:[#allocation19 + $0x1c8] sm:$0xff]
    %v2063 = vld [vmem:[#allocation19 + $0x1d0] sm:$0xff]
    %v2064 = vld [vmem:[#allocation19 + $0x1d8] sm:$0xff]
    %v2065 = vld [vmem:[#allocation19 + $0x1e0] sm:$0xff]
    %v2066 = vld [vmem:[#allocation19 + $0x1e8] sm:$0xff]
    %v2067 = vld [vmem:[#allocation19 + $0x1f0] sm:$0xff]
    %v2068 = vld [vmem:[#allocation19 + $0x1f8] sm:$0xff]
    %v2069 = vld [vmem:[#allocation19 + $0x200] sm:$0xff]
    %v2070 = vld [vmem:[#allocation19 + $0x208] sm:$0xff]
    %v2071 = vld [vmem:[#allocation19 + $0x210] sm:$0xff]
    %v2072 = vld [vmem:[#allocation19 + $0x218] sm:$0xff]
    %v2073 = vld [vmem:[#allocation19 + $0x220] sm:$0xff]
    %v2074 = vld [vmem:[#allocation19 + $0x228] sm:$0xff]
    %v2075 = vld [vmem:[#allocation19 + $0x230] sm:$0xff]
    %v2076 = vld [vmem:[#allocation19 + $0x238] sm:$0xff]
    %v2077 = vld [vmem:[#allocation19 + $0x240] sm:$0xff]
    %v2078 = vld [vmem:[#allocation19 + $0x248] sm:$0xff]
    %v2079 = vld [vmem:[#allocation19 + $0x250] sm:$0xff]
    %v2080 = vld [vmem:[#allocation19 + $0x258] sm:$0xff]
    %v2081 = vld [vmem:[#allocation19 + $0x260] sm:$0xff]
    %v2082 = vld [vmem:[#allocation19 + $0x268] sm:$0xff]
    %v2083 = vld [vmem:[#allocation19 + $0x270] sm:$0xff]
    %v2084 = vld [vmem:[#allocation19 + $0x278] sm:$0xff]
    %v2085 = vld [vmem:[#allocation19 + $0x280] sm:$0xff]
    %v2086 = vld [vmem:[#allocation19 + $0x288] sm:$0xff]
    %v2087 = vld [vmem:[#allocation19 + $0x290] sm:$0xff]
    %v2088 = vld [vmem:[#allocation19 + $0x298] sm:$0xff]
    %v2089 = vld [vmem:[#allocation19 + $0x2a0] sm:$0xff]
    %v2090 = vld [vmem:[#allocation19 + $0x2a8] sm:$0xff]
    %v2091 = vld [vmem:[#allocation19 + $0x2b0] sm:$0xff]
    %v2092 = vld [vmem:[#allocation19 + $0x2b8] sm:$0xff]
    %v2093 = vld [vmem:[#allocation19 + $0x2c0] sm:$0xff]
    %v2094 = vld [vmem:[#allocation19 + $0x2c8] sm:$0xff]
    %v2095 = vld [vmem:[#allocation19 + $0x2d0] sm:$0xff]
    %v2096 = vld [vmem:[#allocation19 + $0x2d8] sm:$0xff]
    %v2097 = vld [vmem:[#allocation19 + $0x2e0] sm:$0xff]
    %v2098 = vld [vmem:[#allocation19 + $0x2e8] sm:$0xff]
    %v2099 = vld [vmem:[#allocation19 + $0x2f0] sm:$0xff]
    %v2100 = vld [vmem:[#allocation19 + $0x2f8] sm:$0xff]
    %v2101 = vld [vmem:[#allocation19 + $0x300] sm:$0xff]
    %v2102 = vld [vmem:[#allocation19 + $0x308] sm:$0xff]
    %v2103 = vld [vmem:[#allocation19 + $0x310] sm:$0xff]
    %v2104 = vld [vmem:[#allocation19 + $0x318] sm:$0xff]
    %v2105 = vld [vmem:[#allocation19 + $0x320] sm:$0xff]
    %v2106 = vld [vmem:[#allocation19 + $0x328] sm:$0xff]
    %v2107 = vld [vmem:[#allocation19 + $0x330] sm:$0xff]
    %v2108 = vld [vmem:[#allocation19 + $0x338] sm:$0xff]
    %v2109 = vld [vmem:[#allocation19 + $0x340] sm:$0xff]
    %v2110 = vld [vmem:[#allocation19 + $0x348] sm:$0xff]
    %v2111 = vld [vmem:[#allocation19 + $0x350] sm:$0xff]
    %v2112 = vld [vmem:[#allocation19 + $0x358] sm:$0xff]
    %v2113 = vld [vmem:[#allocation19 + $0x360] sm:$0xff]
    %v2114 = vld [vmem:[#allocation19 + $0x368] sm:$0xff]
    %v2115 = vld [vmem:[#allocation19 + $0x370] sm:$0xff]
    %v2116 = vld [vmem:[#allocation19 + $0x378] sm:$0xff]
    %v2117 = vld [vmem:[#allocation19 + $0x380] sm:$0xff]
    %v2118 = vld [vmem:[#allocation19 + $0x388] sm:$0xff]
    %v2119 = vld [vmem:[#allocation19 + $0x390] sm:$0xff]
    %v2120 = vld [vmem:[#allocation19 + $0x398] sm:$0xff]
    %v2121 = vld [vmem:[#allocation19 + $0x3a0] sm:$0xff]
    %v2122 = vld [vmem:[#allocation19 + $0x3a8] sm:$0xff]
    %v2123 = vld [vmem:[#allocation19 + $0x3b0] sm:$0xff]
    %v2124 = vld [vmem:[#allocation19 + $0x3b8] sm:$0xff]
    %v2125 = vld [vmem:[#allocation19 + $0x3c0] sm:$0xff]
    %v2126 = vld [vmem:[#allocation19 + $0x3c8] sm:$0xff]
    %v2127 = vld [vmem:[#allocation19 + $0x3d0] sm:$0xff]
    %v2128 = vld [vmem:[#allocation19 + $0x3d8] sm:$0xff]
    %v2129 = vld [vmem:[#allocation19 + $0x3e0] sm:$0xff]
    %v2130 = vld [vmem:[#allocation19 + $0x3e8] sm:$0xff]
    %v2131 = vld [vmem:[#allocation19 + $0x3f0] sm:$0xff]
    %v2132 = vld [vmem:[#allocation19 + $0x3f8] sm:$0xff]
    %v2133 = vld [vmem:[#allocation4] sm:$0xff]
    %v2134 = vld [vmem:[#allocation4 + $0x8] sm:$0xff]
    %v2137 = vlaneseq
    %v2138 = vshrl.u32 %v2137, 7
    %v2139 = vsub.s32 0, %v2138
    %v2140 = vrot.slane %v2133, %v2139
    %v2141 = vlaneseq
    %v2142 = vshrl.u32 %v2141, 7
    %v2143 = vsub.s32 1, %v2142
    %v2144 = vrot.slane %v2133, %v2143
    %v2145 = vlaneseq
    %v2146 = vshrl.u32 %v2145, 7
    %v2147 = vsub.s32 2, %v2146
    %v2148 = vrot.slane %v2133, %v2147
    %v2149 = vlaneseq
    %v2150 = vshrl.u32 %v2149, 7
    %v2151 = vsub.s32 3, %v2150
    %v2152 = vrot.slane %v2133, %v2151
    %v2153 = vlaneseq
    %v2154 = vshrl.u32 %v2153, 7
    %v2155 = vsub.s32 4, %v2154
    %v2156 = vrot.slane %v2133, %v2155
    %v2157 = vlaneseq
    %v2158 = vshrl.u32 %v2157, 7
    %v2159 = vsub.s32 5, %v2158
    %v2160 = vrot.slane %v2133, %v2159
    %v2161 = vlaneseq
    %v2162 = vshrl.u32 %v2161, 7
    %v2163 = vsub.s32 6, %v2162
    %v2164 = vrot.slane %v2133, %v2163
    %v2165 = vlaneseq
    %v2166 = vshrl.u32 %v2165, 7
    %v2167 = vsub.s32 7, %v2166
    %v2168 = vrot.slane %v2133, %v2167
    %v2169 = vlaneseq
    %v2170 = vshrl.u32 %v2169, 7
    %v2171 = vsub.s32 0, %v2170
    %v2172 = vrot.slane %v2134, %v2171
    %v2173 = vlaneseq
    %v2174 = vshrl.u32 %v2173, 7
    %v2175 = vsub.s32 1, %v2174
    %v2176 = vrot.slane %v2134, %v2175
    %v2177 = vlaneseq
    %v2178 = vshrl.u32 %v2177, 7
    %v2179 = vsub.s32 2, %v2178
    %v2180 = vrot.slane %v2134, %v2179
    %v2181 = vlaneseq
    %v2182 = vshrl.u32 %v2181, 7
    %v2183 = vsub.s32 3, %v2182
    %v2184 = vrot.slane %v2134, %v2183
    %v2185 = vlaneseq
    %v2186 = vshrl.u32 %v2185, 7
    %v2187 = vsub.s32 4, %v2186
    %v2188 = vrot.slane %v2134, %v2187
    %v2189 = vlaneseq
    %v2190 = vshrl.u32 %v2189, 7
    %v2191 = vsub.s32 5, %v2190
    %v2192 = vrot.slane %v2134, %v2191
    %v2193 = vlaneseq
    %v2194 = vshrl.u32 %v2193, 7
    %v2195 = vsub.s32 6, %v2194
    %v2196 = vrot.slane %v2134, %v2195
    %v2197 = vlaneseq
    %v2198 = vshrl.u32 %v2197, 7
    %v2199 = vsub.s32 7, %v2198
    %v2200 = vrot.slane %v2134, %v2199
    %v2345 = vunpack.c.l.b16 %v2005
    %v2346 = vunpack.c.h.b16 %v2005
    %v2347 = vunpack.c.l.b16 %v2006
    %v2348 = vunpack.c.h.b16 %v2006
    %v2349 = vunpack.c.l.b16 %v2007
    %v2350 = vunpack.c.h.b16 %v2007
    %v2351 = vunpack.c.l.b16 %v2008
    %v2352 = vunpack.c.h.b16 %v2008
    %v2353 = vunpack.c.l.b16 %v2009
    %v2354 = vunpack.c.h.b16 %v2009
    %v2355 = vunpack.c.l.b16 %v2010
    %v2356 = vunpack.c.h.b16 %v2010
    %v2357 = vunpack.c.l.b16 %v2011
    %v2358 = vunpack.c.h.b16 %v2011
    %v2359 = vunpack.c.l.b16 %v2012
    %v2360 = vunpack.c.h.b16 %v2012
    %v2361 = vunpack.c.l.b16 %v2013
    %v2362 = vunpack.c.h.b16 %v2013
    %v2363 = vunpack.c.l.b16 %v2014
    %v2364 = vunpack.c.h.b16 %v2014
    %v2365 = vunpack.c.l.b16 %v2015
    %v2366 = vunpack.c.h.b16 %v2015
    %v2367 = vunpack.c.l.b16 %v2016
    %v2368 = vunpack.c.h.b16 %v2016
    %v2369 = vunpack.c.l.b16 %v2017
    %v2370 = vunpack.c.h.b16 %v2017
    %v2371 = vunpack.c.l.b16 %v2018
    %v2372 = vunpack.c.h.b16 %v2018
    %v2373 = vunpack.c.l.b16 %v2019
    %v2374 = vunpack.c.h.b16 %v2019
    %v2375 = vunpack.c.l.b16 %v2020
    %v2376 = vunpack.c.h.b16 %v2020
    %v2377 = vunpack.c.l.b16 %v2021
    %v2378 = vunpack.c.h.b16 %v2021
    %v2379 = vunpack.c.l.b16 %v2022
    %v2380 = vunpack.c.h.b16 %v2022
    %v2381 = vunpack.c.l.b16 %v2023
    %v2382 = vunpack.c.h.b16 %v2023
    %v2383 = vunpack.c.l.b16 %v2024
    %v2384 = vunpack.c.h.b16 %v2024
    %v2385 = vunpack.c.l.b16 %v2025
    %v2386 = vunpack.c.h.b16 %v2025
    %v2387 = vunpack.c.l.b16 %v2026
    %v2388 = vunpack.c.h.b16 %v2026
    %v2389 = vunpack.c.l.b16 %v2027
    %v2390 = vunpack.c.h.b16 %v2027
    %v2391 = vunpack.c.l.b16 %v2028
    %v2392 = vunpack.c.h.b16 %v2028
    %v2393 = vunpack.c.l.b16 %v2029
    %v2394 = vunpack.c.h.b16 %v2029
    %v2395 = vunpack.c.l.b16 %v2030
    %v2396 = vunpack.c.h.b16 %v2030
    %v2397 = vunpack.c.l.b16 %v2031
    %v2398 = vunpack.c.h.b16 %v2031
    %v2399 = vunpack.c.l.b16 %v2032
    %v2400 = vunpack.c.h.b16 %v2032
    %v2401 = vunpack.c.l.b16 %v2033
    %v2402 = vunpack.c.h.b16 %v2033
    %v2403 = vunpack.c.l.b16 %v2034
    %v2404 = vunpack.c.h.b16 %v2034
    %v2405 = vunpack.c.l.b16 %v2035
    %v2406 = vunpack.c.h.b16 %v2035
    %v2407 = vunpack.c.l.b16 %v2036
    %v2408 = vunpack.c.h.b16 %v2036
    %v2409 = vunpack.c.l.b16 %v2037
    %v2410 = vunpack.c.h.b16 %v2037
    %v2411 = vunpack.c.l.b16 %v2038
    %v2412 = vunpack.c.h.b16 %v2038
    %v2413 = vunpack.c.l.b16 %v2039
    %v2414 = vunpack.c.h.b16 %v2039
    %v2415 = vunpack.c.l.b16 %v2040
    %v2416 = vunpack.c.h.b16 %v2040
    %v2417 = vunpack.c.l.b16 %v2041
    %v2418 = vunpack.c.h.b16 %v2041
    %v2419 = vunpack.c.l.b16 %v2042
    %v2420 = vunpack.c.h.b16 %v2042
    %v2421 = vunpack.c.l.b16 %v2043
    %v2422 = vunpack.c.h.b16 %v2043
    %v2423 = vunpack.c.l.b16 %v2044
    %v2424 = vunpack.c.h.b16 %v2044
    %v2425 = vunpack.c.l.b16 %v2045
    %v2426 = vunpack.c.h.b16 %v2045
    %v2427 = vunpack.c.l.b16 %v2046
    %v2428 = vunpack.c.h.b16 %v2046
    %v2429 = vunpack.c.l.b16 %v2047
    %v2430 = vunpack.c.h.b16 %v2047
    %v2431 = vunpack.c.l.b16 %v2048
    %v2432 = vunpack.c.h.b16 %v2048
    %v2433 = vunpack.c.l.b16 %v2049
    %v2434 = vunpack.c.h.b16 %v2049
    %v2435 = vunpack.c.l.b16 %v2050
    %v2436 = vunpack.c.h.b16 %v2050
    %v2437 = vunpack.c.l.b16 %v2051
    %v2438 = vunpack.c.h.b16 %v2051
    %v2439 = vunpack.c.l.b16 %v2052
    %v2440 = vunpack.c.h.b16 %v2052
    %v2441 = vunpack.c.l.b16 %v2053
    %v2442 = vunpack.c.h.b16 %v2053
    %v2443 = vunpack.c.l.b16 %v2054
    %v2444 = vunpack.c.h.b16 %v2054
    %v2445 = vunpack.c.l.b16 %v2055
    %v2446 = vunpack.c.h.b16 %v2055
    %v2447 = vunpack.c.l.b16 %v2056
    %v2448 = vunpack.c.h.b16 %v2056
    %v2449 = vunpack.c.l.b16 %v2057
    %v2450 = vunpack.c.h.b16 %v2057
    %v2451 = vunpack.c.l.b16 %v2058
    %v2452 = vunpack.c.h.b16 %v2058
    %v2453 = vunpack.c.l.b16 %v2059
    %v2454 = vunpack.c.h.b16 %v2059
    %v2455 = vunpack.c.l.b16 %v2060
    %v2456 = vunpack.c.h.b16 %v2060
    %v2457 = vunpack.c.l.b16 %v2061
    %v2458 = vunpack.c.h.b16 %v2061
    %v2459 = vunpack.c.l.b16 %v2062
    %v2460 = vunpack.c.h.b16 %v2062
    %v2461 = vunpack.c.l.b16 %v2063
    %v2462 = vunpack.c.h.b16 %v2063
    %v2463 = vunpack.c.l.b16 %v2064
    %v2464 = vunpack.c.h.b16 %v2064
    %v2465 = vunpack.c.l.b16 %v2065
    %v2466 = vunpack.c.h.b16 %v2065
    %v2467 = vunpack.c.l.b16 %v2066
    %v2468 = vunpack.c.h.b16 %v2066
    %v2469 = vunpack.c.l.b16 %v2067
    %v2470 = vunpack.c.h.b16 %v2067
    %v2471 = vunpack.c.l.b16 %v2068
    %v2472 = vunpack.c.h.b16 %v2068
    %v2473 = vunpack.c.l.b16 %v2069
    %v2474 = vunpack.c.h.b16 %v2069
    %v2475 = vunpack.c.l.b16 %v2070
    %v2476 = vunpack.c.h.b16 %v2070
    %v2477 = vunpack.c.l.b16 %v2071
    %v2478 = vunpack.c.h.b16 %v2071
    %v2479 = vunpack.c.l.b16 %v2072
    %v2480 = vunpack.c.h.b16 %v2072
    %v2481 = vunpack.c.l.b16 %v2073
    %v2482 = vunpack.c.h.b16 %v2073
    %v2483 = vunpack.c.l.b16 %v2074
    %v2484 = vunpack.c.h.b16 %v2074
    %v2485 = vunpack.c.l.b16 %v2075
    %v2486 = vunpack.c.h.b16 %v2075
    %v2487 = vunpack.c.l.b16 %v2076
    %v2488 = vunpack.c.h.b16 %v2076
    %v2489 = vunpack.c.l.b16 %v2077
    %v2490 = vunpack.c.h.b16 %v2077
    %v2491 = vunpack.c.l.b16 %v2078
    %v2492 = vunpack.c.h.b16 %v2078
    %v2493 = vunpack.c.l.b16 %v2079
    %v2494 = vunpack.c.h.b16 %v2079
    %v2495 = vunpack.c.l.b16 %v2080
    %v2496 = vunpack.c.h.b16 %v2080
    %v2497 = vunpack.c.l.b16 %v2081
    %v2498 = vunpack.c.h.b16 %v2081
    %v2499 = vunpack.c.l.b16 %v2082
    %v2500 = vunpack.c.h.b16 %v2082
    %v2501 = vunpack.c.l.b16 %v2083
    %v2502 = vunpack.c.h.b16 %v2083
    %v2503 = vunpack.c.l.b16 %v2084
    %v2504 = vunpack.c.h.b16 %v2084
    %v2505 = vunpack.c.l.b16 %v2085
    %v2506 = vunpack.c.h.b16 %v2085
    %v2507 = vunpack.c.l.b16 %v2086
    %v2508 = vunpack.c.h.b16 %v2086
    %v2509 = vunpack.c.l.b16 %v2087
    %v2510 = vunpack.c.h.b16 %v2087
    %v2511 = vunpack.c.l.b16 %v2088
    %v2512 = vunpack.c.h.b16 %v2088
    %v2513 = vunpack.c.l.b16 %v2089
    %v2514 = vunpack.c.h.b16 %v2089
    %v2515 = vunpack.c.l.b16 %v2090
    %v2516 = vunpack.c.h.b16 %v2090
    %v2517 = vunpack.c.l.b16 %v2091
    %v2518 = vunpack.c.h.b16 %v2091
    %v2519 = vunpack.c.l.b16 %v2092
    %v2520 = vunpack.c.h.b16 %v2092
    %v2521 = vunpack.c.l.b16 %v2093
    %v2522 = vunpack.c.h.b16 %v2093
    %v2523 = vunpack.c.l.b16 %v2094
    %v2524 = vunpack.c.h.b16 %v2094
    %v2525 = vunpack.c.l.b16 %v2095
    %v2526 = vunpack.c.h.b16 %v2095
    %v2527 = vunpack.c.l.b16 %v2096
    %v2528 = vunpack.c.h.b16 %v2096
    %v2529 = vunpack.c.l.b16 %v2097
    %v2530 = vunpack.c.h.b16 %v2097
    %v2531 = vunpack.c.l.b16 %v2098
    %v2532 = vunpack.c.h.b16 %v2098
    %v2533 = vunpack.c.l.b16 %v2099
    %v2534 = vunpack.c.h.b16 %v2099
    %v2535 = vunpack.c.l.b16 %v2100
    %v2536 = vunpack.c.h.b16 %v2100
    %v2537 = vunpack.c.l.b16 %v2101
    %v2538 = vunpack.c.h.b16 %v2101
    %v2539 = vunpack.c.l.b16 %v2102
    %v2540 = vunpack.c.h.b16 %v2102
    %v2541 = vunpack.c.l.b16 %v2103
    %v2542 = vunpack.c.h.b16 %v2103
    %v2543 = vunpack.c.l.b16 %v2104
    %v2544 = vunpack.c.h.b16 %v2104
    %v2545 = vunpack.c.l.b16 %v2105
    %v2546 = vunpack.c.h.b16 %v2105
    %v2547 = vunpack.c.l.b16 %v2106
    %v2548 = vunpack.c.h.b16 %v2106
    %v2549 = vunpack.c.l.b16 %v2107
    %v2550 = vunpack.c.h.b16 %v2107
    %v2551 = vunpack.c.l.b16 %v2108
    %v2552 = vunpack.c.h.b16 %v2108
    %v2553 = vunpack.c.l.b16 %v2109
    %v2554 = vunpack.c.h.b16 %v2109
    %v2555 = vunpack.c.l.b16 %v2110
    %v2556 = vunpack.c.h.b16 %v2110
    %v2557 = vunpack.c.l.b16 %v2111
    %v2558 = vunpack.c.h.b16 %v2111
    %v2559 = vunpack.c.l.b16 %v2112
    %v2560 = vunpack.c.h.b16 %v2112
    %v2561 = vunpack.c.l.b16 %v2113
    %v2562 = vunpack.c.h.b16 %v2113
    %v2563 = vunpack.c.l.b16 %v2114
    %v2564 = vunpack.c.h.b16 %v2114
    %v2565 = vunpack.c.l.b16 %v2115
    %v2566 = vunpack.c.h.b16 %v2115
    %v2567 = vunpack.c.l.b16 %v2116
    %v2568 = vunpack.c.h.b16 %v2116
    %v2569 = vunpack.c.l.b16 %v2117
    %v2570 = vunpack.c.h.b16 %v2117
    %v2571 = vunpack.c.l.b16 %v2118
    %v2572 = vunpack.c.h.b16 %v2118
    %v2573 = vunpack.c.l.b16 %v2119
    %v2574 = vunpack.c.h.b16 %v2119
    %v2575 = vunpack.c.l.b16 %v2120
    %v2576 = vunpack.c.h.b16 %v2120
    %v2577 = vunpack.c.l.b16 %v2121
    %v2578 = vunpack.c.h.b16 %v2121
    %v2579 = vunpack.c.l.b16 %v2122
    %v2580 = vunpack.c.h.b16 %v2122
    %v2581 = vunpack.c.l.b16 %v2123
    %v2582 = vunpack.c.h.b16 %v2123
    %v2583 = vunpack.c.l.b16 %v2124
    %v2584 = vunpack.c.h.b16 %v2124
    %v2585 = vunpack.c.l.b16 %v2125
    %v2586 = vunpack.c.h.b16 %v2125
    %v2587 = vunpack.c.l.b16 %v2126
    %v2588 = vunpack.c.h.b16 %v2126
    %v2589 = vunpack.c.l.b16 %v2127
    %v2590 = vunpack.c.h.b16 %v2127
    %v2591 = vunpack.c.l.b16 %v2128
    %v2592 = vunpack.c.h.b16 %v2128
    %v2593 = vunpack.c.l.b16 %v2129
    %v2594 = vunpack.c.h.b16 %v2129
    %v2595 = vunpack.c.l.b16 %v2130
    %v2596 = vunpack.c.h.b16 %v2130
    %v2597 = vunpack.c.l.b16 %v2131
    %v2598 = vunpack.c.h.b16 %v2131
    %v2599 = vunpack.c.l.b16 %v2132
    %v2600 = vunpack.c.h.b16 %v2132
    %v2601 = vpack.c.b16 %v2361, %v2345
    %v2602 = vpack.c.b16 %v2362, %v2346
    %v2603 = vpack.c.b16 %v2363, %v2347
    %v2604 = vpack.c.b16 %v2364, %v2348
    %v2605 = vpack.c.b16 %v2365, %v2349
    %v2606 = vpack.c.b16 %v2366, %v2350
    %v2607 = vpack.c.b16 %v2367, %v2351
    %v2608 = vpack.c.b16 %v2368, %v2352
    %v2609 = vpack.c.b16 %v2369, %v2353
    %v2610 = vpack.c.b16 %v2370, %v2354
    %v2611 = vpack.c.b16 %v2371, %v2355
    %v2612 = vpack.c.b16 %v2372, %v2356
    %v2613 = vpack.c.b16 %v2373, %v2357
    %v2614 = vpack.c.b16 %v2374, %v2358
    %v2615 = vpack.c.b16 %v2375, %v2359
    %v2616 = vpack.c.b16 %v2376, %v2360
    %v2617 = vpack.c.b16 %v2393, %v2377
    %v2618 = vpack.c.b16 %v2394, %v2378
    %v2619 = vpack.c.b16 %v2395, %v2379
    %v2620 = vpack.c.b16 %v2396, %v2380
    %v2621 = vpack.c.b16 %v2397, %v2381
    %v2622 = vpack.c.b16 %v2398, %v2382
    %v2623 = vpack.c.b16 %v2399, %v2383
    %v2624 = vpack.c.b16 %v2400, %v2384
    %v2625 = vpack.c.b16 %v2401, %v2385
    %v2626 = vpack.c.b16 %v2402, %v2386
    %v2627 = vpack.c.b16 %v2403, %v2387
    %v2628 = vpack.c.b16 %v2404, %v2388
    %v2629 = vpack.c.b16 %v2405, %v2389
    %v2630 = vpack.c.b16 %v2406, %v2390
    %v2631 = vpack.c.b16 %v2407, %v2391
    %v2632 = vpack.c.b16 %v2408, %v2392
    %v2633 = vpack.c.b16 %v2425, %v2409
    %v2634 = vpack.c.b16 %v2426, %v2410
    %v2635 = vpack.c.b16 %v2427, %v2411
    %v2636 = vpack.c.b16 %v2428, %v2412
    %v2637 = vpack.c.b16 %v2429, %v2413
    %v2638 = vpack.c.b16 %v2430, %v2414
    %v2639 = vpack.c.b16 %v2431, %v2415
    %v2640 = vpack.c.b16 %v2432, %v2416
    %v2641 = vpack.c.b16 %v2433, %v2417
    %v2642 = vpack.c.b16 %v2434, %v2418
    %v2643 = vpack.c.b16 %v2435, %v2419
    %v2644 = vpack.c.b16 %v2436, %v2420
    %v2645 = vpack.c.b16 %v2437, %v2421
    %v2646 = vpack.c.b16 %v2438, %v2422
    %v2647 = vpack.c.b16 %v2439, %v2423
    %v2648 = vpack.c.b16 %v2440, %v2424
    %v2649 = vpack.c.b16 %v2457, %v2441
    %v2650 = vpack.c.b16 %v2458, %v2442
    %v2651 = vpack.c.b16 %v2459, %v2443
    %v2652 = vpack.c.b16 %v2460, %v2444
    %v2653 = vpack.c.b16 %v2461, %v2445
    %v2654 = vpack.c.b16 %v2462, %v2446
    %v2655 = vpack.c.b16 %v2463, %v2447
    %v2656 = vpack.c.b16 %v2464, %v2448
    %v2657 = vpack.c.b16 %v2465, %v2449
    %v2658 = vpack.c.b16 %v2466, %v2450
    %v2659 = vpack.c.b16 %v2467, %v2451
    %v2660 = vpack.c.b16 %v2468, %v2452
    %v2661 = vpack.c.b16 %v2469, %v2453
    %v2662 = vpack.c.b16 %v2470, %v2454
    %v2663 = vpack.c.b16 %v2471, %v2455
    %v2664 = vpack.c.b16 %v2472, %v2456
    %v2665 = vpack.c.b16 %v2489, %v2473
    %v2666 = vpack.c.b16 %v2490, %v2474
    %v2667 = vpack.c.b16 %v2491, %v2475
    %v2668 = vpack.c.b16 %v2492, %v2476
    %v2669 = vpack.c.b16 %v2493, %v2477
    %v2670 = vpack.c.b16 %v2494, %v2478
    %v2671 = vpack.c.b16 %v2495, %v2479
    %v2672 = vpack.c.b16 %v2496, %v2480
    %v2673 = vpack.c.b16 %v2497, %v2481
    %v2674 = vpack.c.b16 %v2498, %v2482
    %v2675 = vpack.c.b16 %v2499, %v2483
    %v2676 = vpack.c.b16 %v2500, %v2484
    %v2677 = vpack.c.b16 %v2501, %v2485
    %v2678 = vpack.c.b16 %v2502, %v2486
    %v2679 = vpack.c.b16 %v2503, %v2487
    %v2680 = vpack.c.b16 %v2504, %v2488
    %v2681 = vpack.c.b16 %v2521, %v2505
    %v2682 = vpack.c.b16 %v2522, %v2506
    %v2683 = vpack.c.b16 %v2523, %v2507
    %v2684 = vpack.c.b16 %v2524, %v2508
    %v2685 = vpack.c.b16 %v2525, %v2509
    %v2686 = vpack.c.b16 %v2526, %v2510
    %v2687 = vpack.c.b16 %v2527, %v2511
    %v2688 = vpack.c.b16 %v2528, %v2512
    %v2689 = vpack.c.b16 %v2529, %v2513
    %v2690 = vpack.c.b16 %v2530, %v2514
    %v2691 = vpack.c.b16 %v2531, %v2515
    %v2692 = vpack.c.b16 %v2532, %v2516
    %v2693 = vpack.c.b16 %v2533, %v2517
    %v2694 = vpack.c.b16 %v2534, %v2518
    %v2695 = vpack.c.b16 %v2535, %v2519
    %v2696 = vpack.c.b16 %v2536, %v2520
    %v2697 = vpack.c.b16 %v2553, %v2537
    %v2698 = vpack.c.b16 %v2554, %v2538
    %v2699 = vpack.c.b16 %v2555, %v2539
    %v2700 = vpack.c.b16 %v2556, %v2540
    %v2701 = vpack.c.b16 %v2557, %v2541
    %v2702 = vpack.c.b16 %v2558, %v2542
    %v2703 = vpack.c.b16 %v2559, %v2543
    %v2704 = vpack.c.b16 %v2560, %v2544
    %v2705 = vpack.c.b16 %v2561, %v2545
    %v2706 = vpack.c.b16 %v2562, %v2546
    %v2707 = vpack.c.b16 %v2563, %v2547
    %v2708 = vpack.c.b16 %v2564, %v2548
    %v2709 = vpack.c.b16 %v2565, %v2549
    %v2710 = vpack.c.b16 %v2566, %v2550
    %v2711 = vpack.c.b16 %v2567, %v2551
    %v2712 = vpack.c.b16 %v2568, %v2552
    %v2713 = vpack.c.b16 %v2585, %v2569
    %v2714 = vpack.c.b16 %v2586, %v2570
    %v2715 = vpack.c.b16 %v2587, %v2571
    %v2716 = vpack.c.b16 %v2588, %v2572
    %v2717 = vpack.c.b16 %v2589, %v2573
    %v2718 = vpack.c.b16 %v2590, %v2574
    %v2719 = vpack.c.b16 %v2591, %v2575
    %v2720 = vpack.c.b16 %v2592, %v2576
    %v2721 = vpack.c.b16 %v2593, %v2577
    %v2722 = vpack.c.b16 %v2594, %v2578
    %v2723 = vpack.c.b16 %v2595, %v2579
    %v2724 = vpack.c.b16 %v2596, %v2580
    %v2725 = vpack.c.b16 %v2597, %v2581
    %v2726 = vpack.c.b16 %v2598, %v2582
    %v2727 = vpack.c.b16 %v2599, %v2583
    %v2728 = vpack.c.b16 %v2600, %v2584
    %2857 = vmatprep.subr.bf16.mxu0 %v2714
    %2858 = vmatpush1.bf16.msra.mxu0 %v2713
    %2859 = vmatprep.subr.bf16.mxu0 %v2698
    %2860 = vmatpush1.bf16.msra.mxu0 %v2697
    %2861 = vmatprep.subr.bf16.mxu0 %v2682
    %2862 = vmatpush1.bf16.msra.mxu0 %v2681
    %2863 = vmatprep.subr.bf16.mxu0 %v2666
    %2864 = vmatpush1.bf16.msra.mxu0 %v2665
    %2865 = vmatprep.subr.bf16.mxu0 %v2650
    %2866 = vmatpush1.bf16.msra.mxu0 %v2649
    %2867 = vmatprep.subr.bf16.mxu0 %v2634
    %2868 = vmatpush1.bf16.msra.mxu0 %v2633
    %2869 = vmatprep.subr.bf16.mxu0 %v2618
    %2870 = vmatpush1.bf16.msra.mxu0 %v2617
    %2871 = vmatprep.subr.bf16.mxu0 %v2602
    %2872 = vmatpush1.bf16.msra.mxu0 %v2601
    %2873 = vmatprep.subr.bf16.mxu0 0
    %2874 = vmatpush2.bf16.msra.mxu0 0
    %2875 = vmatprep.subr.bf16.mxu0 0
    %2876 = vmatpush2.bf16.msra.mxu0 0
    %2877 = vmatprep.subr.bf16.mxu0 0
    %2878 = vmatpush2.bf16.msra.mxu0 0
    %2879 = vmatprep.subr.bf16.mxu0 0
    %2880 = vmatpush2.bf16.msra.mxu0 0
    %2881 = vmatprep.subr.bf16.mxu0 0
    %2882 = vmatpush2.bf16.msra.mxu0 0
    %2883 = vmatprep.subr.bf16.mxu0 0
    %2884 = vmatpush2.bf16.msra.mxu0 0
    %2885 = vmatprep.subr.bf16.mxu0 0
    %2886 = vmatpush2.bf16.msra.mxu0 0
    %2887 = vmatprep.subr.bf16.mxu0 0
    %2888 = vmatpush2.bf16.msra.mxu0 0
    %2889 = vmatprep.mubr.bf16.mxu0 0
    %2890 = vmatmul.mubr.bf16.gmra.mxu0 %v2004
    %v2891 = vpop.f32.mrf.mxu0
    %v2892 = vadd.f32 %v2140, %v2891
    %v2893 = vpop.f32.mrf.mxu0
    %v2894 = vadd.f32 %v2144, %v2893
    %v2895 = vpop.f32.mrf.mxu0
    %v2896 = vpop.f32.mrf.mxu0
    %2897 = vdwg.mxu0
    %2898 = vmatprep.subr.bf16.mxu0 %v2716
    %2899 = vmatpush1.bf16.msra.mxu0 %v2715
    %2900 = vmatprep.subr.bf16.mxu0 %v2700
    %2901 = vmatpush1.bf16.msra.mxu0 %v2699
    %2902 = vmatprep.subr.bf16.mxu0 %v2684
    %2903 = vmatpush1.bf16.msra.mxu0 %v2683
    %2904 = vmatprep.subr.bf16.mxu0 %v2668
    %2905 = vmatpush1.bf16.msra.mxu0 %v2667
    %2906 = vmatprep.subr.bf16.mxu0 %v2652
    %2907 = vmatpush1.bf16.msra.mxu0 %v2651
    %2908 = vmatprep.subr.bf16.mxu0 %v2636
    %2909 = vmatpush1.bf16.msra.mxu0 %v2635
    %2910 = vmatprep.subr.bf16.mxu0 %v2620
    %2911 = vmatpush1.bf16.msra.mxu0 %v2619
    %2912 = vmatprep.subr.bf16.mxu0 %v2604
    %2913 = vmatpush1.bf16.msra.mxu0 %v2603
    %2914 = vmatprep.subr.bf16.mxu0 0
    %2915 = vmatpush2.bf16.msra.mxu0 0
    %2916 = vmatprep.subr.bf16.mxu0 0
    %2917 = vmatpush2.bf16.msra.mxu0 0
    %2918 = vmatprep.subr.bf16.mxu0 0
    %2919 = vmatpush2.bf16.msra.mxu0 0
    %2920 = vmatprep.subr.bf16.mxu0 0
    %2921 = vmatpush2.bf16.msra.mxu0 0
    %2922 = vmatprep.subr.bf16.mxu0 0
    %2923 = vmatpush2.bf16.msra.mxu0 0
    %2924 = vmatprep.subr.bf16.mxu0 0
    %2925 = vmatpush2.bf16.msra.mxu0 0
    %2926 = vmatprep.subr.bf16.mxu0 0
    %2927 = vmatpush2.bf16.msra.mxu0 0
    %2928 = vmatprep.subr.bf16.mxu0 0
    %2929 = vmatpush2.bf16.msra.mxu0 0
    %2930 = vmatprep.mubr.bf16.mxu0 0
    %2931 = vmatmul.mubr.bf16.gmra.mxu0 %v2004
    %v2932 = vpop.f32.mrf.mxu0
    %v2933 = vadd.f32 %v2148, %v2932
    %v2934 = vpop.f32.mrf.mxu0
    %v2935 = vadd.f32 %v2152, %v2934
    %v2936 = vpop.f32.mrf.mxu0
    %v2937 = vpop.f32.mrf.mxu0
    %2938 = vdwg.mxu0
    %2939 = vmatprep.subr.bf16.mxu0 %v2718
    %2940 = vmatpush1.bf16.msra.mxu0 %v2717
    %2941 = vmatprep.subr.bf16.mxu0 %v2702
    %2942 = vmatpush1.bf16.msra.mxu0 %v2701
    %2943 = vmatprep.subr.bf16.mxu0 %v2686
    %2944 = vmatpush1.bf16.msra.mxu0 %v2685
    %2945 = vmatprep.subr.bf16.mxu0 %v2670
    %2946 = vmatpush1.bf16.msra.mxu0 %v2669
    %2947 = vmatprep.subr.bf16.mxu0 %v2654
    %2948 = vmatpush1.bf16.msra.mxu0 %v2653
    %2949 = vmatprep.subr.bf16.mxu0 %v2638
    %2950 = vmatpush1.bf16.msra.mxu0 %v2637
    %2951 = vmatprep.subr.bf16.mxu0 %v2622
    %2952 = vmatpush1.bf16.msra.mxu0 %v2621
    %2953 = vmatprep.subr.bf16.mxu0 %v2606
    %2954 = vmatpush1.bf16.msra.mxu0 %v2605
    %2955 = vmatprep.subr.bf16.mxu0 0
    %2956 = vmatpush2.bf16.msra.mxu0 0
    %2957 = vmatprep.subr.bf16.mxu0 0
    %2958 = vmatpush2.bf16.msra.mxu0 0
    %2959 = vmatprep.subr.bf16.mxu0 0
    %2960 = vmatpush2.bf16.msra.mxu0 0
    %2961 = vmatprep.subr.bf16.mxu0 0
    %2962 = vmatpush2.bf16.msra.mxu0 0
    %2963 = vmatprep.subr.bf16.mxu0 0
    %2964 = vmatpush2.bf16.msra.mxu0 0
    %2965 = vmatprep.subr.bf16.mxu0 0
    %2966 = vmatpush2.bf16.msra.mxu0 0
    %2967 = vmatprep.subr.bf16.mxu0 0
    %2968 = vmatpush2.bf16.msra.mxu0 0
    %2969 = vmatprep.subr.bf16.mxu0 0
    %2970 = vmatpush2.bf16.msra.mxu0 0
    %2971 = vmatprep.mubr.bf16.mxu0 0
    %2972 = vmatmul.mubr.bf16.gmra.mxu0 %v2004
    %v2973 = vpop.f32.mrf.mxu0
    %v2974 = vadd.f32 %v2156, %v2973
    %v2975 = vpop.f32.mrf.mxu0
    %v2976 = vadd.f32 %v2160, %v2975
    %v2977 = vpop.f32.mrf.mxu0
    %v2978 = vpop.f32.mrf.mxu0
    %2979 = vdwg.mxu0
    %2980 = vmatprep.subr.bf16.mxu0 %v2720
    %2981 = vmatpush1.bf16.msra.mxu0 %v2719
    %2982 = vmatprep.subr.bf16.mxu0 %v2704
    %2983 = vmatpush1.bf16.msra.mxu0 %v2703
    %2984 = vmatprep.subr.bf16.mxu0 %v2688
    %2985 = vmatpush1.bf16.msra.mxu0 %v2687
    %2986 = vmatprep.subr.bf16.mxu0 %v2672
    %2987 = vmatpush1.bf16.msra.mxu0 %v2671
    %2988 = vmatprep.subr.bf16.mxu0 %v2656
    %2989 = vmatpush1.bf16.msra.mxu0 %v2655
    %2990 = vmatprep.subr.bf16.mxu0 %v2640
    %2991 = vmatpush1.bf16.msra.mxu0 %v2639
    %2992 = vmatprep.subr.bf16.mxu0 %v2624
    %2993 = vmatpush1.bf16.msra.mxu0 %v2623
    %2994 = vmatprep.subr.bf16.mxu0 %v2608
    %2995 = vmatpush1.bf16.msra.mxu0 %v2607
    %2996 = vmatprep.subr.bf16.mxu0 0
    %2997 = vmatpush2.bf16.msra.mxu0 0
    %2998 = vmatprep.subr.bf16.mxu0 0
    %2999 = vmatpush2.bf16.msra.mxu0 0
    %3000 = vmatprep.subr.bf16.mxu0 0
    %3001 = vmatpush2.bf16.msra.mxu0 0
    %3002 = vmatprep.subr.bf16.mxu0 0
    %3003 = vmatpush2.bf16.msra.mxu0 0
    %3004 = vmatprep.subr.bf16.mxu0 0
    %3005 = vmatpush2.bf16.msra.mxu0 0
    %3006 = vmatprep.subr.bf16.mxu0 0
    %3007 = vmatpush2.bf16.msra.mxu0 0
    %3008 = vmatprep.subr.bf16.mxu0 0
    %3009 = vmatpush2.bf16.msra.mxu0 0
    %3010 = vmatprep.subr.bf16.mxu0 0
    %3011 = vmatpush2.bf16.msra.mxu0 0
    %3012 = vmatprep.mubr.bf16.mxu0 0
    %3013 = vmatmul.mubr.bf16.gmra.mxu0 %v2004
    %v3014 = vpop.f32.mrf.mxu0
    %v3015 = vadd.f32 %v2164, %v3014
    %v3016 = vpop.f32.mrf.mxu0
    %v3017 = vadd.f32 %v2168, %v3016
    %v3018 = vpop.f32.mrf.mxu0
    %v3019 = vpop.f32.mrf.mxu0
    %3020 = vdwg.mxu0
    %3021 = vmatprep.subr.bf16.mxu0 %v2722
    %3022 = vmatpush1.bf16.msra.mxu0 %v2721
    %3023 = vmatprep.subr.bf16.mxu0 %v2706
    %3024 = vmatpush1.bf16.msra.mxu0 %v2705
    %3025 = vmatprep.subr.bf16.mxu0 %v2690
    %3026 = vmatpush1.bf16.msra.mxu0 %v2689
    %3027 = vmatprep.subr.bf16.mxu0 %v2674
    %3028 = vmatpush1.bf16.msra.mxu0 %v2673
    %3029 = vmatprep.subr.bf16.mxu0 %v2658
    %3030 = vmatpush1.bf16.msra.mxu0 %v2657
    %3031 = vmatprep.subr.bf16.mxu0 %v2642
    %3032 = vmatpush1.bf16.msra.mxu0 %v2641
    %3033 = vmatprep.subr.bf16.mxu0 %v2626
    %3034 = vmatpush1.bf16.msra.mxu0 %v2625
    %3035 = vmatprep.subr.bf16.mxu0 %v2610
    %3036 = vmatpush1.bf16.msra.mxu0 %v2609
    %3037 = vmatprep.subr.bf16.mxu0 0
    %3038 = vmatpush2.bf16.msra.mxu0 0
    %3039 = vmatprep.subr.bf16.mxu0 0
    %3040 = vmatpush2.bf16.msra.mxu0 0
    %3041 = vmatprep.subr.bf16.mxu0 0
    %3042 = vmatpush2.bf16.msra.mxu0 0
    %3043 = vmatprep.subr.bf16.mxu0 0
    %3044 = vmatpush2.bf16.msra.mxu0 0
    %3045 = vmatprep.subr.bf16.mxu0 0
    %3046 = vmatpush2.bf16.msra.mxu0 0
    %3047 = vmatprep.subr.bf16.mxu0 0
    %3048 = vmatpush2.bf16.msra.mxu0 0
    %3049 = vmatprep.subr.bf16.mxu0 0
    %3050 = vmatpush2.bf16.msra.mxu0 0
    %3051 = vmatprep.subr.bf16.mxu0 0
    %3052 = vmatpush2.bf16.msra.mxu0 0
    %3053 = vmatprep.mubr.bf16.mxu0 0
    %3054 = vmatmul.mubr.bf16.gmra.mxu0 %v2004
    %v3055 = vpop.f32.mrf.mxu0
    %v3056 = vadd.f32 %v2172, %v3055
    %v3057 = vpop.f32.mrf.mxu0
    %v3058 = vadd.f32 %v2176, %v3057
    %v3059 = vpop.f32.mrf.mxu0
    %v3060 = vpop.f32.mrf.mxu0
    %3061 = vdwg.mxu0
    %3062 = vmatprep.subr.bf16.mxu0 %v2724
    %3063 = vmatpush1.bf16.msra.mxu0 %v2723
    %3064 = vmatprep.subr.bf16.mxu0 %v2708
    %3065 = vmatpush1.bf16.msra.mxu0 %v2707
    %3066 = vmatprep.subr.bf16.mxu0 %v2692
    %3067 = vmatpush1.bf16.msra.mxu0 %v2691
    %3068 = vmatprep.subr.bf16.mxu0 %v2676
    %3069 = vmatpush1.bf16.msra.mxu0 %v2675
    %3070 = vmatprep.subr.bf16.mxu0 %v2660
    %3071 = vmatpush1.bf16.msra.mxu0 %v2659
    %3072 = vmatprep.subr.bf16.mxu0 %v2644
    %3073 = vmatpush1.bf16.msra.mxu0 %v2643
    %3074 = vmatprep.subr.bf16.mxu0 %v2628
    %3075 = vmatpush1.bf16.msra.mxu0 %v2627
    %3076 = vmatprep.subr.bf16.mxu0 %v2612
    %3077 = vmatpush1.bf16.msra.mxu0 %v2611
    %3078 = vmatprep.subr.bf16.mxu0 0
    %3079 = vmatpush2.bf16.msra.mxu0 0
    %3080 = vmatprep.subr.bf16.mxu0 0
    %3081 = vmatpush2.bf16.msra.mxu0 0
    %3082 = vmatprep.subr.bf16.mxu0 0
    %3083 = vmatpush2.bf16.msra.mxu0 0
    %3084 = vmatprep.subr.bf16.mxu0 0
    %3085 = vmatpush2.bf16.msra.mxu0 0
    %3086 = vmatprep.subr.bf16.mxu0 0
    %3087 = vmatpush2.bf16.msra.mxu0 0
    %3088 = vmatprep.subr.bf16.mxu0 0
    %3089 = vmatpush2.bf16.msra.mxu0 0
    %3090 = vmatprep.subr.bf16.mxu0 0
    %3091 = vmatpush2.bf16.msra.mxu0 0
    %3092 = vmatprep.subr.bf16.mxu0 0
    %3093 = vmatpush2.bf16.msra.mxu0 0
    %3094 = vmatprep.mubr.bf16.mxu0 0
    %3095 = vmatmul.mubr.bf16.gmra.mxu0 %v2004
    %v3096 = vpop.f32.mrf.mxu0
    %v3097 = vadd.f32 %v2180, %v3096
    %v3098 = vpop.f32.mrf.mxu0
    %v3099 = vadd.f32 %v2184, %v3098
    %v3100 = vpop.f32.mrf.mxu0
    %v3101 = vpop.f32.mrf.mxu0
    %3102 = vdwg.mxu0
    %3103 = vmatprep.subr.bf16.mxu0 %v2726
    %3104 = vmatpush1.bf16.msra.mxu0 %v2725
    %3105 = vmatprep.subr.bf16.mxu0 %v2710
    %3106 = vmatpush1.bf16.msra.mxu0 %v2709
    %3107 = vmatprep.subr.bf16.mxu0 %v2694
    %3108 = vmatpush1.bf16.msra.mxu0 %v2693
    %3109 = vmatprep.subr.bf16.mxu0 %v2678
    %3110 = vmatpush1.bf16.msra.mxu0 %v2677
    %3111 = vmatprep.subr.bf16.mxu0 %v2662
    %3112 = vmatpush1.bf16.msra.mxu0 %v2661
    %3113 = vmatprep.subr.bf16.mxu0 %v2646
    %3114 = vmatpush1.bf16.msra.mxu0 %v2645
    %3115 = vmatprep.subr.bf16.mxu0 %v2630
    %3116 = vmatpush1.bf16.msra.mxu0 %v2629
    %3117 = vmatprep.subr.bf16.mxu0 %v2614
    %3118 = vmatpush1.bf16.msra.mxu0 %v2613
    %3119 = vmatprep.subr.bf16.mxu0 0
    %3120 = vmatpush2.bf16.msra.mxu0 0
    %3121 = vmatprep.subr.bf16.mxu0 0
    %3122 = vmatpush2.bf16.msra.mxu0 0
    %3123 = vmatprep.subr.bf16.mxu0 0
    %3124 = vmatpush2.bf16.msra.mxu0 0
    %3125 = vmatprep.subr.bf16.mxu0 0
    %3126 = vmatpush2.bf16.msra.mxu0 0
    %3127 = vmatprep.subr.bf16.mxu0 0
    %3128 = vmatpush2.bf16.msra.mxu0 0
    %3129 = vmatprep.subr.bf16.mxu0 0
    %3130 = vmatpush2.bf16.msra.mxu0 0
    %3131 = vmatprep.subr.bf16.mxu0 0
    %3132 = vmatpush2.bf16.msra.mxu0 0
    %3133 = vmatprep.subr.bf16.mxu0 0
    %3134 = vmatpush2.bf16.msra.mxu0 0
    %3135 = vmatprep.mubr.bf16.mxu0 0
    %3136 = vmatmul.mubr.bf16.gmra.mxu0 %v2004
    %v3137 = vpop.f32.mrf.mxu0
    %v3138 = vadd.f32 %v2188, %v3137
    %v3139 = vpop.f32.mrf.mxu0
    %v3140 = vadd.f32 %v2192, %v3139
    %v3141 = vpop.f32.mrf.mxu0
    %v3142 = vpop.f32.mrf.mxu0
    %3143 = vdwg.mxu0
    %3144 = vmatprep.subr.bf16.mxu0 %v2728
    %3145 = vmatpush1.bf16.msra.mxu0 %v2727
    %3146 = vmatprep.subr.bf16.mxu0 %v2712
    %3147 = vmatpush1.bf16.msra.mxu0 %v2711
    %3148 = vmatprep.subr.bf16.mxu0 %v2696
    %3149 = vmatpush1.bf16.msra.mxu0 %v2695
    %3150 = vmatprep.subr.bf16.mxu0 %v2680
    %3151 = vmatpush1.bf16.msra.mxu0 %v2679
    %3152 = vmatprep.subr.bf16.mxu0 %v2664
    %3153 = vmatpush1.bf16.msra.mxu0 %v2663
    %3154 = vmatprep.subr.bf16.mxu0 %v2648
    %3155 = vmatpush1.bf16.msra.mxu0 %v2647
    %3156 = vmatprep.subr.bf16.mxu0 %v2632
    %3157 = vmatpush1.bf16.msra.mxu0 %v2631
    %3158 = vmatprep.subr.bf16.mxu0 %v2616
    %3159 = vmatpush1.bf16.msra.mxu0 %v2615
    %3160 = vmatprep.subr.bf16.mxu0 0
    %3161 = vmatpush2.bf16.msra.mxu0 0
    %3162 = vmatprep.subr.bf16.mxu0 0
    %3163 = vmatpush2.bf16.msra.mxu0 0
    %3164 = vmatprep.subr.bf16.mxu0 0
    %3165 = vmatpush2.bf16.msra.mxu0 0
    %3166 = vmatprep.subr.bf16.mxu0 0
    %3167 = vmatpush2.bf16.msra.mxu0 0
    %3168 = vmatprep.subr.bf16.mxu0 0
    %3169 = vmatpush2.bf16.msra.mxu0 0
    %3170 = vmatprep.subr.bf16.mxu0 0
    %3171 = vmatpush2.bf16.msra.mxu0 0
    %3172 = vmatprep.subr.bf16.mxu0 0
    %3173 = vmatpush2.bf16.msra.mxu0 0
    %3174 = vmatprep.subr.bf16.mxu0 0
    %3175 = vmatpush2.bf16.msra.mxu0 0
    %3176 = vmatprep.mubr.bf16.mxu0 0
    %3177 = vmatmul.mubr.bf16.gmra.mxu0 %v2004
    %v3178 = vpop.f32.mrf.mxu0
    %v3179 = vadd.f32 %v2196, %v3178
    %v3180 = vpop.f32.mrf.mxu0
    %v3181 = vadd.f32 %v2200, %v3180
    %v3182 = vpop.f32.mrf.mxu0
    %v3183 = vpop.f32.mrf.mxu0
    %3184 = vdwg.mxu0
    %v3185 = vmul.f32 %v708, 1.442695
    %v3186 = vpow.pop %v3185
    %v3187 = vtanh.pop %v2894
    %v3188 = vsub.f32 0.0, %v3187
    %v3189 = vmul.f32 %v3188, 1.442695
    %v3190 = vpow.pop %v3189
    %v3191 = vadd.f32 %v3187, -1.0
    %v3192 = vsub.f32 %v3191, %v708
    %v3193 = vmul.f32 %v3186, %v3190
    %v3194 = vadd.f32 %v3192, %v3193
    %v3195 = vsub.f32 %v701, %v2892
    %v3196 = vmul.f32 %v3195, %v3195
    %v3197 = vmul.f32 %v3196, %v3190
    %v3198 = vadd.f32 %v3194, %v3197
    %v3199 = vmul.f32 %v3198, 0.5
    %3200 = vadd.xlane.f32.xlu0 %v3199
    %v3201 = vpop.xlane.xlu0 %3200
    %v3202 = vmul.f32 %v3201, %v1389
    %vm3203 = vcmask 7168
    %v3204 = vsel %vm3203, %v3202, 0.0
    %3205 = vadd.xlane.f32.xlu0 %v3204
    %v3206 = vpop.xlane.xlu0 %3205
    %v3207 = vrot.slane %v3206, 4
    %v3208 = vadd.f32 %v3206, %v3207
    %v3209 = vrot.slane %v3208, 2
    %v3210 = vadd.f32 %v3208, %v3209
    %v3211 = vrot.slane %v3210, 1
    %v3212 = vadd.f32 %v3210, %v3211
    %s3213 = vtos %v3212
    %s3214 = sadd.f32 %s3213, 0.0
    %v3215 = vtanh.pop %v2935
    %v3216 = vsub.f32 0.0, %v3215
    %v3217 = vmul.f32 %v3216, 1.442695
    %v3218 = vpow.pop %v3217
    %v3219 = vadd.f32 %v3215, -1.0
    %v3220 = vsub.f32 %v3219, %v708
    %v3221 = vmul.f32 %v3186, %v3218
    %v3222 = vadd.f32 %v3220, %v3221
    %v3223 = vsub.f32 %v701, %v2933
    %v3224 = vmul.f32 %v3223, %v3223
    %v3225 = vmul.f32 %v3224, %v3218
    %v3226 = vadd.f32 %v3222, %v3225
    %v3227 = vmul.f32 %v3226, 0.5
    %3228 = vadd.xlane.f32.xlu0 %v3227
    %v3229 = vpop.xlane.xlu0 %3228
    %v3230 = vmul.f32 %v3229, %v1389
    %3232 = vrot.lane.b32.xlu0 %v3230, 127
    %v3233 = vpop.permute.xlu0 %3232
    %v3235 = vsel %vm3203, %v3233, 0.0
    %3236 = vadd.xlane.f32.xlu0 %v3235
    %v3237 = vpop.xlane.xlu0 %3236
    %v3238 = vrot.slane %v3237, 4
    %v3239 = vadd.f32 %v3237, %v3238
    %v3240 = vrot.slane %v3239, 2
    %v3241 = vadd.f32 %v3239, %v3240
    %v3242 = vrot.slane %v3241, 1
    %v3243 = vadd.f32 %v3241, %v3242
    %s3244 = vtos %v3243
    %s3245 = sadd.f32 %s3214, %s3244
    %v3246 = vtanh.pop %v2976
    %v3247 = vsub.f32 0.0, %v3246
    %v3248 = vmul.f32 %v3247, 1.442695
    %v3249 = vpow.pop %v3248
    %v3250 = vadd.f32 %v3246, -1.0
    %v3251 = vsub.f32 %v3250, %v708
    %v3252 = vmul.f32 %v3186, %v3249
    %v3253 = vadd.f32 %v3251, %v3252
    %v3254 = vsub.f32 %v701, %v2974
    %v3255 = vmul.f32 %v3254, %v3254
    %v3256 = vmul.f32 %v3255, %v3249
    %v3257 = vadd.f32 %v3253, %v3256
    %v3258 = vmul.f32 %v3257, 0.5
    %3259 = vadd.xlane.f32.xlu0 %v3258
    %v3260 = vpop.xlane.xlu0 %3259
    %v3261 = vmul.f32 %v3260, %v1389
    %3263 = vrot.lane.b32.xlu0 %v3261, 126
    %v3264 = vpop.permute.xlu0 %3263
    %v3266 = vsel %vm3203, %v3264, 0.0
    %3267 = vadd.xlane.f32.xlu0 %v3266
    %v3268 = vpop.xlane.xlu0 %3267
    %v3269 = vrot.slane %v3268, 4
    %v3270 = vadd.f32 %v3268, %v3269
    %v3271 = vrot.slane %v3270, 2
    %v3272 = vadd.f32 %v3270, %v3271
    %v3273 = vrot.slane %v3272, 1
    %v3274 = vadd.f32 %v3272, %v3273
    %s3275 = vtos %v3274
    %s3276 = sadd.f32 %s3245, %s3275
    %v3277 = vtanh.pop %v3017
    %v3278 = vsub.f32 0.0, %v3277
    %v3279 = vmul.f32 %v3278, 1.442695
    %v3280 = vpow.pop %v3279
    %v3281 = vadd.f32 %v3277, -1.0
    %v3282 = vsub.f32 %v3281, %v708
    %v3283 = vmul.f32 %v3186, %v3280
    %v3284 = vadd.f32 %v3282, %v3283
    %v3285 = vsub.f32 %v701, %v3015
    %v3286 = vmul.f32 %v3285, %v3285
    %v3287 = vmul.f32 %v3286, %v3280
    %v3288 = vadd.f32 %v3284, %v3287
    %v3289 = vmul.f32 %v3288, 0.5
    %3290 = vadd.xlane.f32.xlu0 %v3289
    %v3291 = vpop.xlane.xlu0 %3290
    %v3292 = vmul.f32 %v3291, %v1389
    %3294 = vrot.lane.b32.xlu0 %v3292, 125
    %v3295 = vpop.permute.xlu0 %3294
    %v3297 = vsel %vm3203, %v3295, 0.0
    %3298 = vadd.xlane.f32.xlu0 %v3297
    %v3299 = vpop.xlane.xlu0 %3298
    %v3300 = vrot.slane %v3299, 4
    %v3301 = vadd.f32 %v3299, %v3300
    %v3302 = vrot.slane %v3301, 2
    %v3303 = vadd.f32 %v3301, %v3302
    %v3304 = vrot.slane %v3303, 1
    %v3305 = vadd.f32 %v3303, %v3304
    %s3306 = vtos %v3305
    %s3307 = sadd.f32 %s3276, %s3306
    %v3308 = vtanh.pop %v3058
    %v3309 = vsub.f32 0.0, %v3308
    %v3310 = vmul.f32 %v3309, 1.442695
    %v3311 = vpow.pop %v3310
    %v3312 = vadd.f32 %v3308, -1.0
    %v3313 = vsub.f32 %v3312, %v708
    %v3314 = vmul.f32 %v3186, %v3311
    %v3315 = vadd.f32 %v3313, %v3314
    %v3316 = vsub.f32 %v701, %v3056
    %v3317 = vmul.f32 %v3316, %v3316
    %v3318 = vmul.f32 %v3317, %v3311
    %v3319 = vadd.f32 %v3315, %v3318
    %v3320 = vmul.f32 %v3319, 0.5
    %3321 = vadd.xlane.f32.xlu0 %v3320
    %v3322 = vpop.xlane.xlu0 %3321
    %v3323 = vmul.f32 %v3322, %v1389
    %3325 = vrot.lane.b32.xlu0 %v3323, 124
    %v3326 = vpop.permute.xlu0 %3325
    %v3328 = vsel %vm3203, %v3326, 0.0
    %3329 = vadd.xlane.f32.xlu0 %v3328
    %v3330 = vpop.xlane.xlu0 %3329
    %v3331 = vrot.slane %v3330, 4
    %v3332 = vadd.f32 %v3330, %v3331
    %v3333 = vrot.slane %v3332, 2
    %v3334 = vadd.f32 %v3332, %v3333
    %v3335 = vrot.slane %v3334, 1
    %v3336 = vadd.f32 %v3334, %v3335
    %s3337 = vtos %v3336
    %s3338 = sadd.f32 %s3307, %s3337
    %v3339 = vtanh.pop %v3099
    %v3340 = vsub.f32 0.0, %v3339
    %v3341 = vmul.f32 %v3340, 1.442695
    %v3342 = vpow.pop %v3341
    %v3343 = vadd.f32 %v3339, -1.0
    %v3344 = vsub.f32 %v3343, %v708
    %v3345 = vmul.f32 %v3186, %v3342
    %v3346 = vadd.f32 %v3344, %v3345
    %v3347 = vsub.f32 %v701, %v3097
    %v3348 = vmul.f32 %v3347, %v3347
    %v3349 = vmul.f32 %v3348, %v3342
    %v3350 = vadd.f32 %v3346, %v3349
    %v3351 = vmul.f32 %v3350, 0.5
    %3352 = vadd.xlane.f32.xlu0 %v3351
    %v3353 = vpop.xlane.xlu0 %3352
    %v3354 = vmul.f32 %v3353, %v1389
    %3356 = vrot.lane.b32.xlu0 %v3354, 123
    %v3357 = vpop.permute.xlu0 %3356
    %v3359 = vsel %vm3203, %v3357, 0.0
    %3360 = vadd.xlane.f32.xlu0 %v3359
    %v3361 = vpop.xlane.xlu0 %3360
    %v3362 = vrot.slane %v3361, 4
    %v3363 = vadd.f32 %v3361, %v3362
    %v3364 = vrot.slane %v3363, 2
    %v3365 = vadd.f32 %v3363, %v3364
    %v3366 = vrot.slane %v3365, 1
    %v3367 = vadd.f32 %v3365, %v3366
    %s3368 = vtos %v3367
    %s3369 = sadd.f32 %s3338, %s3368
    %v3370 = vtanh.pop %v3140
    %v3371 = vsub.f32 0.0, %v3370
    %v3372 = vmul.f32 %v3371, 1.442695
    %v3373 = vpow.pop %v3372
    %v3374 = vadd.f32 %v3370, -1.0
    %v3375 = vsub.f32 %v3374, %v708
    %v3376 = vmul.f32 %v3186, %v3373
    %v3377 = vadd.f32 %v3375, %v3376
    %v3378 = vsub.f32 %v701, %v3138
    %v3379 = vmul.f32 %v3378, %v3378
    %v3380 = vmul.f32 %v3379, %v3373
    %v3381 = vadd.f32 %v3377, %v3380
    %v3382 = vmul.f32 %v3381, 0.5
    %3383 = vadd.xlane.f32.xlu0 %v3382
    %v3384 = vpop.xlane.xlu0 %3383
    %v3385 = vmul.f32 %v3384, %v1389
    %3387 = vrot.lane.b32.xlu0 %v3385, 122
    %v3388 = vpop.permute.xlu0 %3387
    %v3390 = vsel %vm3203, %v3388, 0.0
    %3391 = vadd.xlane.f32.xlu0 %v3390
    %v3392 = vpop.xlane.xlu0 %3391
    %v3393 = vrot.slane %v3392, 4
    %v3394 = vadd.f32 %v3392, %v3393
    %v3395 = vrot.slane %v3394, 2
    %v3396 = vadd.f32 %v3394, %v3395
    %v3397 = vrot.slane %v3396, 1
    %v3398 = vadd.f32 %v3396, %v3397
    %s3399 = vtos %v3398
    %s3400 = sadd.f32 %s3369, %s3399
    %v3401 = vtanh.pop %v3181
    %v3402 = vsub.f32 0.0, %v3401
    %v3403 = vmul.f32 %v3402, 1.442695
    %v3404 = vpow.pop %v3403
    %v3405 = vadd.f32 %v3401, -1.0
    %v3406 = vsub.f32 %v3405, %v708
    %v3407 = vmul.f32 %v3186, %v3404
    %v3408 = vadd.f32 %v3406, %v3407
    %v3409 = vsub.f32 %v701, %v3179
    %v3410 = vmul.f32 %v3409, %v3409
    %v3411 = vmul.f32 %v3410, %v3404
    %v3412 = vadd.f32 %v3408, %v3411
    %v3413 = vmul.f32 %v3412, 0.5
    %3414 = vadd.xlane.f32.xlu0 %v3413
    %v3415 = vpop.xlane.xlu0 %3414
    %v3416 = vmul.f32 %v3415, %v1389
    %3418 = vrot.lane.b32.xlu0 %v3416, 121
    %v3419 = vpop.permute.xlu0 %3418
    %v3421 = vsel %vm3203, %v3419, 0.0
    %3422 = vadd.xlane.f32.xlu0 %v3421
    %v3423 = vpop.xlane.xlu0 %3422
    %v3424 = vrot.slane %v3423, 4
    %v3425 = vadd.f32 %v3423, %v3424
    %v3426 = vrot.slane %v3425, 2
    %v3427 = vadd.f32 %v3425, %v3426
    %v3428 = vrot.slane %v3427, 1
    %v3429 = vadd.f32 %v3427, %v3428
    %s3430 = vtos %v3429
    %s3431 = sadd.f32 %s3400, %s3430
    %v3432 = vrcp.pop 8.0
    %s3433 = vtos %v3432
    %s3434 = smul.f32 %s3431, %s3433
    %v3435 = vadd.f32 %v707, 1.0
    %v3436 = vmul.f32 %v696, %v696
    %3438 = vrot.lane.b32.xlu0 %v3436, 64
    %v3439 = vpop.permute.xlu0 %3438
    %v3441 = vsub.f32 %v3435, %v3439
    %v3442 = vmul.f32 %v707, 1.442695
    %v3443 = vpow.pop %v3442
    %v3444 = vsub.f32 %v3441, %v3443
    %v3445 = vmul.f32 %v3444, -0.5
    %3447 = vrot.lane.b32.xlu0 %v3445, 64
    %v3448 = vpop.permute.xlu0 %3447
    %v3450 = vsel %vm726, %v3448, 0.0
    %3451 = vadd.xlane.f32.xlu0 %v3450
    %v3452 = vpop.xlane.xlu0 %3451
    %v3453 = vrot.slane %v3452, 4
    %v3454 = vadd.f32 %v3452, %v3453
    %v3455 = vrot.slane %v3454, 2
    %v3456 = vadd.f32 %v3454, %v3455
    %v3457 = vrot.slane %v3456, 1
    %v3458 = vadd.f32 %v3456, %v3457
    %s3459 = vtos %v3458
    %v3460 = vrcp.pop 8.0
    %s3461 = vtos %v3460
    %s3462 = smul.f32 %s3459, %s3461
    %v3463 = vlaneseq
    %v3464 = vand.u32 %v3463, 127
    %vm3465 = vcmp.eq.s32.totalorder %v3464, 0
    %vm3466 = vcmp.eq.s32.totalorder %v3464, 1
    %vm3467 = vcmp.eq.s32.totalorder %v3464, 2
    %v3468 = vstv %s3462
    %v3469 = vsel %vm3467, %v3468, 0.0
    %v3470 = vstv %s3434
    %v3471 = vsel %vm3466, %v3470, %v3469
    %v3472 = vstv %s1812
    %v3473 = vsel %vm3465, %v3472, %v3471
    %3475 = vrot.lane.b32.xlu0 %v3473, 88
    %v3476 = vpop.permute.xlu0 %3475
    %vm3478 = vcmask 1048256
    %3479 = vst.msk [vmem:[%s18 + $0x8] sm:$0xff] %vm3478, %v3476
    // Predicated region
    $region118: #{forward.3} parent=1 // pred_check
      _
    $region119: #{forward.3} parent=1 // pred_check_branch
      %3481 = sbr.rel (0) target = $region121
    $region120: #{forward.3} parent=1 // pred_region
      _
    $region121: #{forward.3} parent=1 // pred_fallthru
      _
    // Predicated region
    $region122: #{forward.3} parent=1 // pred_check
      _
    $region123: #{forward.3} parent=1 // pred_check_branch
      %3483 = sbr.rel (0) target = $region125
    $region124: #{forward.3} parent=1 // pred_region
      _
    $region125: #{forward.3} parent=1 // pred_fallthru
      _
    // Predicated region
    $region126: #{forward.3} parent=1 // pred_check
      _
    $region127: #{forward.3} parent=1 // pred_check_branch
      %3485 = sbr.rel (0) target = $region129
    $region128: #{forward.3} parent=1 // pred_region
      _
    $region129: #{forward.3} parent=1 // pred_fallthru
      _
    // Predicated region
    $region130: #{forward.3} parent=1 // pred_check
      _
    $region131: #{forward.3} parent=1 // pred_check_branch
      %3487 = sbr.rel (0) target = $region133
    $region132: #{forward.3} parent=1 // pred_region
      _
    $region133: #{forward.3} parent=1 // pred_fallthru
      _
    %3488 = vsyncpa [#allocation3], 1
    %3489 = vsyncpa [#allocation5], 1
    %3490 = vsyncpa [#allocation8], 1
    %3491 = vsyncpa [#allocation11], 1
    %3492 = vsyncpa [#allocation14], 1
    %3493 = vsyncpa [#allocation17], 1
    %3494 = vsyncpa [#allocation20], 1

</llo_original>
